<compile_context>
chip_gen: v7x
topology: tpu7x:2x2x1
jax: 0.10.0
libtpu: 0.0.40
codegen_flags: <defaults>
</compile_context>

<pallas_src>
import functools

import jax
import jax.numpy as jnp
from jax.experimental import pallas as pl
from jax.experimental.pallas import tpu as pltpu

_VMEM_LIMIT = 32 * 1024 * 1024     # << v7x's 64 MiB physical VMEM
_BN_EPS = 1e-5                     # PyTorch BatchNorm2d default


def _round_up(x, m):
    return (x + m - 1) // m * m


# --------------------------------------------------------------------------
# Kernel 1: fused  dense -> ReLU -> BatchNorm2d (training-mode batch stats)
# Columns of the dense output are in (h, w, c) order; `sel` (784,16) is the
# one-hot column->channel selector, `selt` its transpose.
# --------------------------------------------------------------------------
def _dense_relu_bn_kernel(x_ref, w_ref, b_ref, sel_ref, selt_ref, g_ref, bt_ref,
                          o_ref, *, n_valid, n_per_ch, eps):
    y = jnp.dot(x_ref[...], w_ref[...], preferred_element_type=jnp.float32)
    y = jnp.maximum(y + b_ref[...], 0.0)                    # dense bias + ReLU
    rows_pad, _ = y.shape
    c = g_ref.shape[-1]
    # mask the padded batch rows out of the statistics
    rows = jax.lax.broadcasted_iota(jnp.int32, y.shape, 0)
    ym = jnp.where(rows < n_valid, y, 0.0)
    cnt = float(n_valid * n_per_ch)
    # per-(row, channel) partial sums via the selector matmul, then row-reduce
    r1 = jnp.dot(ym, sel_ref[...], preferred_element_type=jnp.float32)       # (Bp, C)
    r2 = jnp.dot(ym * ym, sel_ref[...], preferred_element_type=jnp.float32)  # (Bp, C)
    mean = jnp.sum(r1, axis=0, keepdims=True) / cnt                          # (1, C)
    var = jnp.maximum(jnp.sum(r2, axis=0, keepdims=True) / cnt - mean * mean, 0.0)
    scale = g_ref[...] * jax.lax.rsqrt(var + eps)                            # (1, C)
    shift = bt_ref[...] - mean * scale                                       # (1, C)
    # broadcast the per-channel affine back to all 784 hwc-ordered columns
    scale_cols = jnp.dot(jnp.broadcast_to(scale, (rows_pad, c)), selt_ref[...],
                         preferred_element_type=jnp.float32)
    shift_cols = jnp.dot(jnp.broadcast_to(shift, (rows_pad, c)), selt_ref[...],
                         preferred_element_type=jnp.float32)
    o_ref[...] = y * scale_cols + shift_cols


def dense_relu_bn(x, w_hwc, b_hwc, sel, gamma, beta):
    """x:(B,K) -> BN(ReLU(x@w_hwc + b_hwc)) with hwc-ordered columns, (B,N)."""
    B, K = x.shape
    N = w_hwc.shape[1]
    C = sel.shape[1]
    Bp = _round_up(B, 8)
    xp = jnp.pad(x.astype(jnp.float32), ((0, Bp - B), (0, 0)))
    kern = functools.partial(_dense_relu_bn_kernel, n_valid=B,
                             n_per_ch=N // C, eps=_BN_EPS)
    y = pl.pallas_call(
        kern,
        grid=(1,),
        in_specs=[pl.BlockSpec((Bp, K), lambda i: (0, 0)),
                  pl.BlockSpec((K, N), lambda i: (0, 0)),
                  pl.BlockSpec((1, N), lambda i: (0, 0)),
                  pl.BlockSpec((N, C), lambda i: (0, 0)),
                  pl.BlockSpec((C, N), lambda i: (0, 0)),
                  pl.BlockSpec((1, C), lambda i: (0, 0)),
                  pl.BlockSpec((1, C), lambda i: (0, 0))],
        out_specs=pl.BlockSpec((Bp, N), lambda i: (0, 0)),
        out_shape=jax.ShapeDtypeStruct((Bp, N), jnp.float32),
        compiler_params=pltpu.CompilerParams(
            dimension_semantics=("arbitrary",),
            vmem_limit_bytes=_VMEM_LIMIT),
        cost_estimate=pl.CostEstimate(
            flops=2 * Bp * K * N + 4 * Bp * N * C,
            transcendentals=C,
            bytes_accessed=4 * (Bp * K + K * N + 3 * N * C + 2 * Bp * N)),
    )(xp, w_hwc.astype(jnp.float32), b_hwc.reshape(1, N).astype(jnp.float32),
      sel, sel.T, gamma.reshape(1, C).astype(jnp.float32),
      beta.reshape(1, C).astype(jnp.float32))
    return y[:B]


# --------------------------------------------------------------------------
# Kernel 2: M-tiled matmul with fused bias (+ optional ReLU) epilogue
# --------------------------------------------------------------------------
def _matmul_bias_kernel(a_ref, w_ref, b_ref, o_ref, *, relu):
    y = jnp.dot(a_ref[...], w_ref[...], preferred_element_type=jnp.float32)
    y = y + b_ref[...]
    if relu:
        y = jnp.maximum(y, 0.0)
    o_ref[...] = y


def matmul_bias(a, w, bias, *, relu=False, tile_m=128):
    """(M,K) @ (K,N) + bias; M padded to 8 and tiled over a parallel grid."""
    a = a.astype(jnp.float32)
    w = w.astype(jnp.float32)
    M, K = a.shape
    N = w.shape[1]
    if M > tile_m:
        Mp, tm = _round_up(M, tile_m), tile_m
    else:
        Mp = _round_up(M, 8)
        tm = Mp
    if Mp != M:
        a = jnp.pad(a, ((0, Mp - M), (0, 0)))
    grid_m = Mp // tm
    y = pl.pallas_call(
        functools.partial(_matmul_bias_kernel, relu=relu),
        grid=(grid_m,),
        in_specs=[pl.BlockSpec((tm, K), lambda i: (i, 0)),
                  pl.BlockSpec((K, N), lambda i: (0, 0)),
                  pl.BlockSpec((1, N), lambda i: (0, 0))],
        out_specs=pl.BlockSpec((tm, N), lambda i: (i, 0)),
        out_shape=jax.ShapeDtypeStruct((Mp, N), jnp.float32),
        compiler_params=pltpu.CompilerParams(
            dimension_semantics=("parallel",),          # use both v7x TCs
            vmem_limit_bytes=_VMEM_LIMIT),
        cost_estimate=pl.CostEstimate(
            flops=2 * Mp * K * N, transcendentals=0,
            bytes_accessed=4 * (Mp * K + grid_m * K * N + Mp * N)),
    )(a, w, bias.reshape(1, N).astype(jnp.float32))
    return y[:M]


# --------------------------------------------------------------------------
# ConvTranspose2d lowered to:  one lax.pad (dilation + all paddings folded)
# -> NHWC im2col -> Pallas matmul.
# --------------------------------------------------------------------------
def pad_hw(x_nhwc, h_cfg, w_cfg):
    """lax.pad on spatial dims; cfg = (lo, hi, interior)."""
    zero = jnp.array(0.0, x_nhwc.dtype)
    return jax.lax.pad(x_nhwc, zero, ((0, 0, 0), h_cfg, w_cfg, (0, 0, 0)))


def conv3x3_valid(x_nhwc, wm, bias, *, relu=False):
    """Stride-1 VALID 3x3 conv on an already padded/dilated NHWC input."""
    B, Hp, Wp, C = x_nhwc.shape
    Ho, Wo = Hp - 2, Wp - 2
    cols = [x_nhwc[:, kh:kh + Ho, kw:kw + Wo, :]
            for kh in range(3) for kw in range(3)]
    a = jnp.concatenate(cols, axis=-1).reshape(B * Ho * Wo, 9 * C)
    y = matmul_bias(a, wm, bias, relu=relu)
    return y.reshape(B, Ho, Wo, -1)


def tconv_matmul_weight(w_t):
    """ConvTranspose2d weight (Cin,Cout,3,3) -> (9*Cin,Cout) matmul weight for
    im2col columns ordered (kh, kw, cin)."""
    w = jnp.flip(w_t, axis=(2, 3))             # kernel flip (tconv -> conv)
    w = jnp.transpose(w, (2, 3, 0, 1))         # (kh, kw, cin, cout)
    return w.reshape(-1, w.shape[-1]).astype(jnp.float32)


# --------------------------------------------------------------------------
# Parameters (deterministic synthetic init, PyTorch layouts)
# --------------------------------------------------------------------------
def init_params(key):
    ks = jax.random.split(key, 12)
    it = iter(ks)
    p = {}
    p['dense_w'] = jax.random.normal(next(it), (784, 16), jnp.float32) * 0.1
    p['dense_b'] = jax.random.normal(next(it), (784,), jnp.float32) * 0.1
    p['bn_g'] = jnp.ones((16,), jnp.float32)
    p['bn_b'] = jnp.zeros((16,), jnp.float32)
    p['w1'] = jax.random.normal(next(it), (16, 64, 3, 3), jnp.float32) * 0.1
    p['b1'] = jax.random.normal(next(it), (64,), jnp.float32) * 0.1
    p['w2'] = jax.random.normal(next(it), (64, 32, 3, 3), jnp.float32) * 0.1
    p['b2'] = jax.random.normal(next(it), (32,), jnp.float32) * 0.1
    p['w3'] = jax.random.normal(next(it), (32, 16, 3, 3), jnp.float32) * 0.1
    p['b3'] = jax.random.normal(next(it), (16,), jnp.float32) * 0.1
    p['w4'] = jax.random.normal(next(it), (16, 1, 3, 3), jnp.float32) * 0.1
    p['b4'] = jax.random.normal(next(it), (1,), jnp.float32) * 0.1
    return p


# --------------------------------------------------------------------------
# Forward pass (Decoder_mnist)
# --------------------------------------------------------------------------
def forward(params, x):
    B = x.shape[0]
    # Permute dense output columns from PyTorch's (c,h,w) order to (h,w,c) so
    # the fused kernel's output reshapes for free into NHWC.
    j = jnp.arange(7 * 7 * 16)
    perm = (j % 16) * 49 + (j // 16)
    w_hwc = params['dense_w'].T[:, perm]                          # (16, 784)
    b_hwc = params['dense_b'][perm]                               # (784,)
    sel = (jnp.arange(784)[:, None] % 16
           == jnp.arange(16)[None, :]).astype(jnp.float32)        # (784, 16)

    h = dense_relu_bn(x, w_hwc, b_hwc, sel, params['bn_g'], params['bn_b'])
    h = h.reshape(B, 7, 7, 16)                                    # NHWC, free

    # ConvT(16->64, s=1, p=1): edge pad 1                          -> (B,7,7,64)
    h = conv3x3_valid(pad_hw(h, (1, 1, 0), (1, 1, 0)),
                      tconv_matmul_weight(params['w1']), params['b1'])
    # ConvT(64->32, s=2, p=1): zero-dilate + edge pad 1            -> (B,13,13,32)
    h = conv3x3_valid(pad_hw(h, (1, 1, 1), (1, 1, 1)),
                      tconv_matmul_weight(params['w2']), params['b2'])
    # F.pad(1,0,1,0) + ConvT(32->16, s=2, p=1) folded into one pad -> (B,27,27,16)
    h = conv3x3_valid(pad_hw(h, (3, 1, 1), (3, 1, 1)),
                      tconv_matmul_weight(params['w3']), params['b3'])
    # F.pad(1,0,1,0) + ConvT(16->1, s=1, p=1) + ReLU               -> (B,28,28,1)
    w4 = tconv_matmul_weight(params['w4'])                        # (144, 1)
    w4 = jnp.concatenate([w4, jnp.zeros((w4.shape[0], 127), jnp.float32)], 1)
    b4 = jnp.concatenate([params['b4'], jnp.zeros((127,), jnp.float32)])
    h = conv3x3_valid(pad_hw(h, (2, 1, 0), (2, 1, 0)), w4, b4, relu=True)
    h = h[..., :1]                                                # drop lane pad
    return h.reshape(B, 1, 28, 28)                                # C=1: NHWC==NCHW


# --------------------------------------------------------------------------
# Pure-JAX reference (for a loose numerical sanity check)
# --------------------------------------------------------------------------
def _tconv_ref(x_nchw, w_t, b, stride):
    w = jnp.transpose(jnp.flip(w_t, (2, 3)), (1, 0, 2, 3))        # (O, I, 3, 3)
    y = jax.lax.conv_general_dilated(
        x_nchw, w, window_strides=(1, 1), padding=[(1, 1), (1, 1)],
        lhs_dilation=(stride, stride),
        dimension_numbers=('NCHW', 'OIHW', 'NCHW'),
        precision=jax.lax.Precision.HIGHEST)
    return y + b.reshape(1, -1, 1, 1)


def reference_forward(params, x):
    B = x.shape[0]
    y = jnp.dot(x, params['dense_w'].T,
                precision=jax.lax.Precision.HIGHEST) + params['dense_b']
    y = jnp.maximum(y, 0.0).reshape(B, 16, 7, 7)
    mean = jnp.mean(y, axis=(0, 2, 3), keepdims=True)
    var = jnp.mean((y - mean) ** 2, axis=(0, 2, 3), keepdims=True)
    y = ((y - mean) / jnp.sqrt(var + _BN_EPS)
         * params['bn_g'].reshape(1, -1, 1, 1)
         + params['bn_b'].reshape(1, -1, 1, 1))
    y = _tconv_ref(y, params['w1'], params['b1'], 1)
    y = _tconv_ref(y, params['w2'], params['b2'], 2)
    y = jnp.pad(y, ((0, 0), (0, 0), (1, 0), (1, 0)))
    y = _tconv_ref(y, params['w3'], params['b3'], 2)
    y = jnp.pad(y, ((0, 0), (0, 0), (1, 0), (1, 0)))
    y = _tconv_ref(y, params['w4'], params['b4'], 1)
    return jnp.maximum(y, 0.0).reshape(B, 1, 28, 28)


# --------------------------------------------------------------------------
if __name__ == "__main__":
    key = jax.random.PRNGKey(0)
    pkey, xkey = jax.random.split(key)
    params = init_params(pkey)
    x = jax.random.normal(xkey, (2, 16), jnp.float32)   # (batch, caps_size*num_caps)

    fwd = jax.jit(forward)
    decoded = fwd(params, x)
    jax.block_until_ready(decoded)

    assert decoded.shape == (2, 1, 28, 28)
    assert bool(jnp.all(jnp.isfinite(decoded)))

    ref = reference_forward(params, x)
    assert bool(jnp.allclose(decoded, ref, rtol=2e-2, atol=2e-2)), \
        f"max abs diff {float(jnp.max(jnp.abs(decoded - ref)))}"

    print("KERNEL_OK")
</pallas_src>

<mosaic_0001>
module attributes {stable_mosaic.version = 11 : i64} {
  func.func @_dense_relu_bn_kernel(%arg0: i32, %arg1: memref<8x16xf32, #tpu.memory_space<vmem>>, %arg2: memref<16x784xf32, #tpu.memory_space<vmem>>, %arg3: memref<1x784xf32, #tpu.memory_space<vmem>>, %arg4: memref<784x16xf32, #tpu.memory_space<vmem>>, %arg5: memref<16x784xf32, #tpu.memory_space<vmem>>, %arg6: memref<1x16xf32, #tpu.memory_space<vmem>>, %arg7: memref<1x16xf32, #tpu.memory_space<vmem>>, %arg8: memref<8x784xf32, #tpu.memory_space<vmem>>) attributes {dimension_semantics = [#tpu.dimension_semantics<arbitrary>], iteration_bounds = array<i64: 1>, scalar_prefetch = 0 : i64, scratch_operands = 0 : i64, tpu.core_type = #tpu.core_type<tc>, window_params = [{pipeline_mode = #tpu.pipeline_mode<synchronous>, transform_indices = @transform_0, window_bounds = array<i64: 8, 16>}, {pipeline_mode = #tpu.pipeline_mode<synchronous>, transform_indices = @transform_1, window_bounds = array<i64: 16, 784>}, {pipeline_mode = #tpu.pipeline_mode<synchronous>, transform_indices = @transform_2, window_bounds = array<i64: 1, 784>}, {pipeline_mode = #tpu.pipeline_mode<synchronous>, transform_indices = @transform_3, window_bounds = array<i64: 784, 16>}, {pipeline_mode = #tpu.pipeline_mode<synchronous>, transform_indices = @transform_4, window_bounds = array<i64: 16, 784>}, {pipeline_mode = #tpu.pipeline_mode<synchronous>, transform_indices = @transform_5, window_bounds = array<i64: 1, 16>}, {pipeline_mode = #tpu.pipeline_mode<synchronous>, transform_indices = @transform_6, window_bounds = array<i64: 1, 16>}, {pipeline_mode = #tpu.pipeline_mode<synchronous>, transform_indices = @transform_7, window_bounds = array<i64: 8, 784>}]} {
    %c0 = arith.constant 0 : index
    %c0_0 = arith.constant 0 : index
    %0 = vector.load %arg1[%c0, %c0_0] : memref<8x16xf32, #tpu.memory_space<vmem>>, vector<8x16xf32>
    %c0_1 = arith.constant 0 : index
    %c0_2 = arith.constant 0 : index
    %1 = vector.load %arg2[%c0_1, %c0_2] : memref<16x784xf32, #tpu.memory_space<vmem>>, vector<16x784xf32>
    %cst = arith.constant dense<0.000000e+00> : vector<8x784xf32>
    %2 = tpu.matmul %0, %1, %cst {dimension_numbers = #tpu.dot_dimension_numbers<[1], [0], [0], [1], [0, 0, 1, 1], [], []>} : vector<8x16xf32>, vector<16x784xf32>, vector<8x784xf32> -> vector<8x784xf32>
    %c0_3 = arith.constant 0 : index
    %c0_4 = arith.constant 0 : index
    %3 = vector.load %arg3[%c0_3, %c0_4] : memref<1x784xf32, #tpu.memory_space<vmem>>, vector<1x784xf32>
    %4 = vector.broadcast %3 : vector<1x784xf32> to vector<8x784xf32>
    %5 = arith.addf %2, %4 : vector<8x784xf32>
    %cst_5 = arith.constant 0.000000e+00 : f32
    %6 = vector.broadcast %cst_5 : f32 to vector<8x784xf32>
    %7 = arith.maximumf %5, %6 : vector<8x784xf32>
    %8 = tpu.iota {dimensions = array<i32: 0>} : vector<8x784xi32>
    %c2_i32 = arith.constant 2 : i32
    %9 = vector.broadcast %c2_i32 : i32 to vector<8x784xi32>
    %10 = arith.cmpi slt, %8, %9 : vector<8x784xi32>
    %cst_6 = arith.constant 0.000000e+00 : f32
    %11 = vector.broadcast %cst_6 : f32 to vector<8x784xf32>
    %12 = arith.select %10, %7, %11 : vector<8x784xi1>, vector<8x784xf32>
    %c0_7 = arith.constant 0 : index
    %c0_8 = arith.constant 0 : index
    %13 = vector.load %arg4[%c0_7, %c0_8] : memref<784x16xf32, #tpu.memory_space<vmem>>, vector<784x16xf32>
    %cst_9 = arith.constant dense<0.000000e+00> : vector<8x16xf32>
    %14 = tpu.matmul %12, %13, %cst_9 {dimension_numbers = #tpu.dot_dimension_numbers<[1], [0], [0], [1], [0, 0, 1, 1], [], []>} : vector<8x784xf32>, vector<784x16xf32>, vector<8x16xf32> -> vector<8x16xf32>
    %15 = arith.mulf %12, %12 : vector<8x784xf32>
    %c0_10 = arith.constant 0 : index
    %c0_11 = arith.constant 0 : index
    %16 = vector.load %arg4[%c0_10, %c0_11] : memref<784x16xf32, #tpu.memory_space<vmem>>, vector<784x16xf32>
    %cst_12 = arith.constant dense<0.000000e+00> : vector<8x16xf32>
    %17 = tpu.matmul %15, %16, %cst_12 {dimension_numbers = #tpu.dot_dimension_numbers<[1], [0], [0], [1], [0, 0, 1, 1], [], []>} : vector<8x784xf32>, vector<784x16xf32>, vector<8x16xf32> -> vector<8x16xf32>
    %cst_13 = arith.constant dense<0.000000e+00> : vector<16xf32>
    %18 = vector.multi_reduction <add>, %14, %cst_13 [0] : vector<8x16xf32> to vector<16xf32>
    %19 = vector.shape_cast %18 : vector<16xf32> to vector<1x16xf32>
    %cst_14 = arith.constant 9.800000e+01 : f32
    %20 = vector.broadcast %cst_14 : f32 to vector<1x16xf32>
    %21 = arith.divf %19, %20 : vector<1x16xf32>
    %cst_15 = arith.constant dense<0.000000e+00> : vector<16xf32>
    %22 = vector.multi_reduction <add>, %17, %cst_15 [0] : vector<8x16xf32> to vector<16xf32>
    %23 = vector.shape_cast %22 : vector<16xf32> to vector<1x16xf32>
    %cst_16 = arith.constant 9.800000e+01 : f32
    %24 = vector.broadcast %cst_16 : f32 to vector<1x16xf32>
    %25 = arith.divf %23, %24 : vector<1x16xf32>
    %26 = arith.mulf %21, %21 : vector<1x16xf32>
    %27 = arith.subf %25, %26 : vector<1x16xf32>
    %cst_17 = arith.constant 0.000000e+00 : f32
    %28 = vector.broadcast %cst_17 : f32 to vector<1x16xf32>
    %29 = arith.maximumf %27, %28 : vector<1x16xf32>
    %c0_18 = arith.constant 0 : index
    %c0_19 = arith.constant 0 : index
    %30 = vector.load %arg6[%c0_18, %c0_19] : memref<1x16xf32, #tpu.memory_space<vmem>>, vector<1x16xf32>
    %cst_20 = arith.constant 9.99999974E-6 : f32
    %31 = vector.broadcast %cst_20 : f32 to vector<1x16xf32>
    %32 = arith.addf %29, %31 : vector<1x16xf32>
    %33 = math.rsqrt %32 : vector<1x16xf32>
    %34 = arith.mulf %30, %33 : vector<1x16xf32>
    %c0_21 = arith.constant 0 : index
    %c0_22 = arith.constant 0 : index
    %35 = vector.load %arg7[%c0_21, %c0_22] : memref<1x16xf32, #tpu.memory_space<vmem>>, vector<1x16xf32>
    %36 = arith.mulf %21, %34 : vector<1x16xf32>
    %37 = arith.subf %35, %36 : vector<1x16xf32>
    %38 = vector.shape_cast %34 : vector<1x16xf32> to vector<1x16xf32>
    %39 = vector.broadcast %38 : vector<1x16xf32> to vector<8x16xf32>
    %c0_23 = arith.constant 0 : index
    %c0_24 = arith.constant 0 : index
    %40 = vector.load %arg5[%c0_23, %c0_24] : memref<16x784xf32, #tpu.memory_space<vmem>>, vector<16x784xf32>
    %cst_25 = arith.constant dense<0.000000e+00> : vector<8x784xf32>
    %41 = tpu.matmul %39, %40, %cst_25 {dimension_numbers = #tpu.dot_dimension_numbers<[1], [0], [0], [1], [0, 0, 1, 1], [], []>} : vector<8x16xf32>, vector<16x784xf32>, vector<8x784xf32> -> vector<8x784xf32>
    %42 = vector.shape_cast %37 : vector<1x16xf32> to vector<1x16xf32>
    %43 = vector.broadcast %42 : vector<1x16xf32> to vector<8x16xf32>
    %c0_26 = arith.constant 0 : index
    %c0_27 = arith.constant 0 : index
    %44 = vector.load %arg5[%c0_26, %c0_27] : memref<16x784xf32, #tpu.memory_space<vmem>>, vector<16x784xf32>
    %cst_28 = arith.constant dense<0.000000e+00> : vector<8x784xf32>
    %45 = tpu.matmul %43, %44, %cst_28 {dimension_numbers = #tpu.dot_dimension_numbers<[1], [0], [0], [1], [0, 0, 1, 1], [], []>} : vector<8x16xf32>, vector<16x784xf32>, vector<8x784xf32> -> vector<8x784xf32>
    %46 = arith.mulf %7, %41 : vector<8x784xf32>
    %47 = arith.addf %46, %45 : vector<8x784xf32>
    %c0_29 = arith.constant 0 : index
    %c0_30 = arith.constant 0 : index
    %48 = vector.load %arg8[%c0_29, %c0_30] : memref<8x784xf32, #tpu.memory_space<vmem>>, vector<8x784xf32>
    tpu.vector_store %arg8[%c0_29, %c0_30], %47 {strides = array<i32>} : memref<8x784xf32, #tpu.memory_space<vmem>>, vector<8x784xf32>,
    return
  }
  func.func @transform_0(%arg0: i32) -> (i32, i32) {
    %c0_i32 = arith.constant 0 : i32
    %c0_i32_0 = arith.constant 0 : i32
    %c0_i32_1 = arith.constant 0 : i32
    return %c0_i32, %c0_i32_0 : i32, i32
  }
  func.func @transform_1(%arg0: i32) -> (i32, i32) {
    %c0_i32 = arith.constant 0 : i32
    %c0_i32_0 = arith.constant 0 : i32
    %c0_i32_1 = arith.constant 0 : i32
    return %c0_i32, %c0_i32_0 : i32, i32
  }
  func.func @transform_2(%arg0: i32) -> (i32, i32) {
    %c0_i32 = arith.constant 0 : i32
    %c0_i32_0 = arith.constant 0 : i32
    %c0_i32_1 = arith.constant 0 : i32
    return %c0_i32, %c0_i32_0 : i32, i32
  }
  func.func @transform_3(%arg0: i32) -> (i32, i32) {
    %c0_i32 = arith.constant 0 : i32
    %c0_i32_0 = arith.constant 0 : i32
    %c0_i32_1 = arith.constant 0 : i32
    return %c0_i32, %c0_i32_0 : i32, i32
  }
  func.func @transform_4(%arg0: i32) -> (i32, i32) {
    %c0_i32 = arith.constant 0 : i32
    %c0_i32_0 = arith.constant 0 : i32
    %c0_i32_1 = arith.constant 0 : i32
    return %c0_i32, %c0_i32_0 : i32, i32
  }
  func.func @transform_5(%arg0: i32) -> (i32, i32) {
    %c0_i32 = arith.constant 0 : i32
    %c0_i32_0 = arith.constant 0 : i32
    %c0_i32_1 = arith.constant 0 : i32
    return %c0_i32, %c0_i32_0 : i32, i32
  }
  func.func @transform_6(%arg0: i32) -> (i32, i32) {
    %c0_i32 = arith.constant 0 : i32
    %c0_i32_0 = arith.constant 0 : i32
    %c0_i32_1 = arith.constant 0 : i32
    return %c0_i32, %c0_i32_0 : i32, i32
  }
  func.func @transform_7(%arg0: i32) -> (i32, i32) {
    %c0_i32 = arith.constant 0 : i32
    %c0_i32_0 = arith.constant 0 : i32
    %c0_i32_1 = arith.constant 0 : i32
    return %c0_i32, %c0_i32_0 : i32, i32
  }
}

module attributes {stable_mosaic.version = 11 : i64} {
  func.func @_matmul_bias_kernel(%arg0: i32, %arg1: memref<104x144xf32, #tpu.memory_space<vmem>>, %arg2: memref<144x64xf32, #tpu.memory_space<vmem>>, %arg3: memref<1x64xf32, #tpu.memory_space<vmem>>, %arg4: memref<104x64xf32, #tpu.memory_space<vmem>>) attributes {dimension_semantics = [#tpu.dimension_semantics<parallel>], iteration_bounds = array<i64: 1>, scalar_prefetch = 0 : i64, scratch_operands = 0 : i64, tpu.core_type = #tpu.core_type<tc>, window_params = [{transform_indices = @transform_0, window_bounds = array<i64: 104, 144>}, {pipeline_mode = #tpu.pipeline_mode<synchronous>, transform_indices = @transform_1, window_bounds = array<i64: 144, 64>}, {pipeline_mode = #tpu.pipeline_mode<synchronous>, transform_indices = @transform_2, window_bounds = array<i64: 1, 64>}, {transform_indices = @transform_3, window_bounds = array<i64: 104, 64>}]} {
    %c0 = arith.constant 0 : index
    %c0_0 = arith.constant 0 : index
    %0 = vector.load %arg1[%c0, %c0_0] : memref<104x144xf32, #tpu.memory_space<vmem>>, vector<104x144xf32>
    %c0_1 = arith.constant 0 : index
    %c0_2 = arith.constant 0 : index
    %1 = vector.load %arg2[%c0_1, %c0_2] : memref<144x64xf32, #tpu.memory_space<vmem>>, vector<144x64xf32>
    %cst = arith.constant dense<0.000000e+00> : vector<104x64xf32>
    %2 = tpu.matmul %0, %1, %cst {dimension_numbers = #tpu.dot_dimension_numbers<[1], [0], [0], [1], [0, 0, 1, 1], [], []>} : vector<104x144xf32>, vector<144x64xf32>, vector<104x64xf32> -> vector<104x64xf32>
    %c0_3 = arith.constant 0 : index
    %c0_4 = arith.constant 0 : index
    %3 = vector.load %arg3[%c0_3, %c0_4] : memref<1x64xf32, #tpu.memory_space<vmem>>, vector<1x64xf32>
    %4 = vector.broadcast %3 : vector<1x64xf32> to vector<104x64xf32>
    %5 = arith.addf %2, %4 : vector<104x64xf32>
    %c0_5 = arith.constant 0 : index
    %c0_6 = arith.constant 0 : index
    %6 = vector.load %arg4[%c0_5, %c0_6] : memref<104x64xf32, #tpu.memory_space<vmem>>, vector<104x64xf32>
    tpu.vector_store %arg4[%c0_5, %c0_6], %5 {strides = array<i32>} : memref<104x64xf32, #tpu.memory_space<vmem>>, vector<104x64xf32>,
    return
  }
  func.func @transform_0(%arg0: i32) -> (i32, i32) {
    %c0_i32 = arith.constant 0 : i32
    %c0_i32_0 = arith.constant 0 : i32
    return %arg0, %c0_i32 : i32, i32
  }
  func.func @transform_1(%arg0: i32) -> (i32, i32) {
    %c0_i32 = arith.constant 0 : i32
    %c0_i32_0 = arith.constant 0 : i32
    %c0_i32_1 = arith.constant 0 : i32
    return %c0_i32, %c0_i32_0 : i32, i32
  }
  func.func @transform_2(%arg0: i32) -> (i32, i32) {
    %c0_i32 = arith.constant 0 : i32
    %c0_i32_0 = arith.constant 0 : i32
    %c0_i32_1 = arith.constant 0 : i32
    return %c0_i32, %c0_i32_0 : i32, i32
  }
  func.func @transform_3(%arg0: i32) -> (i32, i32) {
    %c0_i32 = arith.constant 0 : i32
    %c0_i32_0 = arith.constant 0 : i32
    return %arg0, %c0_i32 : i32, i32
  }
}

module attributes {stable_mosaic.version = 11 : i64} {
  func.func @_matmul_bias_kernel(%arg0: i32, %arg1: memref<128x576xf32, #tpu.memory_space<vmem>>, %arg2: memref<576x32xf32, #tpu.memory_space<vmem>>, %arg3: memref<1x32xf32, #tpu.memory_space<vmem>>, %arg4: memref<128x32xf32, #tpu.memory_space<vmem>>) attributes {dimension_semantics = [#tpu.dimension_semantics<parallel>], iteration_bounds = array<i64: 3>, scalar_prefetch = 0 : i64, scratch_operands = 0 : i64, tpu.core_type = #tpu.core_type<tc>, window_params = [{transform_indices = @transform_0, window_bounds = array<i64: 128, 576>}, {pipeline_mode = #tpu.pipeline_mode<synchronous>, transform_indices = @transform_1, window_bounds = array<i64: 576, 32>}, {pipeline_mode = #tpu.pipeline_mode<synchronous>, transform_indices = @transform_2, window_bounds = array<i64: 1, 32>}, {transform_indices = @transform_3, window_bounds = array<i64: 128, 32>}]} {
    %c0 = arith.constant 0 : index
    %c0_0 = arith.constant 0 : index
    %0 = vector.load %arg1[%c0, %c0_0] : memref<128x576xf32, #tpu.memory_space<vmem>>, vector<128x576xf32>
    %c0_1 = arith.constant 0 : index
    %c0_2 = arith.constant 0 : index
    %1 = vector.load %arg2[%c0_1, %c0_2] : memref<576x32xf32, #tpu.memory_space<vmem>>, vector<576x32xf32>
    %cst = arith.constant dense<0.000000e+00> : vector<128x32xf32>
    %2 = tpu.matmul %0, %1, %cst {dimension_numbers = #tpu.dot_dimension_numbers<[1], [0], [0], [1], [0, 0, 1, 1], [], []>} : vector<128x576xf32>, vector<576x32xf32>, vector<128x32xf32> -> vector<128x32xf32>
    %c0_3 = arith.constant 0 : index
    %c0_4 = arith.constant 0 : index
    %3 = vector.load %arg3[%c0_3, %c0_4] : memref<1x32xf32, #tpu.memory_space<vmem>>, vector<1x32xf32>
    %4 = vector.broadcast %3 : vector<1x32xf32> to vector<128x32xf32>
    %5 = arith.addf %2, %4 : vector<128x32xf32>
    %c0_5 = arith.constant 0 : index
    %c0_6 = arith.constant 0 : index
    %6 = vector.load %arg4[%c0_5, %c0_6] : memref<128x32xf32, #tpu.memory_space<vmem>>, vector<128x32xf32>
    tpu.vector_store %arg4[%c0_5, %c0_6], %5 {strides = array<i32>} : memref<128x32xf32, #tpu.memory_space<vmem>>, vector<128x32xf32>,
    return
  }
  func.func @transform_0(%arg0: i32) -> (i32, i32) {
    %c0_i32 = arith.constant 0 : i32
    %c0_i32_0 = arith.constant 0 : i32
    return %arg0, %c0_i32 : i32, i32
  }
  func.func @transform_1(%arg0: i32) -> (i32, i32) {
    %c0_i32 = arith.constant 0 : i32
    %c0_i32_0 = arith.constant 0 : i32
    %c0_i32_1 = arith.constant 0 : i32
    return %c0_i32, %c0_i32_0 : i32, i32
  }
  func.func @transform_2(%arg0: i32) -> (i32, i32) {
    %c0_i32 = arith.constant 0 : i32
    %c0_i32_0 = arith.constant 0 : i32
    %c0_i32_1 = arith.constant 0 : i32
    return %c0_i32, %c0_i32_0 : i32, i32
  }
  func.func @transform_3(%arg0: i32) -> (i32, i32) {
    %c0_i32 = arith.constant 0 : i32
    %c0_i32_0 = arith.constant 0 : i32
    return %arg0, %c0_i32 : i32, i32
  }
}

module attributes {stable_mosaic.version = 11 : i64} {
  func.func @_matmul_bias_kernel(%arg0: i32, %arg1: memref<128x288xf32, #tpu.memory_space<vmem>>, %arg2: memref<288x16xf32, #tpu.memory_space<vmem>>, %arg3: memref<1x16xf32, #tpu.memory_space<vmem>>, %arg4: memref<128x16xf32, #tpu.memory_space<vmem>>) attributes {dimension_semantics = [#tpu.dimension_semantics<parallel>], iteration_bounds = array<i64: 12>, scalar_prefetch = 0 : i64, scratch_operands = 0 : i64, tpu.core_type = #tpu.core_type<tc>, window_params = [{transform_indices = @transform_0, window_bounds = array<i64: 128, 288>}, {pipeline_mode = #tpu.pipeline_mode<synchronous>, transform_indices = @transform_1, window_bounds = array<i64: 288, 16>}, {pipeline_mode = #tpu.pipeline_mode<synchronous>, transform_indices = @transform_2, window_bounds = array<i64: 1, 16>}, {transform_indices = @transform_3, window_bounds = array<i64: 128, 16>}]} {
    %c0 = arith.constant 0 : index
    %c0_0 = arith.constant 0 : index
    %0 = vector.load %arg1[%c0, %c0_0] : memref<128x288xf32, #tpu.memory_space<vmem>>, vector<128x288xf32>
    %c0_1 = arith.constant 0 : index
    %c0_2 = arith.constant 0 : index
    %1 = vector.load %arg2[%c0_1, %c0_2] : memref<288x16xf32, #tpu.memory_space<vmem>>, vector<288x16xf32>
    %cst = arith.constant dense<0.000000e+00> : vector<128x16xf32>
    %2 = tpu.matmul %0, %1, %cst {dimension_numbers = #tpu.dot_dimension_numbers<[1], [0], [0], [1], [0, 0, 1, 1], [], []>} : vector<128x288xf32>, vector<288x16xf32>, vector<128x16xf32> -> vector<128x16xf32>
    %c0_3 = arith.constant 0 : index
    %c0_4 = arith.constant 0 : index
    %3 = vector.load %arg3[%c0_3, %c0_4] : memref<1x16xf32, #tpu.memory_space<vmem>>, vector<1x16xf32>
    %4 = vector.broadcast %3 : vector<1x16xf32> to vector<128x16xf32>
    %5 = arith.addf %2, %4 : vector<128x16xf32>
    %c0_5 = arith.constant 0 : index
    %c0_6 = arith.constant 0 : index
    %6 = vector.load %arg4[%c0_5, %c0_6] : memref<128x16xf32, #tpu.memory_space<vmem>>, vector<128x16xf32>
    tpu.vector_store %arg4[%c0_5, %c0_6], %5 {strides = array<i32>} : memref<128x16xf32, #tpu.memory_space<vmem>>, vector<128x16xf32>,
    return
  }
  func.func @transform_0(%arg0: i32) -> (i32, i32) {
    %c0_i32 = arith.constant 0 : i32
    %c0_i32_0 = arith.constant 0 : i32
    return %arg0, %c0_i32 : i32, i32
  }
  func.func @transform_1(%arg0: i32) -> (i32, i32) {
    %c0_i32 = arith.constant 0 : i32
    %c0_i32_0 = arith.constant 0 : i32
    %c0_i32_1 = arith.constant 0 : i32
    return %c0_i32, %c0_i32_0 : i32, i32
  }
  func.func @transform_2(%arg0: i32) -> (i32, i32) {
    %c0_i32 = arith.constant 0 : i32
    %c0_i32_0 = arith.constant 0 : i32
    %c0_i32_1 = arith.constant 0 : i32
    return %c0_i32, %c0_i32_0 : i32, i32
  }
  func.func @transform_3(%arg0: i32) -> (i32, i32) {
    %c0_i32 = arith.constant 0 : i32
    %c0_i32_0 = arith.constant 0 : i32
    return %arg0, %c0_i32 : i32, i32
  }
}

module attributes {stable_mosaic.version = 11 : i64} {
  func.func @_matmul_bias_kernel(%arg0: i32, %arg1: memref<128x144xf32, #tpu.memory_space<vmem>>, %arg2: memref<144x128xf32, #tpu.memory_space<vmem>>, %arg3: memref<1x128xf32, #tpu.memory_space<vmem>>, %arg4: memref<128x128xf32, #tpu.memory_space<vmem>>) attributes {dimension_semantics = [#tpu.dimension_semantics<parallel>], iteration_bounds = array<i64: 13>, scalar_prefetch = 0 : i64, scratch_operands = 0 : i64, tpu.core_type = #tpu.core_type<tc>, window_params = [{transform_indices = @transform_0, window_bounds = array<i64: 128, 144>}, {pipeline_mode = #tpu.pipeline_mode<synchronous>, transform_indices = @transform_1, window_bounds = array<i64: 144, 128>}, {pipeline_mode = #tpu.pipeline_mode<synchronous>, transform_indices = @transform_2, window_bounds = array<i64: 1, 128>}, {transform_indices = @transform_3, window_bounds = array<i64: 128, 128>}]} {
    %c0 = arith.constant 0 : index
    %c0_0 = arith.constant 0 : index
    %0 = vector.load %arg1[%c0, %c0_0] : memref<128x144xf32, #tpu.memory_space<vmem>>, vector<128x144xf32>
    %c0_1 = arith.constant 0 : index
    %c0_2 = arith.constant 0 : index
    %1 = vector.load %arg2[%c0_1, %c0_2] : memref<144x128xf32, #tpu.memory_space<vmem>>, vector<144x128xf32>
    %cst = arith.constant dense<0.000000e+00> : vector<128x128xf32>
    %2 = tpu.matmul %0, %1, %cst {dimension_numbers = #tpu.dot_dimension_numbers<[1], [0], [0], [1], [0, 0, 1, 1], [], []>} : vector<128x144xf32>, vector<144x128xf32>, vector<128x128xf32> -> vector<128x128xf32>
    %c0_3 = arith.constant 0 : index
    %c0_4 = arith.constant 0 : index
    %3 = vector.load %arg3[%c0_3, %c0_4] : memref<1x128xf32, #tpu.memory_space<vmem>>, vector<1x128xf32>
    %4 = vector.broadcast %3 : vector<1x128xf32> to vector<128x128xf32>
    %5 = arith.addf %2, %4 : vector<128x128xf32>
    %cst_5 = arith.constant 0.000000e+00 : f32
    %6 = vector.broadcast %cst_5 : f32 to vector<128x128xf32>
    %7 = arith.maximumf %5, %6 : vector<128x128xf32>
    %c0_6 = arith.constant 0 : index
    %c0_7 = arith.constant 0 : index
    %8 = vector.load %arg4[%c0_6, %c0_7] : memref<128x128xf32, #tpu.memory_space<vmem>>, vector<128x128xf32>
    tpu.vector_store %arg4[%c0_6, %c0_7], %7 {strides = array<i32>} : memref<128x128xf32, #tpu.memory_space<vmem>>, vector<128x128xf32>,
    return
  }
  func.func @transform_0(%arg0: i32) -> (i32, i32) {
    %c0_i32 = arith.constant 0 : i32
    %c0_i32_0 = arith.constant 0 : i32
    return %arg0, %c0_i32 : i32, i32
  }
  func.func @transform_1(%arg0: i32) -> (i32, i32) {
    %c0_i32 = arith.constant 0 : i32
    %c0_i32_0 = arith.constant 0 : i32
    %c0_i32_1 = arith.constant 0 : i32
    return %c0_i32, %c0_i32_0 : i32, i32
  }
  func.func @transform_2(%arg0: i32) -> (i32, i32) {
    %c0_i32 = arith.constant 0 : i32
    %c0_i32_0 = arith.constant 0 : i32
    %c0_i32_1 = arith.constant 0 : i32
    return %c0_i32, %c0_i32_0 : i32, i32
  }
  func.func @transform_3(%arg0: i32) -> (i32, i32) {
    %c0_i32 = arith.constant 0 : i32
    %c0_i32_0 = arith.constant 0 : i32
    return %arg0, %c0_i32 : i32, i32
  }
}

</mosaic_0001>

<llo_original>
// kernel: forward.6
$region0: #{forward.6}
  #allocation0 [shape = 'u32[]', space=smem, size = 0x4, offset = 0x4, fixed_abs, tag = 'smem constant byte address 0x4 - core index']
  #allocation1 [shape = 'u32[144,128]{1,0:T(1,128)}', space=vmem, size = 0x12000, scoped, tag = 'internal scratch']
  %s0 = inlined_call_operand.vmem [shape: f32[104,144], index: 0, kind: input, shape index: {}]
  %s1 = inlined_call_operand.vmem [shape: f32[144,64], index: 1, kind: input, shape index: {}]
  %s2 = inlined_call_operand.vmem [shape: f32[1,64], index: 2, kind: input, shape index: {}]
  %s3 = inlined_call_operand.vmem [shape: f32[104,64], index: 3, kind: output, shape index: {}]
  %s4 = sld [smem:[#allocation0]]
  $region22: #{forward.6} parent=0
    _
  %s6 = ssub.s32 1, %s4
  %s7 = scalar_select 0, %s6, %s4
  // Predicated region
  $region2: #{forward.6} parent=0 // pred_check
    _
  $region3: #{forward.6} parent=0 // pred_check_branch
    %9 = sbr.rel (0) target = $region5
  $region4: #{forward.6} parent=0 // pred_region
    _
  $region5: #{forward.6} parent=0 // pred_fallthru
    _
  // Predicated region
  $region6: #{forward.6} parent=0 // pred_check
    _
  $region7: #{forward.6} parent=0 // pred_check_branch
    %11 = sbr.rel (0) target = $region9
  $region8: #{forward.6} parent=0 // pred_region
    _
  $region9: #{forward.6} parent=0 // pred_fallthru
    _
  // Predicated region
  $region10: #{forward.6} parent=0 // pred_check
    _
  $region11: #{forward.6} parent=0 // pred_check_branch
    %13 = sbr.rel (0) target = $region13
  $region12: #{forward.6} parent=0 // pred_region
    _
  $region13: #{forward.6} parent=0 // pred_fallthru
    _
  %v14 = vld [vmem:[%s0] sm:$0xff]
  %v15 = vld [vmem:[%s0 + $0x8] sm:$0xff]
  %v16 = vld [vmem:[%s0 + $0x10] sm:$0xff]
  %v17 = vld [vmem:[%s0 + $0x18] sm:$0xff]
  %v18 = vld [vmem:[%s0 + $0x20] sm:$0xff]
  %v19 = vld [vmem:[%s0 + $0x28] sm:$0xff]
  %v20 = vld [vmem:[%s0 + $0x30] sm:$0xff]
  %v21 = vld [vmem:[%s0 + $0x38] sm:$0xff]
  %v22 = vld [vmem:[%s0 + $0x40] sm:$0xff]
  %v23 = vld [vmem:[%s0 + $0x48] sm:$0xff]
  %v24 = vld [vmem:[%s0 + $0x50] sm:$0xff]
  %v25 = vld [vmem:[%s0 + $0x58] sm:$0xff]
  %v26 = vld [vmem:[%s0 + $0x60] sm:$0xff]
  %v27 = vld [vmem:[%s0 + $0x68] sm:$0xff]
  %v28 = vld [vmem:[%s0 + $0x70] sm:$0xff]
  %v29 = vld [vmem:[%s0 + $0x78] sm:$0xff]
  %v30 = vld [vmem:[%s0 + $0x80] sm:$0xff]
  %v31 = vld [vmem:[%s0 + $0x88] sm:$0xff]
  %v32 = vld [vmem:[%s0 + $0x90] sm:$0xff]
  %v33 = vld [vmem:[%s0 + $0x98] sm:$0xff]
  %v34 = vld [vmem:[%s0 + $0xa0] sm:$0xff]
  %v35 = vld [vmem:[%s0 + $0xa8] sm:$0xff]
  %v36 = vld [vmem:[%s0 + $0xb0] sm:$0xff]
  %v37 = vld [vmem:[%s0 + $0xb8] sm:$0xff]
  %v38 = vld [vmem:[%s0 + $0xc0] sm:$0xff]
  %v39 = vld [vmem:[%s0 + $0xc8] sm:$0xff]
  %v40 = vld [vmem:[%s1] sm:$0xff]
  %v41 = vld [vmem:[%s1 + $0x8] sm:$0xff]
  %v42 = vld [vmem:[%s1 + $0x10] sm:$0xff]
  %v43 = vld [vmem:[%s1 + $0x18] sm:$0xff]
  %v44 = vld [vmem:[%s1 + $0x20] sm:$0xff]
  %v45 = vld [vmem:[%s1 + $0x28] sm:$0xff]
  %v46 = vld [vmem:[%s1 + $0x30] sm:$0xff]
  %v47 = vld [vmem:[%s1 + $0x38] sm:$0xff]
  %v48 = vld [vmem:[%s1 + $0x40] sm:$0xff]
  %v49 = vld [vmem:[%s1 + $0x48] sm:$0xff]
  %v50 = vld [vmem:[%s1 + $0x50] sm:$0xff]
  %v51 = vld [vmem:[%s1 + $0x58] sm:$0xff]
  %v52 = vld [vmem:[%s1 + $0x60] sm:$0xff]
  %v53 = vld [vmem:[%s1 + $0x68] sm:$0xff]
  %v54 = vld [vmem:[%s1 + $0x70] sm:$0xff]
  %v55 = vld [vmem:[%s1 + $0x78] sm:$0xff]
  %v56 = vld [vmem:[%s1 + $0x80] sm:$0xff]
  %v57 = vld [vmem:[%s1 + $0x88] sm:$0xff]
  %v58 = vld [vmem:[%s2] sm:$0x1]
  %v60 = vlaneseq
  %v61 = vshrl.u32 %v60, 7
  %v62 = vsub.s32 0, %v61
  %v63 = vrot.slane %v58, %v62
  %vm65 = vcmask 130048
  %v67 = vsel %vm65, %v15, 0
  %v70 = vsel %vm65, %v17, 0
  %v73 = vsel %vm65, %v19, 0
  %v76 = vsel %vm65, %v21, 0
  %v79 = vsel %vm65, %v23, 0
  %v82 = vsel %vm65, %v25, 0
  %v85 = vsel %vm65, %v27, 0
  %v88 = vsel %vm65, %v29, 0
  %v91 = vsel %vm65, %v31, 0
  %v94 = vsel %vm65, %v33, 0
  %v97 = vsel %vm65, %v35, 0
  %v100 = vsel %vm65, %v37, 0
  %v103 = vsel %vm65, %v39, 0
  %105 = vmatprep.subr.mxu0 0.0
  %106 = vmatpush1.msra.mxu0 %v40
  %107 = vmatprep.subr.mxu0 0.0
  %108 = vmatpush1.msra.mxu0 %v41
  %109 = vmatprep.subr.mxu0 0.0
  %110 = vmatpush1.msra.mxu0 %v42
  %111 = vmatprep.subr.mxu0 0.0
  %112 = vmatpush1.msra.mxu0 %v43
  %113 = vmatprep.subr.mxu0 0.0
  %114 = vmatpush1.msra.mxu0 %v44
  %115 = vmatprep.subr.mxu0 0.0
  %116 = vmatpush1.msra.mxu0 %v45
  %117 = vmatprep.subr.mxu0 0.0
  %118 = vmatpush1.msra.mxu0 %v46
  %119 = vmatprep.subr.mxu0 0.0
  %120 = vmatpush1.msra.mxu0 %v47
  %121 = vmatprep.subr.mxu0 0.0
  %122 = vmatpush1.msra.mxu0 %v48
  %123 = vmatprep.subr.mxu0 0.0
  %124 = vmatpush1.msra.mxu0 %v49
  %125 = vmatprep.subr.mxu0 0.0
  %126 = vmatpush1.msra.mxu0 %v50
  %127 = vmatprep.subr.mxu0 0.0
  %128 = vmatpush1.msra.mxu0 %v51
  %129 = vmatprep.subr.mxu0 0.0
  %130 = vmatpush1.msra.mxu0 %v52
  %131 = vmatprep.subr.mxu0 0.0
  %132 = vmatpush1.msra.mxu0 %v53
  %133 = vmatprep.subr.mxu0 0.0
  %134 = vmatpush1.msra.mxu0 %v54
  %135 = vmatprep.subr.mxu0 0.0
  %136 = vmatpush1.msra.mxu0 %v55
  %137 = vmatprep.subr.mxu0 0.0
  %138 = vmatpush1.msra.mxu0 %v56
  %139 = vmatprep.subr.mxu0 0.0
  %140 = vmatpush1.msra.mxu0 %v57
  %141 = vmatprep.subr.mxu0 0.0
  %142 = vmatpush1.msra.mxu0 0.0
  %143 = vmatprep.subr.mxu0 0.0
  %144 = vmatpush1.msra.mxu0 0.0
  %145 = vmatprep.subr.mxu0 0.0
  %146 = vmatpush1.msra.mxu0 0.0
  %147 = vmatprep.subr.mxu0 0.0
  %148 = vmatpush1.msra.mxu0 0.0
  %149 = vmatprep.subr.mxu0 0.0
  %150 = vmatpush1.msra.mxu0 0.0
  %151 = vmatprep.subr.mxu0 0.0
  %152 = vmatpush1.msra.mxu0 0.0
  %153 = vmatprep.subr.mxu0 0.0
  %154 = vmatpush1.msra.mxu0 0.0
  %155 = vmatprep.subr.mxu0 0.0
  %156 = vmatpush1.msra.mxu0 0.0
  %157 = vmatprep.subr.mxu0 0.0
  %158 = vmatpush1.msra.mxu0 0.0
  %159 = vmatprep.subr.mxu0 0.0
  %160 = vmatpush1.msra.mxu0 0.0
  %161 = vmatprep.subr.mxu0 0.0
  %162 = vmatpush1.msra.mxu0 0.0
  %163 = vmatprep.subr.mxu0 0.0
  %164 = vmatpush1.msra.mxu0 0.0
  %165 = vmatprep.subr.mxu0 0.0
  %166 = vmatpush1.msra.mxu0 0.0
  %167 = vmatprep.subr.mxu0 0.0
  %168 = vmatpush1.msra.mxu0 0.0
  %169 = vmatprep.mubr.f32.mxu0 %v67
  %170 = vmatmul.mubr.f32.gmra.mrb[0].mxu0 %v14
  %v171 = vpop.f32.mrb[0].mxu0
  %v172 = vadd.f32 %v63, %v171
  %v173 = vpop.f32.mrb[0].mxu0
  %174 = vmatprep.mubr.f32.mxu0 %v70
  %175 = vmatmul.mubr.f32.gmra.mrb[0].mxu0 %v16
  %v176 = vpop.f32.mrb[0].mxu0
  %v177 = vadd.f32 %v63, %v176
  %v178 = vpop.f32.mrb[0].mxu0
  %179 = vmatprep.mubr.f32.mxu0 %v73
  %180 = vmatmul.mubr.f32.gmra.mrb[0].mxu0 %v18
  %v181 = vpop.f32.mrb[0].mxu0
  %v182 = vadd.f32 %v63, %v181
  %v183 = vpop.f32.mrb[0].mxu0
  %184 = vmatprep.mubr.f32.mxu0 %v76
  %185 = vmatmul.mubr.f32.gmra.mrb[0].mxu0 %v20
  %v186 = vpop.f32.mrb[0].mxu0
  %v187 = vadd.f32 %v63, %v186
  %v188 = vpop.f32.mrb[0].mxu0
  %189 = vmatprep.mubr.f32.mxu0 %v79
  %190 = vmatmul.mubr.f32.gmra.mrb[0].mxu0 %v22
  %v191 = vpop.f32.mrb[0].mxu0
  %v192 = vadd.f32 %v63, %v191
  %v193 = vpop.f32.mrb[0].mxu0
  %194 = vmatprep.mubr.f32.mxu0 %v82
  %195 = vmatmul.mubr.f32.gmra.mrb[0].mxu0 %v24
  %v196 = vpop.f32.mrb[0].mxu0
  %v197 = vadd.f32 %v63, %v196
  %v198 = vpop.f32.mrb[0].mxu0
  %199 = vmatprep.mubr.f32.mxu0 %v85
  %200 = vmatmul.mubr.f32.gmra.mrb[0].mxu0 %v26
  %v201 = vpop.f32.mrb[0].mxu0
  %v202 = vadd.f32 %v63, %v201
  %v203 = vpop.f32.mrb[0].mxu0
  %204 = vmatprep.mubr.f32.mxu0 %v88
  %205 = vmatmul.mubr.f32.gmra.mrb[0].mxu0 %v28
  %v206 = vpop.f32.mrb[0].mxu0
  %v207 = vadd.f32 %v63, %v206
  %v208 = vpop.f32.mrb[0].mxu0
  %209 = vmatprep.mubr.f32.mxu0 %v91
  %210 = vmatmul.mubr.f32.gmra.mrb[0].mxu0 %v30
  %v211 = vpop.f32.mrb[0].mxu0
  %v212 = vadd.f32 %v63, %v211
  %v213 = vpop.f32.mrb[0].mxu0
  %214 = vmatprep.mubr.f32.mxu0 %v94
  %215 = vmatmul.mubr.f32.gmra.mrb[0].mxu0 %v32
  %v216 = vpop.f32.mrb[0].mxu0
  %v217 = vadd.f32 %v63, %v216
  %v218 = vpop.f32.mrb[0].mxu0
  %219 = vmatprep.mubr.f32.mxu0 %v97
  %220 = vmatmul.mubr.f32.gmra.mrb[0].mxu0 %v34
  %v221 = vpop.f32.mrb[0].mxu0
  %v222 = vadd.f32 %v63, %v221
  %v223 = vpop.f32.mrb[0].mxu0
  %224 = vmatprep.mubr.f32.mxu0 %v100
  %225 = vmatmul.mubr.f32.gmra.mrb[0].mxu0 %v36
  %v226 = vpop.f32.mrb[0].mxu0
  %v227 = vadd.f32 %v63, %v226
  %v228 = vpop.f32.mrb[0].mxu0
  %229 = vmatprep.mubr.f32.mxu0 %v103
  %230 = vmatmul.mubr.f32.gmra.mrb[0].mxu0 %v38
  %v231 = vpop.f32.mrb[0].mxu0
  %v232 = vadd.f32 %v63, %v231
  %v233 = vpop.f32.mrb[0].mxu0
  %234 = vdwg.mxu0
  %vm235 = vcmask 523264
  %236 = vst.msk [vmem:[%s3] sm:$0xff] %vm235, %v172
  %237 = vst.msk [vmem:[%s3 + $0x8] sm:$0xff] %vm235, %v177
  %238 = vst.msk [vmem:[%s3 + $0x10] sm:$0xff] %vm235, %v182
  %239 = vst.msk [vmem:[%s3 + $0x18] sm:$0xff] %vm235, %v187
  %240 = vst.msk [vmem:[%s3 + $0x20] sm:$0xff] %vm235, %v192
  %241 = vst.msk [vmem:[%s3 + $0x28] sm:$0xff] %vm235, %v197
  %242 = vst.msk [vmem:[%s3 + $0x30] sm:$0xff] %vm235, %v202
  %243 = vst.msk [vmem:[%s3 + $0x38] sm:$0xff] %vm235, %v207
  %244 = vst.msk [vmem:[%s3 + $0x40] sm:$0xff] %vm235, %v212
  %245 = vst.msk [vmem:[%s3 + $0x48] sm:$0xff] %vm235, %v217
  %246 = vst.msk [vmem:[%s3 + $0x50] sm:$0xff] %vm235, %v222
  %247 = vst.msk [vmem:[%s3 + $0x58] sm:$0xff] %vm235, %v227
  %248 = vst.msk [vmem:[%s3 + $0x60] sm:$0xff] %vm235, %v232
  // Predicated region
  $region14: #{forward.6} parent=0 // pred_check
    _
  $region15: #{forward.6} parent=0 // pred_check_branch
    %250 = sbr.rel (0) target = $region17
  $region16: #{forward.6} parent=0 // pred_region
    _
  $region17: #{forward.6} parent=0 // pred_fallthru
    _
  // Predicated region
  $region18: #{forward.6} parent=0 // pred_check
    _
  $region19: #{forward.6} parent=0 // pred_check_branch
    %252 = sbr.rel (0) target = $region21
  $region20: #{forward.6} parent=0 // pred_region
    _
  $region21: #{forward.6} parent=0 // pred_fallthru
    _

// kernel: forward.5
$region0: #{forward.5}
  #allocation0 [shape = 'u32[]', space=smem, size = 0x4, offset = 0x4, fixed_abs, tag = 'smem constant byte address 0x4 - core index']
  #allocation1 [shape = 'u32[144,128]{1,0:T(1,128)}', space=vmem, size = 0x12000, scoped, tag = 'internal scratch']
  %s0 = inlined_call_operand.vmem [shape: f32[8,16], index: 0, kind: input, shape index: {}]
  %s1 = inlined_call_operand.vmem [shape: f32[16,784], index: 1, kind: input, shape index: {}]
  %s2 = inlined_call_operand.vmem [shape: f32[1,784], index: 2, kind: input, shape index: {}]
  %s3 = inlined_call_operand.vmem [shape: f32[784,16], index: 3, kind: input, shape index: {}]
  %s4 = inlined_call_operand.vmem [shape: f32[16,784], index: 4, kind: input, shape index: {}]
  %s5 = inlined_call_operand.vmem [shape: f32[1,16], index: 5, kind: input, shape index: {}]
  %s6 = inlined_call_operand.vmem [shape: f32[1,16], index: 6, kind: input, shape index: {}]
  %s7 = inlined_call_operand.vmem [shape: f32[8,784], index: 7, kind: output, shape index: {}]
  %s8 = sld [smem:[#allocation0]]
  $region38: #{forward.5} parent=0
    _
  %s10 = ssub.s32 1, %s8
  %s11 = scalar_select 0, %s10, %s8
  // Predicated region
  $region2: #{forward.5} parent=0 // pred_check
    _
  $region3: #{forward.5} parent=0 // pred_check_branch
    %13 = sbr.rel (0) target = $region5
  $region4: #{forward.5} parent=0 // pred_region
    _
  $region5: #{forward.5} parent=0 // pred_fallthru
    _
  // Predicated region
  $region6: #{forward.5} parent=0 // pred_check
    _
  $region7: #{forward.5} parent=0 // pred_check_branch
    %15 = sbr.rel (0) target = $region9
  $region8: #{forward.5} parent=0 // pred_region
    _
  $region9: #{forward.5} parent=0 // pred_fallthru
    _
  // Predicated region
  $region10: #{forward.5} parent=0 // pred_check
    _
  $region11: #{forward.5} parent=0 // pred_check_branch
    %17 = sbr.rel (0) target = $region13
  $region12: #{forward.5} parent=0 // pred_region
    _
  $region13: #{forward.5} parent=0 // pred_fallthru
    _
  // Predicated region
  $region14: #{forward.5} parent=0 // pred_check
    _
  $region15: #{forward.5} parent=0 // pred_check_branch
    %19 = sbr.rel (0) target = $region17
  $region16: #{forward.5} parent=0 // pred_region
    _
  $region17: #{forward.5} parent=0 // pred_fallthru
    _
  // Predicated region
  $region18: #{forward.5} parent=0 // pred_check
    _
  $region19: #{forward.5} parent=0 // pred_check_branch
    %21 = sbr.rel (0) target = $region21
  $region20: #{forward.5} parent=0 // pred_region
    _
  $region21: #{forward.5} parent=0 // pred_fallthru
    _
  // Predicated region
  $region22: #{forward.5} parent=0 // pred_check
    _
  $region23: #{forward.5} parent=0 // pred_check_branch
    %23 = sbr.rel (0) target = $region25
  $region24: #{forward.5} parent=0 // pred_region
    _
  $region25: #{forward.5} parent=0 // pred_fallthru
    _
  // Predicated region
  $region26: #{forward.5} parent=0 // pred_check
    _
  $region27: #{forward.5} parent=0 // pred_check_branch
    %25 = sbr.rel (0) target = $region29
  $region28: #{forward.5} parent=0 // pred_region
    _
  $region29: #{forward.5} parent=0 // pred_fallthru
    _
  %v26 = vld [vmem:[%s0] sm:$0xff]
  %v27 = vld [vmem:[%s1] sm:$0xff]
  %v28 = vld [vmem:[%s1 + $0x8] sm:$0xff]
  %v29 = vld [vmem:[%s1 + $0x10] sm:$0xff]
  %v30 = vld [vmem:[%s1 + $0x18] sm:$0xff]
  %v31 = vld [vmem:[%s1 + $0x20] sm:$0xff]
  %v32 = vld [vmem:[%s1 + $0x28] sm:$0xff]
  %v33 = vld [vmem:[%s1 + $0x30] sm:$0xff]
  %v34 = vld [vmem:[%s1 + $0x38] sm:$0xff]
  %v35 = vld [vmem:[%s1 + $0x40] sm:$0xff]
  %v36 = vld [vmem:[%s1 + $0x48] sm:$0xff]
  %v37 = vld [vmem:[%s1 + $0x50] sm:$0xff]
  %v38 = vld [vmem:[%s1 + $0x58] sm:$0xff]
  %v39 = vld [vmem:[%s1 + $0x60] sm:$0xff]
  %v40 = vld [vmem:[%s1 + $0x68] sm:$0xff]
  %v41 = vld [vmem:[%s2] sm:$0x7f]
  %v43 = vlaneseq
  %v44 = vshrl.u32 %v43, 7
  %v45 = vsub.s32 0, %v44
  %v46 = vrot.slane %v41, %v45
  %v47 = vlaneseq
  %v48 = vshrl.u32 %v47, 7
  %v49 = vsub.s32 1, %v48
  %v50 = vrot.slane %v41, %v49
  %v51 = vlaneseq
  %v52 = vshrl.u32 %v51, 7
  %v53 = vsub.s32 2, %v52
  %v54 = vrot.slane %v41, %v53
  %v55 = vlaneseq
  %v56 = vshrl.u32 %v55, 7
  %v57 = vsub.s32 3, %v56
  %v58 = vrot.slane %v41, %v57
  %v59 = vlaneseq
  %v60 = vshrl.u32 %v59, 7
  %v61 = vsub.s32 4, %v60
  %v62 = vrot.slane %v41, %v61
  %v63 = vlaneseq
  %v64 = vshrl.u32 %v63, 7
  %v65 = vsub.s32 5, %v64
  %v66 = vrot.slane %v41, %v65
  %v67 = vlaneseq
  %v68 = vshrl.u32 %v67, 7
  %v69 = vsub.s32 6, %v68
  %v70 = vrot.slane %v41, %v69
  %vm78 = vcmask 130048
  %v80 = vsel %vm78, %v26, 0
  %82 = vmatprep.subr.mxu0 %v28
  %83 = vmatpush1.msra.mxu0 %v27
  %84 = vmatprep.subr.mxu0 %v35
  %85 = vmatpush1.msra.mxu0 %v34
  %86 = vmatprep.subr.mxu0 0.0
  %87 = vmatpush1.msra.mxu0 0.0
  %88 = vmatprep.subr.mxu0 0.0
  %89 = vmatpush1.msra.mxu0 0.0
  %90 = vmatprep.subr.mxu0 0.0
  %91 = vmatpush1.msra.mxu0 0.0
  %92 = vmatprep.subr.mxu0 0.0
  %93 = vmatpush1.msra.mxu0 0.0
  %94 = vmatprep.subr.mxu0 0.0
  %95 = vmatpush1.msra.mxu0 0.0
  %96 = vmatprep.subr.mxu0 0.0
  %97 = vmatpush1.msra.mxu0 0.0
  %98 = vmatprep.subr.mxu0 0.0
  %99 = vmatpush1.msra.mxu0 0.0
  %100 = vmatprep.subr.mxu0 0.0
  %101 = vmatpush1.msra.mxu0 0.0
  %102 = vmatprep.subr.mxu0 0.0
  %103 = vmatpush1.msra.mxu0 0.0
  %104 = vmatprep.subr.mxu0 0.0
  %105 = vmatpush1.msra.mxu0 0.0
  %106 = vmatprep.subr.mxu0 0.0
  %107 = vmatpush1.msra.mxu0 0.0
  %108 = vmatprep.subr.mxu0 0.0
  %109 = vmatpush1.msra.mxu0 0.0
  %110 = vmatprep.subr.mxu0 0.0
  %111 = vmatpush1.msra.mxu0 0.0
  %112 = vmatprep.subr.mxu0 0.0
  %113 = vmatpush1.msra.mxu0 0.0
  %114 = vmatprep.subr.mxu0 0.0
  %115 = vmatpush1.msra.mxu0 0.0
  %116 = vmatprep.subr.mxu0 0.0
  %117 = vmatpush1.msra.mxu0 0.0
  %118 = vmatprep.subr.mxu0 0.0
  %119 = vmatpush1.msra.mxu0 0.0
  %120 = vmatprep.subr.mxu0 0.0
  %121 = vmatpush1.msra.mxu0 0.0
  %122 = vmatprep.subr.mxu0 0.0
  %123 = vmatpush1.msra.mxu0 0.0
  %124 = vmatprep.subr.mxu0 0.0
  %125 = vmatpush1.msra.mxu0 0.0
  %126 = vmatprep.subr.mxu0 0.0
  %127 = vmatpush1.msra.mxu0 0.0
  %128 = vmatprep.subr.mxu0 0.0
  %129 = vmatpush1.msra.mxu0 0.0
  %130 = vmatprep.subr.mxu0 0.0
  %131 = vmatpush1.msra.mxu0 0.0
  %132 = vmatprep.subr.mxu0 0.0
  %133 = vmatpush1.msra.mxu0 0.0
  %134 = vmatprep.subr.mxu0 0.0
  %135 = vmatpush1.msra.mxu0 0.0
  %136 = vmatprep.subr.mxu0 0.0
  %137 = vmatpush1.msra.mxu0 0.0
  %138 = vmatprep.subr.mxu0 0.0
  %139 = vmatpush1.msra.mxu0 0.0
  %140 = vmatprep.subr.mxu0 0.0
  %141 = vmatpush1.msra.mxu0 0.0
  %142 = vmatprep.subr.mxu0 0.0
  %143 = vmatpush1.msra.mxu0 0.0
  %144 = vmatprep.subr.mxu0 0.0
  %145 = vmatpush1.msra.mxu0 0.0
  %146 = vmatprep.mubr.f32.mxu0 0.0
  %147 = vmatmul.mubr.f32.gmra.mrb[0].mxu0 %v80
  %v148 = vpop.f32.mrb[0].mxu0
  %v149 = vadd.f32 %v46, %v148
  %v150 = vpop.f32.mrb[0].mxu0
  %v151 = vadd.f32 %v50, %v150
  %152 = vdwg.mxu0
  %153 = vmatprep.subr.mxu0 %v30
  %154 = vmatpush1.msra.mxu0 %v29
  %155 = vmatprep.subr.mxu0 %v37
  %156 = vmatpush1.msra.mxu0 %v36
  %157 = vmatprep.subr.mxu0 0.0
  %158 = vmatpush1.msra.mxu0 0.0
  %159 = vmatprep.subr.mxu0 0.0
  %160 = vmatpush1.msra.mxu0 0.0
  %161 = vmatprep.subr.mxu0 0.0
  %162 = vmatpush1.msra.mxu0 0.0
  %163 = vmatprep.subr.mxu0 0.0
  %164 = vmatpush1.msra.mxu0 0.0
  %165 = vmatprep.subr.mxu0 0.0
  %166 = vmatpush1.msra.mxu0 0.0
  %167 = vmatprep.subr.mxu0 0.0
  %168 = vmatpush1.msra.mxu0 0.0
  %169 = vmatprep.subr.mxu0 0.0
  %170 = vmatpush1.msra.mxu0 0.0
  %171 = vmatprep.subr.mxu0 0.0
  %172 = vmatpush1.msra.mxu0 0.0
  %173 = vmatprep.subr.mxu0 0.0
  %174 = vmatpush1.msra.mxu0 0.0
  %175 = vmatprep.subr.mxu0 0.0
  %176 = vmatpush1.msra.mxu0 0.0
  %177 = vmatprep.subr.mxu0 0.0
  %178 = vmatpush1.msra.mxu0 0.0
  %179 = vmatprep.subr.mxu0 0.0
  %180 = vmatpush1.msra.mxu0 0.0
  %181 = vmatprep.subr.mxu0 0.0
  %182 = vmatpush1.msra.mxu0 0.0
  %183 = vmatprep.subr.mxu0 0.0
  %184 = vmatpush1.msra.mxu0 0.0
  %185 = vmatprep.subr.mxu0 0.0
  %186 = vmatpush1.msra.mxu0 0.0
  %187 = vmatprep.subr.mxu0 0.0
  %188 = vmatpush1.msra.mxu0 0.0
  %189 = vmatprep.subr.mxu0 0.0
  %190 = vmatpush1.msra.mxu0 0.0
  %191 = vmatprep.subr.mxu0 0.0
  %192 = vmatpush1.msra.mxu0 0.0
  %193 = vmatprep.subr.mxu0 0.0
  %194 = vmatpush1.msra.mxu0 0.0
  %195 = vmatprep.subr.mxu0 0.0
  %196 = vmatpush1.msra.mxu0 0.0
  %197 = vmatprep.subr.mxu0 0.0
  %198 = vmatpush1.msra.mxu0 0.0
  %199 = vmatprep.subr.mxu0 0.0
  %200 = vmatpush1.msra.mxu0 0.0
  %201 = vmatprep.subr.mxu0 0.0
  %202 = vmatpush1.msra.mxu0 0.0
  %203 = vmatprep.subr.mxu0 0.0
  %204 = vmatpush1.msra.mxu0 0.0
  %205 = vmatprep.subr.mxu0 0.0
  %206 = vmatpush1.msra.mxu0 0.0
  %207 = vmatprep.subr.mxu0 0.0
  %208 = vmatpush1.msra.mxu0 0.0
  %209 = vmatprep.subr.mxu0 0.0
  %210 = vmatpush1.msra.mxu0 0.0
  %211 = vmatprep.subr.mxu0 0.0
  %212 = vmatpush1.msra.mxu0 0.0
  %213 = vmatprep.subr.mxu0 0.0
  %214 = vmatpush1.msra.mxu0 0.0
  %215 = vmatprep.subr.mxu0 0.0
  %216 = vmatpush1.msra.mxu0 0.0
  %217 = vmatprep.mubr.f32.mxu0 0.0
  %218 = vmatmul.mubr.f32.gmra.mrb[0].mxu0 %v80
  %v219 = vpop.f32.mrb[0].mxu0
  %v220 = vadd.f32 %v54, %v219
  %v221 = vpop.f32.mrb[0].mxu0
  %v222 = vadd.f32 %v58, %v221
  %223 = vdwg.mxu0
  %224 = vmatprep.subr.mxu0 %v32
  %225 = vmatpush1.msra.mxu0 %v31
  %226 = vmatprep.subr.mxu0 %v39
  %227 = vmatpush1.msra.mxu0 %v38
  %228 = vmatprep.subr.mxu0 0.0
  %229 = vmatpush1.msra.mxu0 0.0
  %230 = vmatprep.subr.mxu0 0.0
  %231 = vmatpush1.msra.mxu0 0.0
  %232 = vmatprep.subr.mxu0 0.0
  %233 = vmatpush1.msra.mxu0 0.0
  %234 = vmatprep.subr.mxu0 0.0
  %235 = vmatpush1.msra.mxu0 0.0
  %236 = vmatprep.subr.mxu0 0.0
  %237 = vmatpush1.msra.mxu0 0.0
  %238 = vmatprep.subr.mxu0 0.0
  %239 = vmatpush1.msra.mxu0 0.0
  %240 = vmatprep.subr.mxu0 0.0
  %241 = vmatpush1.msra.mxu0 0.0
  %242 = vmatprep.subr.mxu0 0.0
  %243 = vmatpush1.msra.mxu0 0.0
  %244 = vmatprep.subr.mxu0 0.0
  %245 = vmatpush1.msra.mxu0 0.0
  %246 = vmatprep.subr.mxu0 0.0
  %247 = vmatpush1.msra.mxu0 0.0
  %248 = vmatprep.subr.mxu0 0.0
  %249 = vmatpush1.msra.mxu0 0.0
  %250 = vmatprep.subr.mxu0 0.0
  %251 = vmatpush1.msra.mxu0 0.0
  %252 = vmatprep.subr.mxu0 0.0
  %253 = vmatpush1.msra.mxu0 0.0
  %254 = vmatprep.subr.mxu0 0.0
  %255 = vmatpush1.msra.mxu0 0.0
  %256 = vmatprep.subr.mxu0 0.0
  %257 = vmatpush1.msra.mxu0 0.0
  %258 = vmatprep.subr.mxu0 0.0
  %259 = vmatpush1.msra.mxu0 0.0
  %260 = vmatprep.subr.mxu0 0.0
  %261 = vmatpush1.msra.mxu0 0.0
  %262 = vmatprep.subr.mxu0 0.0
  %263 = vmatpush1.msra.mxu0 0.0
  %264 = vmatprep.subr.mxu0 0.0
  %265 = vmatpush1.msra.mxu0 0.0
  %266 = vmatprep.subr.mxu0 0.0
  %267 = vmatpush1.msra.mxu0 0.0
  %268 = vmatprep.subr.mxu0 0.0
  %269 = vmatpush1.msra.mxu0 0.0
  %270 = vmatprep.subr.mxu0 0.0
  %271 = vmatpush1.msra.mxu0 0.0
  %272 = vmatprep.subr.mxu0 0.0
  %273 = vmatpush1.msra.mxu0 0.0
  %274 = vmatprep.subr.mxu0 0.0
  %275 = vmatpush1.msra.mxu0 0.0
  %276 = vmatprep.subr.mxu0 0.0
  %277 = vmatpush1.msra.mxu0 0.0
  %278 = vmatprep.subr.mxu0 0.0
  %279 = vmatpush1.msra.mxu0 0.0
  %280 = vmatprep.subr.mxu0 0.0
  %281 = vmatpush1.msra.mxu0 0.0
  %282 = vmatprep.subr.mxu0 0.0
  %283 = vmatpush1.msra.mxu0 0.0
  %284 = vmatprep.subr.mxu0 0.0
  %285 = vmatpush1.msra.mxu0 0.0
  %286 = vmatprep.subr.mxu0 0.0
  %287 = vmatpush1.msra.mxu0 0.0
  %288 = vmatprep.mubr.f32.mxu0 0.0
  %289 = vmatmul.mubr.f32.gmra.mrb[0].mxu0 %v80
  %v290 = vpop.f32.mrb[0].mxu0
  %v291 = vadd.f32 %v62, %v290
  %v292 = vpop.f32.mrb[0].mxu0
  %v293 = vadd.f32 %v66, %v292
  %294 = vdwg.mxu0
  %295 = vmatprep.subr.mxu0 0.0
  %296 = vmatpush1.msra.mxu0 %v33
  %297 = vmatprep.subr.mxu0 0.0
  %298 = vmatpush1.msra.mxu0 %v40
  %299 = vmatprep.subr.mxu0 0.0
  %300 = vmatpush1.msra.mxu0 0.0
  %301 = vmatprep.subr.mxu0 0.0
  %302 = vmatpush1.msra.mxu0 0.0
  %303 = vmatprep.subr.mxu0 0.0
  %304 = vmatpush1.msra.mxu0 0.0
  %305 = vmatprep.subr.mxu0 0.0
  %306 = vmatpush1.msra.mxu0 0.0
  %307 = vmatprep.subr.mxu0 0.0
  %308 = vmatpush1.msra.mxu0 0.0
  %309 = vmatprep.subr.mxu0 0.0
  %310 = vmatpush1.msra.mxu0 0.0
  %311 = vmatprep.subr.mxu0 0.0
  %312 = vmatpush1.msra.mxu0 0.0
  %313 = vmatprep.subr.mxu0 0.0
  %314 = vmatpush1.msra.mxu0 0.0
  %315 = vmatprep.subr.mxu0 0.0
  %316 = vmatpush1.msra.mxu0 0.0
  %317 = vmatprep.subr.mxu0 0.0
  %318 = vmatpush1.msra.mxu0 0.0
  %319 = vmatprep.subr.mxu0 0.0
  %320 = vmatpush1.msra.mxu0 0.0
  %321 = vmatprep.subr.mxu0 0.0
  %322 = vmatpush1.msra.mxu0 0.0
  %323 = vmatprep.subr.mxu0 0.0
  %324 = vmatpush1.msra.mxu0 0.0
  %325 = vmatprep.subr.mxu0 0.0
  %326 = vmatpush1.msra.mxu0 0.0
  %327 = vmatprep.subr.mxu0 0.0
  %328 = vmatpush1.msra.mxu0 0.0
  %329 = vmatprep.subr.mxu0 0.0
  %330 = vmatpush1.msra.mxu0 0.0
  %331 = vmatprep.subr.mxu0 0.0
  %332 = vmatpush1.msra.mxu0 0.0
  %333 = vmatprep.subr.mxu0 0.0
  %334 = vmatpush1.msra.mxu0 0.0
  %335 = vmatprep.subr.mxu0 0.0
  %336 = vmatpush1.msra.mxu0 0.0
  %337 = vmatprep.subr.mxu0 0.0
  %338 = vmatpush1.msra.mxu0 0.0
  %339 = vmatprep.subr.mxu0 0.0
  %340 = vmatpush1.msra.mxu0 0.0
  %341 = vmatprep.subr.mxu0 0.0
  %342 = vmatpush1.msra.mxu0 0.0
  %343 = vmatprep.subr.mxu0 0.0
  %344 = vmatpush1.msra.mxu0 0.0
  %345 = vmatprep.subr.mxu0 0.0
  %346 = vmatpush1.msra.mxu0 0.0
  %347 = vmatprep.subr.mxu0 0.0
  %348 = vmatpush1.msra.mxu0 0.0
  %349 = vmatprep.subr.mxu0 0.0
  %350 = vmatpush1.msra.mxu0 0.0
  %351 = vmatprep.subr.mxu0 0.0
  %352 = vmatpush1.msra.mxu0 0.0
  %353 = vmatprep.subr.mxu0 0.0
  %354 = vmatpush1.msra.mxu0 0.0
  %355 = vmatprep.subr.mxu0 0.0
  %356 = vmatpush1.msra.mxu0 0.0
  %357 = vmatprep.subr.mxu0 0.0
  %358 = vmatpush1.msra.mxu0 0.0
  %359 = vmatprep.mubr.f32.mxu0 0.0
  %360 = vmatmul.mubr.f32.gmra.mrb[0].mxu0 %v80
  %v361 = vpop.f32.mrb[0].mxu0
  %v362 = vadd.f32 %v70, %v361
  %v363 = vpop.f32.mrb[0].mxu0
  %364 = vdwg.mxu0
  %v365 = vmax.f32 %v149, 0.0
  %v366 = vmax.f32 %v151, 0.0
  %v367 = vmax.f32 %v220, 0.0
  %v368 = vmax.f32 %v222, 0.0
  %v369 = vmax.f32 %v291, 0.0
  %v370 = vmax.f32 %v293, 0.0
  %v371 = vmax.f32 %v362, 0.0
  %v372 = vlaneseq
  %v373 = vshrl.u32 %v372, 7
  %vm374 = vcmp.lt.s32.totalorder %v373, 2
  %v375 = vsel %vm374, %v365, 0.0
  %v376 = vsel %vm374, %v366, 0.0
  %v377 = vsel %vm374, %v367, 0.0
  %v378 = vsel %vm374, %v368, 0.0
  %v379 = vsel %vm374, %v369, 0.0
  %v380 = vsel %vm374, %v370, 0.0
  %v381 = vsel %vm374, %v371, 0.0
  %v382 = vld [vmem:[%s3] sm:$0xff]
  %v383 = vld [vmem:[%s3 + $0x8] sm:$0xff]
  %v384 = vld [vmem:[%s3 + $0x10] sm:$0xff]
  %v385 = vld [vmem:[%s3 + $0x18] sm:$0xff]
  %v386 = vld [vmem:[%s3 + $0x20] sm:$0xff]
  %v387 = vld [vmem:[%s3 + $0x28] sm:$0xff]
  %v388 = vld [vmem:[%s3 + $0x30] sm:$0xff]
  %v389 = vld [vmem:[%s3 + $0x38] sm:$0xff]
  %v390 = vld [vmem:[%s3 + $0x40] sm:$0xff]
  %v391 = vld [vmem:[%s3 + $0x48] sm:$0xff]
  %v392 = vld [vmem:[%s3 + $0x50] sm:$0xff]
  %v393 = vld [vmem:[%s3 + $0x58] sm:$0xff]
  %v394 = vld [vmem:[%s3 + $0x60] sm:$0xff]
  %v395 = vld [vmem:[%s3 + $0x68] sm:$0xff]
  %v396 = vld [vmem:[%s3 + $0x70] sm:$0xff]
  %v397 = vld [vmem:[%s3 + $0x78] sm:$0xff]
  %v398 = vld [vmem:[%s3 + $0x80] sm:$0xff]
  %v399 = vld [vmem:[%s3 + $0x88] sm:$0xff]
  %v400 = vld [vmem:[%s3 + $0x90] sm:$0xff]
  %v401 = vld [vmem:[%s3 + $0x98] sm:$0xff]
  %v402 = vld [vmem:[%s3 + $0xa0] sm:$0xff]
  %v403 = vld [vmem:[%s3 + $0xa8] sm:$0xff]
  %v404 = vld [vmem:[%s3 + $0xb0] sm:$0xff]
  %v405 = vld [vmem:[%s3 + $0xb8] sm:$0xff]
  %v406 = vld [vmem:[%s3 + $0xc0] sm:$0xff]
  %v407 = vld [vmem:[%s3 + $0xc8] sm:$0xff]
  %v408 = vld [vmem:[%s3 + $0xd0] sm:$0xff]
  %v409 = vld [vmem:[%s3 + $0xd8] sm:$0xff]
  %v410 = vld [vmem:[%s3 + $0xe0] sm:$0xff]
  %v411 = vld [vmem:[%s3 + $0xe8] sm:$0xff]
  %v412 = vld [vmem:[%s3 + $0xf0] sm:$0xff]
  %v413 = vld [vmem:[%s3 + $0xf8] sm:$0xff]
  %v414 = vld [vmem:[%s3 + $0x100] sm:$0xff]
  %v415 = vld [vmem:[%s3 + $0x108] sm:$0xff]
  %v416 = vld [vmem:[%s3 + $0x110] sm:$0xff]
  %v417 = vld [vmem:[%s3 + $0x118] sm:$0xff]
  %v418 = vld [vmem:[%s3 + $0x120] sm:$0xff]
  %v419 = vld [vmem:[%s3 + $0x128] sm:$0xff]
  %v420 = vld [vmem:[%s3 + $0x130] sm:$0xff]
  %v421 = vld [vmem:[%s3 + $0x138] sm:$0xff]
  %v422 = vld [vmem:[%s3 + $0x140] sm:$0xff]
  %v423 = vld [vmem:[%s3 + $0x148] sm:$0xff]
  %v424 = vld [vmem:[%s3 + $0x150] sm:$0xff]
  %v425 = vld [vmem:[%s3 + $0x158] sm:$0xff]
  %v426 = vld [vmem:[%s3 + $0x160] sm:$0xff]
  %v427 = vld [vmem:[%s3 + $0x168] sm:$0xff]
  %v428 = vld [vmem:[%s3 + $0x170] sm:$0xff]
  %v429 = vld [vmem:[%s3 + $0x178] sm:$0xff]
  %v430 = vld [vmem:[%s3 + $0x180] sm:$0xff]
  %v431 = vld [vmem:[%s3 + $0x188] sm:$0xff]
  %v432 = vld [vmem:[%s3 + $0x190] sm:$0xff]
  %v433 = vld [vmem:[%s3 + $0x198] sm:$0xff]
  %v434 = vld [vmem:[%s3 + $0x1a0] sm:$0xff]
  %v435 = vld [vmem:[%s3 + $0x1a8] sm:$0xff]
  %v436 = vld [vmem:[%s3 + $0x1b0] sm:$0xff]
  %v437 = vld [vmem:[%s3 + $0x1b8] sm:$0xff]
  %v438 = vld [vmem:[%s3 + $0x1c0] sm:$0xff]
  %v439 = vld [vmem:[%s3 + $0x1c8] sm:$0xff]
  %v440 = vld [vmem:[%s3 + $0x1d0] sm:$0xff]
  %v441 = vld [vmem:[%s3 + $0x1d8] sm:$0xff]
  %v442 = vld [vmem:[%s3 + $0x1e0] sm:$0xff]
  %v443 = vld [vmem:[%s3 + $0x1e8] sm:$0xff]
  %v444 = vld [vmem:[%s3 + $0x1f0] sm:$0xff]
  %v445 = vld [vmem:[%s3 + $0x1f8] sm:$0xff]
  %v446 = vld [vmem:[%s3 + $0x200] sm:$0xff]
  %v447 = vld [vmem:[%s3 + $0x208] sm:$0xff]
  %v448 = vld [vmem:[%s3 + $0x210] sm:$0xff]
  %v449 = vld [vmem:[%s3 + $0x218] sm:$0xff]
  %v450 = vld [vmem:[%s3 + $0x220] sm:$0xff]
  %v451 = vld [vmem:[%s3 + $0x228] sm:$0xff]
  %v452 = vld [vmem:[%s3 + $0x230] sm:$0xff]
  %v453 = vld [vmem:[%s3 + $0x238] sm:$0xff]
  %v454 = vld [vmem:[%s3 + $0x240] sm:$0xff]
  %v455 = vld [vmem:[%s3 + $0x248] sm:$0xff]
  %v456 = vld [vmem:[%s3 + $0x250] sm:$0xff]
  %v457 = vld [vmem:[%s3 + $0x258] sm:$0xff]
  %v458 = vld [vmem:[%s3 + $0x260] sm:$0xff]
  %v459 = vld [vmem:[%s3 + $0x268] sm:$0xff]
  %v460 = vld [vmem:[%s3 + $0x270] sm:$0xff]
  %v461 = vld [vmem:[%s3 + $0x278] sm:$0xff]
  %v462 = vld [vmem:[%s3 + $0x280] sm:$0xff]
  %v463 = vld [vmem:[%s3 + $0x288] sm:$0xff]
  %v464 = vld [vmem:[%s3 + $0x290] sm:$0xff]
  %v465 = vld [vmem:[%s3 + $0x298] sm:$0xff]
  %v466 = vld [vmem:[%s3 + $0x2a0] sm:$0xff]
  %v467 = vld [vmem:[%s3 + $0x2a8] sm:$0xff]
  %v468 = vld [vmem:[%s3 + $0x2b0] sm:$0xff]
  %v469 = vld [vmem:[%s3 + $0x2b8] sm:$0xff]
  %v470 = vld [vmem:[%s3 + $0x2c0] sm:$0xff]
  %v471 = vld [vmem:[%s3 + $0x2c8] sm:$0xff]
  %v472 = vld [vmem:[%s3 + $0x2d0] sm:$0xff]
  %v473 = vld [vmem:[%s3 + $0x2d8] sm:$0xff]
  %v474 = vld [vmem:[%s3 + $0x2e0] sm:$0xff]
  %v475 = vld [vmem:[%s3 + $0x2e8] sm:$0xff]
  %v476 = vld [vmem:[%s3 + $0x2f0] sm:$0xff]
  %v477 = vld [vmem:[%s3 + $0x2f8] sm:$0xff]
  %v478 = vld [vmem:[%s3 + $0x300] sm:$0xff]
  %v479 = vld [vmem:[%s3 + $0x308] sm:$0xff]
  %v481 = vsel %vm78, %v381, 0
  %483 = vmatprep.subr.mxu0 0.0
  %484 = vmatpush1.msra.mxu0 %v382
  %485 = vmatprep.subr.mxu0 0.0
  %486 = vmatpush1.msra.mxu0 %v383
  %487 = vmatprep.subr.mxu0 0.0
  %488 = vmatpush1.msra.mxu0 %v384
  %489 = vmatprep.subr.mxu0 0.0
  %490 = vmatpush1.msra.mxu0 %v385
  %491 = vmatprep.subr.mxu0 0.0
  %492 = vmatpush1.msra.mxu0 %v386
  %493 = vmatprep.subr.mxu0 0.0
  %494 = vmatpush1.msra.mxu0 %v387
  %495 = vmatprep.subr.mxu0 0.0
  %496 = vmatpush1.msra.mxu0 %v388
  %497 = vmatprep.subr.mxu0 0.0
  %498 = vmatpush1.msra.mxu0 %v389
  %499 = vmatprep.subr.mxu0 0.0
  %500 = vmatpush1.msra.mxu0 %v390
  %501 = vmatprep.subr.mxu0 0.0
  %502 = vmatpush1.msra.mxu0 %v391
  %503 = vmatprep.subr.mxu0 0.0
  %504 = vmatpush1.msra.mxu0 %v392
  %505 = vmatprep.subr.mxu0 0.0
  %506 = vmatpush1.msra.mxu0 %v393
  %507 = vmatprep.subr.mxu0 0.0
  %508 = vmatpush1.msra.mxu0 %v394
  %509 = vmatprep.subr.mxu0 0.0
  %510 = vmatpush1.msra.mxu0 %v395
  %511 = vmatprep.subr.mxu0 0.0
  %512 = vmatpush1.msra.mxu0 %v396
  %513 = vmatprep.subr.mxu0 0.0
  %514 = vmatpush1.msra.mxu0 %v397
  %515 = vmatprep.subr.mxu0 0.0
  %516 = vmatpush1.msra.mxu0 %v398
  %517 = vmatprep.subr.mxu0 0.0
  %518 = vmatpush1.msra.mxu0 %v399
  %519 = vmatprep.subr.mxu0 0.0
  %520 = vmatpush1.msra.mxu0 %v400
  %521 = vmatprep.subr.mxu0 0.0
  %522 = vmatpush1.msra.mxu0 %v401
  %523 = vmatprep.subr.mxu0 0.0
  %524 = vmatpush1.msra.mxu0 %v402
  %525 = vmatprep.subr.mxu0 0.0
  %526 = vmatpush1.msra.mxu0 %v403
  %527 = vmatprep.subr.mxu0 0.0
  %528 = vmatpush1.msra.mxu0 %v404
  %529 = vmatprep.subr.mxu0 0.0
  %530 = vmatpush1.msra.mxu0 %v405
  %531 = vmatprep.subr.mxu0 0.0
  %532 = vmatpush1.msra.mxu0 %v406
  %533 = vmatprep.subr.mxu0 0.0
  %534 = vmatpush1.msra.mxu0 %v407
  %535 = vmatprep.subr.mxu0 0.0
  %536 = vmatpush1.msra.mxu0 %v408
  %537 = vmatprep.subr.mxu0 0.0
  %538 = vmatpush1.msra.mxu0 %v409
  %539 = vmatprep.subr.mxu0 0.0
  %540 = vmatpush1.msra.mxu0 %v410
  %541 = vmatprep.subr.mxu0 0.0
  %542 = vmatpush1.msra.mxu0 %v411
  %543 = vmatprep.subr.mxu0 0.0
  %544 = vmatpush1.msra.mxu0 %v412
  %545 = vmatprep.subr.mxu0 0.0
  %546 = vmatpush1.msra.mxu0 %v413
  %547 = vmatprep.mubr.f32.mxu0 %v376
  %548 = vmatmul.mubr.f32.gmra.mrb[0].mxu0 %v375
  %v549 = vpop.f32.mrb[0].mxu0
  %v550 = vadd.f32 0.0, %v549
  %v551 = vpop.f32.mrb[0].mxu0
  %552 = vdwg.mxu0
  %553 = vmatprep.subr.mxu0 0.0
  %554 = vmatpush1.msra.mxu0 %v414
  %555 = vmatprep.subr.mxu0 0.0
  %556 = vmatpush1.msra.mxu0 %v415
  %557 = vmatprep.subr.mxu0 0.0
  %558 = vmatpush1.msra.mxu0 %v416
  %559 = vmatprep.subr.mxu0 0.0
  %560 = vmatpush1.msra.mxu0 %v417
  %561 = vmatprep.subr.mxu0 0.0
  %562 = vmatpush1.msra.mxu0 %v418
  %563 = vmatprep.subr.mxu0 0.0
  %564 = vmatpush1.msra.mxu0 %v419
  %565 = vmatprep.subr.mxu0 0.0
  %566 = vmatpush1.msra.mxu0 %v420
  %567 = vmatprep.subr.mxu0 0.0
  %568 = vmatpush1.msra.mxu0 %v421
  %569 = vmatprep.subr.mxu0 0.0
  %570 = vmatpush1.msra.mxu0 %v422
  %571 = vmatprep.subr.mxu0 0.0
  %572 = vmatpush1.msra.mxu0 %v423
  %573 = vmatprep.subr.mxu0 0.0
  %574 = vmatpush1.msra.mxu0 %v424
  %575 = vmatprep.subr.mxu0 0.0
  %576 = vmatpush1.msra.mxu0 %v425
  %577 = vmatprep.subr.mxu0 0.0
  %578 = vmatpush1.msra.mxu0 %v426
  %579 = vmatprep.subr.mxu0 0.0
  %580 = vmatpush1.msra.mxu0 %v427
  %581 = vmatprep.subr.mxu0 0.0
  %582 = vmatpush1.msra.mxu0 %v428
  %583 = vmatprep.subr.mxu0 0.0
  %584 = vmatpush1.msra.mxu0 %v429
  %585 = vmatprep.subr.mxu0 0.0
  %586 = vmatpush1.msra.mxu0 %v430
  %587 = vmatprep.subr.mxu0 0.0
  %588 = vmatpush1.msra.mxu0 %v431
  %589 = vmatprep.subr.mxu0 0.0
  %590 = vmatpush1.msra.mxu0 %v432
  %591 = vmatprep.subr.mxu0 0.0
  %592 = vmatpush1.msra.mxu0 %v433
  %593 = vmatprep.subr.mxu0 0.0
  %594 = vmatpush1.msra.mxu0 %v434
  %595 = vmatprep.subr.mxu0 0.0
  %596 = vmatpush1.msra.mxu0 %v435
  %597 = vmatprep.subr.mxu0 0.0
  %598 = vmatpush1.msra.mxu0 %v436
  %599 = vmatprep.subr.mxu0 0.0
  %600 = vmatpush1.msra.mxu0 %v437
  %601 = vmatprep.subr.mxu0 0.0
  %602 = vmatpush1.msra.mxu0 %v438
  %603 = vmatprep.subr.mxu0 0.0
  %604 = vmatpush1.msra.mxu0 %v439
  %605 = vmatprep.subr.mxu0 0.0
  %606 = vmatpush1.msra.mxu0 %v440
  %607 = vmatprep.subr.mxu0 0.0
  %608 = vmatpush1.msra.mxu0 %v441
  %609 = vmatprep.subr.mxu0 0.0
  %610 = vmatpush1.msra.mxu0 %v442
  %611 = vmatprep.subr.mxu0 0.0
  %612 = vmatpush1.msra.mxu0 %v443
  %613 = vmatprep.subr.mxu0 0.0
  %614 = vmatpush1.msra.mxu0 %v444
  %615 = vmatprep.subr.mxu0 0.0
  %616 = vmatpush1.msra.mxu0 %v445
  %617 = vmatprep.mubr.f32.mxu0 %v378
  %618 = vmatmul.mubr.f32.gmra.mrb[0].mxu0 %v377
  %v619 = vpop.f32.mrb[0].mxu0
  %v620 = vadd.f32 %v550, %v619
  %v621 = vpop.f32.mrb[0].mxu0
  %622 = vdwg.mxu0
  %623 = vmatprep.subr.mxu0 0.0
  %624 = vmatpush1.msra.mxu0 %v446
  %625 = vmatprep.subr.mxu0 0.0
  %626 = vmatpush1.msra.mxu0 %v447
  %627 = vmatprep.subr.mxu0 0.0
  %628 = vmatpush1.msra.mxu0 %v448
  %629 = vmatprep.subr.mxu0 0.0
  %630 = vmatpush1.msra.mxu0 %v449
  %631 = vmatprep.subr.mxu0 0.0
  %632 = vmatpush1.msra.mxu0 %v450
  %633 = vmatprep.subr.mxu0 0.0
  %634 = vmatpush1.msra.mxu0 %v451
  %635 = vmatprep.subr.mxu0 0.0
  %636 = vmatpush1.msra.mxu0 %v452
  %637 = vmatprep.subr.mxu0 0.0
  %638 = vmatpush1.msra.mxu0 %v453
  %639 = vmatprep.subr.mxu0 0.0
  %640 = vmatpush1.msra.mxu0 %v454
  %641 = vmatprep.subr.mxu0 0.0
  %642 = vmatpush1.msra.mxu0 %v455
  %643 = vmatprep.subr.mxu0 0.0
  %644 = vmatpush1.msra.mxu0 %v456
  %645 = vmatprep.subr.mxu0 0.0
  %646 = vmatpush1.msra.mxu0 %v457
  %647 = vmatprep.subr.mxu0 0.0
  %648 = vmatpush1.msra.mxu0 %v458
  %649 = vmatprep.subr.mxu0 0.0
  %650 = vmatpush1.msra.mxu0 %v459
  %651 = vmatprep.subr.mxu0 0.0
  %652 = vmatpush1.msra.mxu0 %v460
  %653 = vmatprep.subr.mxu0 0.0
  %654 = vmatpush1.msra.mxu0 %v461
  %655 = vmatprep.subr.mxu0 0.0
  %656 = vmatpush1.msra.mxu0 %v462
  %657 = vmatprep.subr.mxu0 0.0
  %658 = vmatpush1.msra.mxu0 %v463
  %659 = vmatprep.subr.mxu0 0.0
  %660 = vmatpush1.msra.mxu0 %v464
  %661 = vmatprep.subr.mxu0 0.0
  %662 = vmatpush1.msra.mxu0 %v465
  %663 = vmatprep.subr.mxu0 0.0
  %664 = vmatpush1.msra.mxu0 %v466
  %665 = vmatprep.subr.mxu0 0.0
  %666 = vmatpush1.msra.mxu0 %v467
  %667 = vmatprep.subr.mxu0 0.0
  %668 = vmatpush1.msra.mxu0 %v468
  %669 = vmatprep.subr.mxu0 0.0
  %670 = vmatpush1.msra.mxu0 %v469
  %671 = vmatprep.subr.mxu0 0.0
  %672 = vmatpush1.msra.mxu0 %v470
  %673 = vmatprep.subr.mxu0 0.0
  %674 = vmatpush1.msra.mxu0 %v471
  %675 = vmatprep.subr.mxu0 0.0
  %676 = vmatpush1.msra.mxu0 %v472
  %677 = vmatprep.subr.mxu0 0.0
  %678 = vmatpush1.msra.mxu0 %v473
  %679 = vmatprep.subr.mxu0 0.0
  %680 = vmatpush1.msra.mxu0 %v474
  %681 = vmatprep.subr.mxu0 0.0
  %682 = vmatpush1.msra.mxu0 %v475
  %683 = vmatprep.subr.mxu0 0.0
  %684 = vmatpush1.msra.mxu0 %v476
  %685 = vmatprep.subr.mxu0 0.0
  %686 = vmatpush1.msra.mxu0 %v477
  %687 = vmatprep.mubr.f32.mxu0 %v380
  %688 = vmatmul.mubr.f32.gmra.mrb[0].mxu0 %v379
  %v689 = vpop.f32.mrb[0].mxu0
  %v690 = vadd.f32 %v620, %v689
  %v691 = vpop.f32.mrb[0].mxu0
  %692 = vdwg.mxu0
  %693 = vmatprep.subr.mxu0 0.0
  %694 = vmatpush1.msra.mxu0 %v478
  %695 = vmatprep.subr.mxu0 0.0
  %696 = vmatpush1.msra.mxu0 %v479
  %697 = vmatprep.subr.mxu0 0.0
  %698 = vmatpush1.msra.mxu0 0.0
  %699 = vmatprep.subr.mxu0 0.0
  %700 = vmatpush1.msra.mxu0 0.0
  %701 = vmatprep.subr.mxu0 0.0
  %702 = vmatpush1.msra.mxu0 0.0
  %703 = vmatprep.subr.mxu0 0.0
  %704 = vmatpush1.msra.mxu0 0.0
  %705 = vmatprep.subr.mxu0 0.0
  %706 = vmatpush1.msra.mxu0 0.0
  %707 = vmatprep.subr.mxu0 0.0
  %708 = vmatpush1.msra.mxu0 0.0
  %709 = vmatprep.subr.mxu0 0.0
  %710 = vmatpush1.msra.mxu0 0.0
  %711 = vmatprep.subr.mxu0 0.0
  %712 = vmatpush1.msra.mxu0 0.0
  %713 = vmatprep.subr.mxu0 0.0
  %714 = vmatpush1.msra.mxu0 0.0
  %715 = vmatprep.subr.mxu0 0.0
  %716 = vmatpush1.msra.mxu0 0.0
  %717 = vmatprep.subr.mxu0 0.0
  %718 = vmatpush1.msra.mxu0 0.0
  %719 = vmatprep.subr.mxu0 0.0
  %720 = vmatpush1.msra.mxu0 0.0
  %721 = vmatprep.subr.mxu0 0.0
  %722 = vmatpush1.msra.mxu0 0.0
  %723 = vmatprep.subr.mxu0 0.0
  %724 = vmatpush1.msra.mxu0 0.0
  %725 = vmatprep.subr.mxu0 0.0
  %726 = vmatpush1.msra.mxu0 0.0
  %727 = vmatprep.subr.mxu0 0.0
  %728 = vmatpush1.msra.mxu0 0.0
  %729 = vmatprep.subr.mxu0 0.0
  %730 = vmatpush1.msra.mxu0 0.0
  %731 = vmatprep.subr.mxu0 0.0
  %732 = vmatpush1.msra.mxu0 0.0
  %733 = vmatprep.subr.mxu0 0.0
  %734 = vmatpush1.msra.mxu0 0.0
  %735 = vmatprep.subr.mxu0 0.0
  %736 = vmatpush1.msra.mxu0 0.0
  %737 = vmatprep.subr.mxu0 0.0
  %738 = vmatpush1.msra.mxu0 0.0
  %739 = vmatprep.subr.mxu0 0.0
  %740 = vmatpush1.msra.mxu0 0.0
  %741 = vmatprep.subr.mxu0 0.0
  %742 = vmatpush1.msra.mxu0 0.0
  %743 = vmatprep.subr.mxu0 0.0
  %744 = vmatpush1.msra.mxu0 0.0
  %745 = vmatprep.subr.mxu0 0.0
  %746 = vmatpush1.msra.mxu0 0.0
  %747 = vmatprep.subr.mxu0 0.0
  %748 = vmatpush1.msra.mxu0 0.0
  %749 = vmatprep.subr.mxu0 0.0
  %750 = vmatpush1.msra.mxu0 0.0
  %751 = vmatprep.subr.mxu0 0.0
  %752 = vmatpush1.msra.mxu0 0.0
  %753 = vmatprep.subr.mxu0 0.0
  %754 = vmatpush1.msra.mxu0 0.0
  %755 = vmatprep.subr.mxu0 0.0
  %756 = vmatpush1.msra.mxu0 0.0
  %757 = vmatprep.mubr.f32.mxu0 0.0
  %758 = vmatmul.mubr.f32.gmra.mrb[0].mxu0 %v481
  %v759 = vpop.f32.mrb[0].mxu0
  %v760 = vadd.f32 %v690, %v759
  %v761 = vpop.f32.mrb[0].mxu0
  %762 = vdwg.mxu0
  %v763 = vmul.f32 %v375, %v375
  %v764 = vmul.f32 %v376, %v376
  %v765 = vmul.f32 %v377, %v377
  %v766 = vmul.f32 %v378, %v378
  %v767 = vmul.f32 %v379, %v379
  %v768 = vmul.f32 %v380, %v380
  %v769 = vmul.f32 %v381, %v381
  %v771 = vsel %vm78, %v769, 0
  %773 = vmatprep.subr.mxu0 0.0
  %774 = vmatpush1.msra.mxu0 %v382
  %775 = vmatprep.subr.mxu0 0.0
  %776 = vmatpush1.msra.mxu0 %v383
  %777 = vmatprep.subr.mxu0 0.0
  %778 = vmatpush1.msra.mxu0 %v384
  %779 = vmatprep.subr.mxu0 0.0
  %780 = vmatpush1.msra.mxu0 %v385
  %781 = vmatprep.subr.mxu0 0.0
  %782 = vmatpush1.msra.mxu0 %v386
  %783 = vmatprep.subr.mxu0 0.0
  %784 = vmatpush1.msra.mxu0 %v387
  %785 = vmatprep.subr.mxu0 0.0
  %786 = vmatpush1.msra.mxu0 %v388
  %787 = vmatprep.subr.mxu0 0.0
  %788 = vmatpush1.msra.mxu0 %v389
  %789 = vmatprep.subr.mxu0 0.0
  %790 = vmatpush1.msra.mxu0 %v390
  %791 = vmatprep.subr.mxu0 0.0
  %792 = vmatpush1.msra.mxu0 %v391
  %793 = vmatprep.subr.mxu0 0.0
  %794 = vmatpush1.msra.mxu0 %v392
  %795 = vmatprep.subr.mxu0 0.0
  %796 = vmatpush1.msra.mxu0 %v393
  %797 = vmatprep.subr.mxu0 0.0
  %798 = vmatpush1.msra.mxu0 %v394
  %799 = vmatprep.subr.mxu0 0.0
  %800 = vmatpush1.msra.mxu0 %v395
  %801 = vmatprep.subr.mxu0 0.0
  %802 = vmatpush1.msra.mxu0 %v396
  %803 = vmatprep.subr.mxu0 0.0
  %804 = vmatpush1.msra.mxu0 %v397
  %805 = vmatprep.subr.mxu0 0.0
  %806 = vmatpush1.msra.mxu0 %v398
  %807 = vmatprep.subr.mxu0 0.0
  %808 = vmatpush1.msra.mxu0 %v399
  %809 = vmatprep.subr.mxu0 0.0
  %810 = vmatpush1.msra.mxu0 %v400
  %811 = vmatprep.subr.mxu0 0.0
  %812 = vmatpush1.msra.mxu0 %v401
  %813 = vmatprep.subr.mxu0 0.0
  %814 = vmatpush1.msra.mxu0 %v402
  %815 = vmatprep.subr.mxu0 0.0
  %816 = vmatpush1.msra.mxu0 %v403
  %817 = vmatprep.subr.mxu0 0.0
  %818 = vmatpush1.msra.mxu0 %v404
  %819 = vmatprep.subr.mxu0 0.0
  %820 = vmatpush1.msra.mxu0 %v405
  %821 = vmatprep.subr.mxu0 0.0
  %822 = vmatpush1.msra.mxu0 %v406
  %823 = vmatprep.subr.mxu0 0.0
  %824 = vmatpush1.msra.mxu0 %v407
  %825 = vmatprep.subr.mxu0 0.0
  %826 = vmatpush1.msra.mxu0 %v408
  %827 = vmatprep.subr.mxu0 0.0
  %828 = vmatpush1.msra.mxu0 %v409
  %829 = vmatprep.subr.mxu0 0.0
  %830 = vmatpush1.msra.mxu0 %v410
  %831 = vmatprep.subr.mxu0 0.0
  %832 = vmatpush1.msra.mxu0 %v411
  %833 = vmatprep.subr.mxu0 0.0
  %834 = vmatpush1.msra.mxu0 %v412
  %835 = vmatprep.subr.mxu0 0.0
  %836 = vmatpush1.msra.mxu0 %v413
  %837 = vmatprep.mubr.f32.mxu0 %v764
  %838 = vmatmul.mubr.f32.gmra.mrb[0].mxu0 %v763
  %v839 = vpop.f32.mrb[0].mxu0
  %v840 = vadd.f32 0.0, %v839
  %v841 = vpop.f32.mrb[0].mxu0
  %842 = vdwg.mxu0
  %843 = vmatprep.subr.mxu0 0.0
  %844 = vmatpush1.msra.mxu0 %v414
  %845 = vmatprep.subr.mxu0 0.0
  %846 = vmatpush1.msra.mxu0 %v415
  %847 = vmatprep.subr.mxu0 0.0
  %848 = vmatpush1.msra.mxu0 %v416
  %849 = vmatprep.subr.mxu0 0.0
  %850 = vmatpush1.msra.mxu0 %v417
  %851 = vmatprep.subr.mxu0 0.0
  %852 = vmatpush1.msra.mxu0 %v418
  %853 = vmatprep.subr.mxu0 0.0
  %854 = vmatpush1.msra.mxu0 %v419
  %855 = vmatprep.subr.mxu0 0.0
  %856 = vmatpush1.msra.mxu0 %v420
  %857 = vmatprep.subr.mxu0 0.0
  %858 = vmatpush1.msra.mxu0 %v421
  %859 = vmatprep.subr.mxu0 0.0
  %860 = vmatpush1.msra.mxu0 %v422
  %861 = vmatprep.subr.mxu0 0.0
  %862 = vmatpush1.msra.mxu0 %v423
  %863 = vmatprep.subr.mxu0 0.0
  %864 = vmatpush1.msra.mxu0 %v424
  %865 = vmatprep.subr.mxu0 0.0
  %866 = vmatpush1.msra.mxu0 %v425
  %867 = vmatprep.subr.mxu0 0.0
  %868 = vmatpush1.msra.mxu0 %v426
  %869 = vmatprep.subr.mxu0 0.0
  %870 = vmatpush1.msra.mxu0 %v427
  %871 = vmatprep.subr.mxu0 0.0
  %872 = vmatpush1.msra.mxu0 %v428
  %873 = vmatprep.subr.mxu0 0.0
  %874 = vmatpush1.msra.mxu0 %v429
  %875 = vmatprep.subr.mxu0 0.0
  %876 = vmatpush1.msra.mxu0 %v430
  %877 = vmatprep.subr.mxu0 0.0
  %878 = vmatpush1.msra.mxu0 %v431
  %879 = vmatprep.subr.mxu0 0.0
  %880 = vmatpush1.msra.mxu0 %v432
  %881 = vmatprep.subr.mxu0 0.0
  %882 = vmatpush1.msra.mxu0 %v433
  %883 = vmatprep.subr.mxu0 0.0
  %884 = vmatpush1.msra.mxu0 %v434
  %885 = vmatprep.subr.mxu0 0.0
  %886 = vmatpush1.msra.mxu0 %v435
  %887 = vmatprep.subr.mxu0 0.0
  %888 = vmatpush1.msra.mxu0 %v436
  %889 = vmatprep.subr.mxu0 0.0
  %890 = vmatpush1.msra.mxu0 %v437
  %891 = vmatprep.subr.mxu0 0.0
  %892 = vmatpush1.msra.mxu0 %v438
  %893 = vmatprep.subr.mxu0 0.0
  %894 = vmatpush1.msra.mxu0 %v439
  %895 = vmatprep.subr.mxu0 0.0
  %896 = vmatpush1.msra.mxu0 %v440
  %897 = vmatprep.subr.mxu0 0.0
  %898 = vmatpush1.msra.mxu0 %v441
  %899 = vmatprep.subr.mxu0 0.0
  %900 = vmatpush1.msra.mxu0 %v442
  %901 = vmatprep.subr.mxu0 0.0
  %902 = vmatpush1.msra.mxu0 %v443
  %903 = vmatprep.subr.mxu0 0.0
  %904 = vmatpush1.msra.mxu0 %v444
  %905 = vmatprep.subr.mxu0 0.0
  %906 = vmatpush1.msra.mxu0 %v445
  %907 = vmatprep.mubr.f32.mxu0 %v766
  %908 = vmatmul.mubr.f32.gmra.mrb[0].mxu0 %v765
  %v909 = vpop.f32.mrb[0].mxu0
  %v910 = vadd.f32 %v840, %v909
  %v911 = vpop.f32.mrb[0].mxu0
  %912 = vdwg.mxu0
  %913 = vmatprep.subr.mxu0 0.0
  %914 = vmatpush1.msra.mxu0 %v446
  %915 = vmatprep.subr.mxu0 0.0
  %916 = vmatpush1.msra.mxu0 %v447
  %917 = vmatprep.subr.mxu0 0.0
  %918 = vmatpush1.msra.mxu0 %v448
  %919 = vmatprep.subr.mxu0 0.0
  %920 = vmatpush1.msra.mxu0 %v449
  %921 = vmatprep.subr.mxu0 0.0
  %922 = vmatpush1.msra.mxu0 %v450
  %923 = vmatprep.subr.mxu0 0.0
  %924 = vmatpush1.msra.mxu0 %v451
  %925 = vmatprep.subr.mxu0 0.0
  %926 = vmatpush1.msra.mxu0 %v452
  %927 = vmatprep.subr.mxu0 0.0
  %928 = vmatpush1.msra.mxu0 %v453
  %929 = vmatprep.subr.mxu0 0.0
  %930 = vmatpush1.msra.mxu0 %v454
  %931 = vmatprep.subr.mxu0 0.0
  %932 = vmatpush1.msra.mxu0 %v455
  %933 = vmatprep.subr.mxu0 0.0
  %934 = vmatpush1.msra.mxu0 %v456
  %935 = vmatprep.subr.mxu0 0.0
  %936 = vmatpush1.msra.mxu0 %v457
  %937 = vmatprep.subr.mxu0 0.0
  %938 = vmatpush1.msra.mxu0 %v458
  %939 = vmatprep.subr.mxu0 0.0
  %940 = vmatpush1.msra.mxu0 %v459
  %941 = vmatprep.subr.mxu0 0.0
  %942 = vmatpush1.msra.mxu0 %v460
  %943 = vmatprep.subr.mxu0 0.0
  %944 = vmatpush1.msra.mxu0 %v461
  %945 = vmatprep.subr.mxu0 0.0
  %946 = vmatpush1.msra.mxu0 %v462
  %947 = vmatprep.subr.mxu0 0.0
  %948 = vmatpush1.msra.mxu0 %v463
  %949 = vmatprep.subr.mxu0 0.0
  %950 = vmatpush1.msra.mxu0 %v464
  %951 = vmatprep.subr.mxu0 0.0
  %952 = vmatpush1.msra.mxu0 %v465
  %953 = vmatprep.subr.mxu0 0.0
  %954 = vmatpush1.msra.mxu0 %v466
  %955 = vmatprep.subr.mxu0 0.0
  %956 = vmatpush1.msra.mxu0 %v467
  %957 = vmatprep.subr.mxu0 0.0
  %958 = vmatpush1.msra.mxu0 %v468
  %959 = vmatprep.subr.mxu0 0.0
  %960 = vmatpush1.msra.mxu0 %v469
  %961 = vmatprep.subr.mxu0 0.0
  %962 = vmatpush1.msra.mxu0 %v470
  %963 = vmatprep.subr.mxu0 0.0
  %964 = vmatpush1.msra.mxu0 %v471
  %965 = vmatprep.subr.mxu0 0.0
  %966 = vmatpush1.msra.mxu0 %v472
  %967 = vmatprep.subr.mxu0 0.0
  %968 = vmatpush1.msra.mxu0 %v473
  %969 = vmatprep.subr.mxu0 0.0
  %970 = vmatpush1.msra.mxu0 %v474
  %971 = vmatprep.subr.mxu0 0.0
  %972 = vmatpush1.msra.mxu0 %v475
  %973 = vmatprep.subr.mxu0 0.0
  %974 = vmatpush1.msra.mxu0 %v476
  %975 = vmatprep.subr.mxu0 0.0
  %976 = vmatpush1.msra.mxu0 %v477
  %977 = vmatprep.mubr.f32.mxu0 %v768
  %978 = vmatmul.mubr.f32.gmra.mrb[0].mxu0 %v767
  %v979 = vpop.f32.mrb[0].mxu0
  %v980 = vadd.f32 %v910, %v979
  %v981 = vpop.f32.mrb[0].mxu0
  %982 = vdwg.mxu0
  %983 = vmatprep.subr.mxu0 0.0
  %984 = vmatpush1.msra.mxu0 %v478
  %985 = vmatprep.subr.mxu0 0.0
  %986 = vmatpush1.msra.mxu0 %v479
  %987 = vmatprep.subr.mxu0 0.0
  %988 = vmatpush1.msra.mxu0 0.0
  %989 = vmatprep.subr.mxu0 0.0
  %990 = vmatpush1.msra.mxu0 0.0
  %991 = vmatprep.subr.mxu0 0.0
  %992 = vmatpush1.msra.mxu0 0.0
  %993 = vmatprep.subr.mxu0 0.0
  %994 = vmatpush1.msra.mxu0 0.0
  %995 = vmatprep.subr.mxu0 0.0
  %996 = vmatpush1.msra.mxu0 0.0
  %997 = vmatprep.subr.mxu0 0.0
  %998 = vmatpush1.msra.mxu0 0.0
  %999 = vmatprep.subr.mxu0 0.0
  %1000 = vmatpush1.msra.mxu0 0.0
  %1001 = vmatprep.subr.mxu0 0.0
  %1002 = vmatpush1.msra.mxu0 0.0
  %1003 = vmatprep.subr.mxu0 0.0
  %1004 = vmatpush1.msra.mxu0 0.0
  %1005 = vmatprep.subr.mxu0 0.0
  %1006 = vmatpush1.msra.mxu0 0.0
  %1007 = vmatprep.subr.mxu0 0.0
  %1008 = vmatpush1.msra.mxu0 0.0
  %1009 = vmatprep.subr.mxu0 0.0
  %1010 = vmatpush1.msra.mxu0 0.0
  %1011 = vmatprep.subr.mxu0 0.0
  %1012 = vmatpush1.msra.mxu0 0.0
  %1013 = vmatprep.subr.mxu0 0.0
  %1014 = vmatpush1.msra.mxu0 0.0
  %1015 = vmatprep.subr.mxu0 0.0
  %1016 = vmatpush1.msra.mxu0 0.0
  %1017 = vmatprep.subr.mxu0 0.0
  %1018 = vmatpush1.msra.mxu0 0.0
  %1019 = vmatprep.subr.mxu0 0.0
  %1020 = vmatpush1.msra.mxu0 0.0
  %1021 = vmatprep.subr.mxu0 0.0
  %1022 = vmatpush1.msra.mxu0 0.0
  %1023 = vmatprep.subr.mxu0 0.0
  %1024 = vmatpush1.msra.mxu0 0.0
  %1025 = vmatprep.subr.mxu0 0.0
  %1026 = vmatpush1.msra.mxu0 0.0
  %1027 = vmatprep.subr.mxu0 0.0
  %1028 = vmatpush1.msra.mxu0 0.0
  %1029 = vmatprep.subr.mxu0 0.0
  %1030 = vmatpush1.msra.mxu0 0.0
  %1031 = vmatprep.subr.mxu0 0.0
  %1032 = vmatpush1.msra.mxu0 0.0
  %1033 = vmatprep.subr.mxu0 0.0
  %1034 = vmatpush1.msra.mxu0 0.0
  %1035 = vmatprep.subr.mxu0 0.0
  %1036 = vmatpush1.msra.mxu0 0.0
  %1037 = vmatprep.subr.mxu0 0.0
  %1038 = vmatpush1.msra.mxu0 0.0
  %1039 = vmatprep.subr.mxu0 0.0
  %1040 = vmatpush1.msra.mxu0 0.0
  %1041 = vmatprep.subr.mxu0 0.0
  %1042 = vmatpush1.msra.mxu0 0.0
  %1043 = vmatprep.subr.mxu0 0.0
  %1044 = vmatpush1.msra.mxu0 0.0
  %1045 = vmatprep.subr.mxu0 0.0
  %1046 = vmatpush1.msra.mxu0 0.0
  %1047 = vmatprep.mubr.f32.mxu0 0.0
  %1048 = vmatmul.mubr.f32.gmra.mrb[0].mxu0 %v771
  %v1049 = vpop.f32.mrb[0].mxu0
  %v1050 = vadd.f32 %v980, %v1049
  %v1051 = vpop.f32.mrb[0].mxu0
  %1052 = vdwg.mxu0
  %v1053 = vsel %vm78, %v760, 0.0
  %v1054 = vrot.slane %v1053, 4
  %v1055 = vadd.f32 %v1053, %v1054
  %v1056 = vrot.slane %v1055, 2
  %v1057 = vadd.f32 %v1055, %v1056
  %v1058 = vrot.slane %v1057, 1
  %v1059 = vadd.f32 %v1057, %v1058
  %v1060 = vrcp.pop 98.0
  %v1061 = vmul.f32 %v1059, %v1060
  %v1062 = vsel %vm78, %v1050, 0.0
  %v1063 = vrot.slane %v1062, 4
  %v1064 = vadd.f32 %v1062, %v1063
  %v1065 = vrot.slane %v1064, 2
  %v1066 = vadd.f32 %v1064, %v1065
  %v1067 = vrot.slane %v1066, 1
  %v1068 = vadd.f32 %v1066, %v1067
  %v1069 = vmul.f32 %v1068, %v1060
  %v1070 = vmul.f32 %v1061, %v1061
  %v1071 = vsub.f32 %v1069, %v1070
  %v1072 = vmax.f32 %v1071, 0.0
  %v1073 = vld [vmem:[%s5] sm:$0x1]
  %v1074 = vadd.f32 %v1072, 1e-05
  %v1075 = vrsqrt.pop %v1074
  %v1076 = vmul.f32 %v1073, %v1075
  %v1077 = vld [vmem:[%s6] sm:$0x1]
  %v1078 = vmul.f32 %v1061, %v1076
  %v1079 = vsub.f32 %v1077, %v1078
  %v1081 = vlaneseq
  %v1082 = vshrl.u32 %v1081, 7
  %v1083 = vsub.s32 0, %v1082
  %v1084 = vrot.slane %v1076, %v1083
  %v1085 = vld [vmem:[%s4] sm:$0xff]
  %v1086 = vld [vmem:[%s4 + $0x8] sm:$0xff]
  %v1087 = vld [vmem:[%s4 + $0x10] sm:$0xff]
  %v1088 = vld [vmem:[%s4 + $0x18] sm:$0xff]
  %v1089 = vld [vmem:[%s4 + $0x20] sm:$0xff]
  %v1090 = vld [vmem:[%s4 + $0x28] sm:$0xff]
  %v1091 = vld [vmem:[%s4 + $0x30] sm:$0xff]
  %v1092 = vld [vmem:[%s4 + $0x38] sm:$0xff]
  %v1093 = vld [vmem:[%s4 + $0x40] sm:$0xff]
  %v1094 = vld [vmem:[%s4 + $0x48] sm:$0xff]
  %v1095 = vld [vmem:[%s4 + $0x50] sm:$0xff]
  %v1096 = vld [vmem:[%s4 + $0x58] sm:$0xff]
  %v1097 = vld [vmem:[%s4 + $0x60] sm:$0xff]
  %v1098 = vld [vmem:[%s4 + $0x68] sm:$0xff]
  %v1099 = vsel %vm78, %v1084, 0
  %1101 = vmatprep.subr.mxu0 %v1086
  %1102 = vmatpush1.msra.mxu0 %v1085
  %1103 = vmatprep.subr.mxu0 %v1093
  %1104 = vmatpush1.msra.mxu0 %v1092
  %1105 = vmatprep.subr.mxu0 0.0
  %1106 = vmatpush1.msra.mxu0 0.0
  %1107 = vmatprep.subr.mxu0 0.0
  %1108 = vmatpush1.msra.mxu0 0.0
  %1109 = vmatprep.subr.mxu0 0.0
  %1110 = vmatpush1.msra.mxu0 0.0
  %1111 = vmatprep.subr.mxu0 0.0
  %1112 = vmatpush1.msra.mxu0 0.0
  %1113 = vmatprep.subr.mxu0 0.0
  %1114 = vmatpush1.msra.mxu0 0.0
  %1115 = vmatprep.subr.mxu0 0.0
  %1116 = vmatpush1.msra.mxu0 0.0
  %1117 = vmatprep.subr.mxu0 0.0
  %1118 = vmatpush1.msra.mxu0 0.0
  %1119 = vmatprep.subr.mxu0 0.0
  %1120 = vmatpush1.msra.mxu0 0.0
  %1121 = vmatprep.subr.mxu0 0.0
  %1122 = vmatpush1.msra.mxu0 0.0
  %1123 = vmatprep.subr.mxu0 0.0
  %1124 = vmatpush1.msra.mxu0 0.0
  %1125 = vmatprep.subr.mxu0 0.0
  %1126 = vmatpush1.msra.mxu0 0.0
  %1127 = vmatprep.subr.mxu0 0.0
  %1128 = vmatpush1.msra.mxu0 0.0
  %1129 = vmatprep.subr.mxu0 0.0
  %1130 = vmatpush1.msra.mxu0 0.0
  %1131 = vmatprep.subr.mxu0 0.0
  %1132 = vmatpush1.msra.mxu0 0.0
  %1133 = vmatprep.subr.mxu0 0.0
  %1134 = vmatpush1.msra.mxu0 0.0
  %1135 = vmatprep.subr.mxu0 0.0
  %1136 = vmatpush1.msra.mxu0 0.0
  %1137 = vmatprep.subr.mxu0 0.0
  %1138 = vmatpush1.msra.mxu0 0.0
  %1139 = vmatprep.subr.mxu0 0.0
  %1140 = vmatpush1.msra.mxu0 0.0
  %1141 = vmatprep.subr.mxu0 0.0
  %1142 = vmatpush1.msra.mxu0 0.0
  %1143 = vmatprep.subr.mxu0 0.0
  %1144 = vmatpush1.msra.mxu0 0.0
  %1145 = vmatprep.subr.mxu0 0.0
  %1146 = vmatpush1.msra.mxu0 0.0
  %1147 = vmatprep.subr.mxu0 0.0
  %1148 = vmatpush1.msra.mxu0 0.0
  %1149 = vmatprep.subr.mxu0 0.0
  %1150 = vmatpush1.msra.mxu0 0.0
  %1151 = vmatprep.subr.mxu0 0.0
  %1152 = vmatpush1.msra.mxu0 0.0
  %1153 = vmatprep.subr.mxu0 0.0
  %1154 = vmatpush1.msra.mxu0 0.0
  %1155 = vmatprep.subr.mxu0 0.0
  %1156 = vmatpush1.msra.mxu0 0.0
  %1157 = vmatprep.subr.mxu0 0.0
  %1158 = vmatpush1.msra.mxu0 0.0
  %1159 = vmatprep.subr.mxu0 0.0
  %1160 = vmatpush1.msra.mxu0 0.0
  %1161 = vmatprep.subr.mxu0 0.0
  %1162 = vmatpush1.msra.mxu0 0.0
  %1163 = vmatprep.subr.mxu0 0.0
  %1164 = vmatpush1.msra.mxu0 0.0
  %1165 = vmatprep.mubr.f32.mxu0 0.0
  %1166 = vmatmul.mubr.f32.gmra.mrb[0].mxu0 %v1099
  %v1167 = vpop.f32.mrb[0].mxu0
  %v1168 = vadd.f32 0.0, %v1167
  %v1169 = vpop.f32.mrb[0].mxu0
  %v1170 = vadd.f32 0.0, %v1169
  %1171 = vdwg.mxu0
  %1172 = vmatprep.subr.mxu0 %v1088
  %1173 = vmatpush1.msra.mxu0 %v1087
  %1174 = vmatprep.subr.mxu0 %v1095
  %1175 = vmatpush1.msra.mxu0 %v1094
  %1176 = vmatprep.subr.mxu0 0.0
  %1177 = vmatpush1.msra.mxu0 0.0
  %1178 = vmatprep.subr.mxu0 0.0
  %1179 = vmatpush1.msra.mxu0 0.0
  %1180 = vmatprep.subr.mxu0 0.0
  %1181 = vmatpush1.msra.mxu0 0.0
  %1182 = vmatprep.subr.mxu0 0.0
  %1183 = vmatpush1.msra.mxu0 0.0
  %1184 = vmatprep.subr.mxu0 0.0
  %1185 = vmatpush1.msra.mxu0 0.0
  %1186 = vmatprep.subr.mxu0 0.0
  %1187 = vmatpush1.msra.mxu0 0.0
  %1188 = vmatprep.subr.mxu0 0.0
  %1189 = vmatpush1.msra.mxu0 0.0
  %1190 = vmatprep.subr.mxu0 0.0
  %1191 = vmatpush1.msra.mxu0 0.0
  %1192 = vmatprep.subr.mxu0 0.0
  %1193 = vmatpush1.msra.mxu0 0.0
  %1194 = vmatprep.subr.mxu0 0.0
  %1195 = vmatpush1.msra.mxu0 0.0
  %1196 = vmatprep.subr.mxu0 0.0
  %1197 = vmatpush1.msra.mxu0 0.0
  %1198 = vmatprep.subr.mxu0 0.0
  %1199 = vmatpush1.msra.mxu0 0.0
  %1200 = vmatprep.subr.mxu0 0.0
  %1201 = vmatpush1.msra.mxu0 0.0
  %1202 = vmatprep.subr.mxu0 0.0
  %1203 = vmatpush1.msra.mxu0 0.0
  %1204 = vmatprep.subr.mxu0 0.0
  %1205 = vmatpush1.msra.mxu0 0.0
  %1206 = vmatprep.subr.mxu0 0.0
  %1207 = vmatpush1.msra.mxu0 0.0
  %1208 = vmatprep.subr.mxu0 0.0
  %1209 = vmatpush1.msra.mxu0 0.0
  %1210 = vmatprep.subr.mxu0 0.0
  %1211 = vmatpush1.msra.mxu0 0.0
  %1212 = vmatprep.subr.mxu0 0.0
  %1213 = vmatpush1.msra.mxu0 0.0
  %1214 = vmatprep.subr.mxu0 0.0
  %1215 = vmatpush1.msra.mxu0 0.0
  %1216 = vmatprep.subr.mxu0 0.0
  %1217 = vmatpush1.msra.mxu0 0.0
  %1218 = vmatprep.subr.mxu0 0.0
  %1219 = vmatpush1.msra.mxu0 0.0
  %1220 = vmatprep.subr.mxu0 0.0
  %1221 = vmatpush1.msra.mxu0 0.0
  %1222 = vmatprep.subr.mxu0 0.0
  %1223 = vmatpush1.msra.mxu0 0.0
  %1224 = vmatprep.subr.mxu0 0.0
  %1225 = vmatpush1.msra.mxu0 0.0
  %1226 = vmatprep.subr.mxu0 0.0
  %1227 = vmatpush1.msra.mxu0 0.0
  %1228 = vmatprep.subr.mxu0 0.0
  %1229 = vmatpush1.msra.mxu0 0.0
  %1230 = vmatprep.subr.mxu0 0.0
  %1231 = vmatpush1.msra.mxu0 0.0
  %1232 = vmatprep.subr.mxu0 0.0
  %1233 = vmatpush1.msra.mxu0 0.0
  %1234 = vmatprep.subr.mxu0 0.0
  %1235 = vmatpush1.msra.mxu0 0.0
  %1236 = vmatprep.mubr.f32.mxu0 0.0
  %1237 = vmatmul.mubr.f32.gmra.mrb[0].mxu0 %v1099
  %v1238 = vpop.f32.mrb[0].mxu0
  %v1239 = vadd.f32 0.0, %v1238
  %v1240 = vpop.f32.mrb[0].mxu0
  %v1241 = vadd.f32 0.0, %v1240
  %1242 = vdwg.mxu0
  %1243 = vmatprep.subr.mxu0 %v1090
  %1244 = vmatpush1.msra.mxu0 %v1089
  %1245 = vmatprep.subr.mxu0 %v1097
  %1246 = vmatpush1.msra.mxu0 %v1096
  %1247 = vmatprep.subr.mxu0 0.0
  %1248 = vmatpush1.msra.mxu0 0.0
  %1249 = vmatprep.subr.mxu0 0.0
  %1250 = vmatpush1.msra.mxu0 0.0
  %1251 = vmatprep.subr.mxu0 0.0
  %1252 = vmatpush1.msra.mxu0 0.0
  %1253 = vmatprep.subr.mxu0 0.0
  %1254 = vmatpush1.msra.mxu0 0.0
  %1255 = vmatprep.subr.mxu0 0.0
  %1256 = vmatpush1.msra.mxu0 0.0
  %1257 = vmatprep.subr.mxu0 0.0
  %1258 = vmatpush1.msra.mxu0 0.0
  %1259 = vmatprep.subr.mxu0 0.0
  %1260 = vmatpush1.msra.mxu0 0.0
  %1261 = vmatprep.subr.mxu0 0.0
  %1262 = vmatpush1.msra.mxu0 0.0
  %1263 = vmatprep.subr.mxu0 0.0
  %1264 = vmatpush1.msra.mxu0 0.0
  %1265 = vmatprep.subr.mxu0 0.0
  %1266 = vmatpush1.msra.mxu0 0.0
  %1267 = vmatprep.subr.mxu0 0.0
  %1268 = vmatpush1.msra.mxu0 0.0
  %1269 = vmatprep.subr.mxu0 0.0
  %1270 = vmatpush1.msra.mxu0 0.0
  %1271 = vmatprep.subr.mxu0 0.0
  %1272 = vmatpush1.msra.mxu0 0.0
  %1273 = vmatprep.subr.mxu0 0.0
  %1274 = vmatpush1.msra.mxu0 0.0
  %1275 = vmatprep.subr.mxu0 0.0
  %1276 = vmatpush1.msra.mxu0 0.0
  %1277 = vmatprep.subr.mxu0 0.0
  %1278 = vmatpush1.msra.mxu0 0.0
  %1279 = vmatprep.subr.mxu0 0.0
  %1280 = vmatpush1.msra.mxu0 0.0
  %1281 = vmatprep.subr.mxu0 0.0
  %1282 = vmatpush1.msra.mxu0 0.0
  %1283 = vmatprep.subr.mxu0 0.0
  %1284 = vmatpush1.msra.mxu0 0.0
  %1285 = vmatprep.subr.mxu0 0.0
  %1286 = vmatpush1.msra.mxu0 0.0
  %1287 = vmatprep.subr.mxu0 0.0
  %1288 = vmatpush1.msra.mxu0 0.0
  %1289 = vmatprep.subr.mxu0 0.0
  %1290 = vmatpush1.msra.mxu0 0.0
  %1291 = vmatprep.subr.mxu0 0.0
  %1292 = vmatpush1.msra.mxu0 0.0
  %1293 = vmatprep.subr.mxu0 0.0
  %1294 = vmatpush1.msra.mxu0 0.0
  %1295 = vmatprep.subr.mxu0 0.0
  %1296 = vmatpush1.msra.mxu0 0.0
  %1297 = vmatprep.subr.mxu0 0.0
  %1298 = vmatpush1.msra.mxu0 0.0
  %1299 = vmatprep.subr.mxu0 0.0
  %1300 = vmatpush1.msra.mxu0 0.0
  %1301 = vmatprep.subr.mxu0 0.0
  %1302 = vmatpush1.msra.mxu0 0.0
  %1303 = vmatprep.subr.mxu0 0.0
  %1304 = vmatpush1.msra.mxu0 0.0
  %1305 = vmatprep.subr.mxu0 0.0
  %1306 = vmatpush1.msra.mxu0 0.0
  %1307 = vmatprep.mubr.f32.mxu0 0.0
  %1308 = vmatmul.mubr.f32.gmra.mrb[0].mxu0 %v1099
  %v1309 = vpop.f32.mrb[0].mxu0
  %v1310 = vadd.f32 0.0, %v1309
  %v1311 = vpop.f32.mrb[0].mxu0
  %v1312 = vadd.f32 0.0, %v1311
  %1313 = vdwg.mxu0
  %1314 = vmatprep.subr.mxu0 0.0
  %1315 = vmatpush1.msra.mxu0 %v1091
  %1316 = vmatprep.subr.mxu0 0.0
  %1317 = vmatpush1.msra.mxu0 %v1098
  %1318 = vmatprep.subr.mxu0 0.0
  %1319 = vmatpush1.msra.mxu0 0.0
  %1320 = vmatprep.subr.mxu0 0.0
  %1321 = vmatpush1.msra.mxu0 0.0
  %1322 = vmatprep.subr.mxu0 0.0
  %1323 = vmatpush1.msra.mxu0 0.0
  %1324 = vmatprep.subr.mxu0 0.0
  %1325 = vmatpush1.msra.mxu0 0.0
  %1326 = vmatprep.subr.mxu0 0.0
  %1327 = vmatpush1.msra.mxu0 0.0
  %1328 = vmatprep.subr.mxu0 0.0
  %1329 = vmatpush1.msra.mxu0 0.0
  %1330 = vmatprep.subr.mxu0 0.0
  %1331 = vmatpush1.msra.mxu0 0.0
  %1332 = vmatprep.subr.mxu0 0.0
  %1333 = vmatpush1.msra.mxu0 0.0
  %1334 = vmatprep.subr.mxu0 0.0
  %1335 = vmatpush1.msra.mxu0 0.0
  %1336 = vmatprep.subr.mxu0 0.0
  %1337 = vmatpush1.msra.mxu0 0.0
  %1338 = vmatprep.subr.mxu0 0.0
  %1339 = vmatpush1.msra.mxu0 0.0
  %1340 = vmatprep.subr.mxu0 0.0
  %1341 = vmatpush1.msra.mxu0 0.0
  %1342 = vmatprep.subr.mxu0 0.0
  %1343 = vmatpush1.msra.mxu0 0.0
  %1344 = vmatprep.subr.mxu0 0.0
  %1345 = vmatpush1.msra.mxu0 0.0
  %1346 = vmatprep.subr.mxu0 0.0
  %1347 = vmatpush1.msra.mxu0 0.0
  %1348 = vmatprep.subr.mxu0 0.0
  %1349 = vmatpush1.msra.mxu0 0.0
  %1350 = vmatprep.subr.mxu0 0.0
  %1351 = vmatpush1.msra.mxu0 0.0
  %1352 = vmatprep.subr.mxu0 0.0
  %1353 = vmatpush1.msra.mxu0 0.0
  %1354 = vmatprep.subr.mxu0 0.0
  %1355 = vmatpush1.msra.mxu0 0.0
  %1356 = vmatprep.subr.mxu0 0.0
  %1357 = vmatpush1.msra.mxu0 0.0
  %1358 = vmatprep.subr.mxu0 0.0
  %1359 = vmatpush1.msra.mxu0 0.0
  %1360 = vmatprep.subr.mxu0 0.0
  %1361 = vmatpush1.msra.mxu0 0.0
  %1362 = vmatprep.subr.mxu0 0.0
  %1363 = vmatpush1.msra.mxu0 0.0
  %1364 = vmatprep.subr.mxu0 0.0
  %1365 = vmatpush1.msra.mxu0 0.0
  %1366 = vmatprep.subr.mxu0 0.0
  %1367 = vmatpush1.msra.mxu0 0.0
  %1368 = vmatprep.subr.mxu0 0.0
  %1369 = vmatpush1.msra.mxu0 0.0
  %1370 = vmatprep.subr.mxu0 0.0
  %1371 = vmatpush1.msra.mxu0 0.0
  %1372 = vmatprep.subr.mxu0 0.0
  %1373 = vmatpush1.msra.mxu0 0.0
  %1374 = vmatprep.subr.mxu0 0.0
  %1375 = vmatpush1.msra.mxu0 0.0
  %1376 = vmatprep.subr.mxu0 0.0
  %1377 = vmatpush1.msra.mxu0 0.0
  %1378 = vmatprep.mubr.f32.mxu0 0.0
  %1379 = vmatmul.mubr.f32.gmra.mrb[0].mxu0 %v1099
  %v1380 = vpop.f32.mrb[0].mxu0
  %v1381 = vadd.f32 0.0, %v1380
  %v1382 = vpop.f32.mrb[0].mxu0
  %1383 = vdwg.mxu0
  %v1385 = vlaneseq
  %v1386 = vshrl.u32 %v1385, 7
  %v1387 = vsub.s32 0, %v1386
  %v1388 = vrot.slane %v1079, %v1387
  %v1389 = vsel %vm78, %v1388, 0
  %1391 = vmatprep.subr.mxu0 %v1086
  %1392 = vmatpush1.msra.mxu0 %v1085
  %1393 = vmatprep.subr.mxu0 %v1093
  %1394 = vmatpush1.msra.mxu0 %v1092
  %1395 = vmatprep.subr.mxu0 0.0
  %1396 = vmatpush1.msra.mxu0 0.0
  %1397 = vmatprep.subr.mxu0 0.0
  %1398 = vmatpush1.msra.mxu0 0.0
  %1399 = vmatprep.subr.mxu0 0.0
  %1400 = vmatpush1.msra.mxu0 0.0
  %1401 = vmatprep.subr.mxu0 0.0
  %1402 = vmatpush1.msra.mxu0 0.0
  %1403 = vmatprep.subr.mxu0 0.0
  %1404 = vmatpush1.msra.mxu0 0.0
  %1405 = vmatprep.subr.mxu0 0.0
  %1406 = vmatpush1.msra.mxu0 0.0
  %1407 = vmatprep.subr.mxu0 0.0
  %1408 = vmatpush1.msra.mxu0 0.0
  %1409 = vmatprep.subr.mxu0 0.0
  %1410 = vmatpush1.msra.mxu0 0.0
  %1411 = vmatprep.subr.mxu0 0.0
  %1412 = vmatpush1.msra.mxu0 0.0
  %1413 = vmatprep.subr.mxu0 0.0
  %1414 = vmatpush1.msra.mxu0 0.0
  %1415 = vmatprep.subr.mxu0 0.0
  %1416 = vmatpush1.msra.mxu0 0.0
  %1417 = vmatprep.subr.mxu0 0.0
  %1418 = vmatpush1.msra.mxu0 0.0
  %1419 = vmatprep.subr.mxu0 0.0
  %1420 = vmatpush1.msra.mxu0 0.0
  %1421 = vmatprep.subr.mxu0 0.0
  %1422 = vmatpush1.msra.mxu0 0.0
  %1423 = vmatprep.subr.mxu0 0.0
  %1424 = vmatpush1.msra.mxu0 0.0
  %1425 = vmatprep.subr.mxu0 0.0
  %1426 = vmatpush1.msra.mxu0 0.0
  %1427 = vmatprep.subr.mxu0 0.0
  %1428 = vmatpush1.msra.mxu0 0.0
  %1429 = vmatprep.subr.mxu0 0.0
  %1430 = vmatpush1.msra.mxu0 0.0
  %1431 = vmatprep.subr.mxu0 0.0
  %1432 = vmatpush1.msra.mxu0 0.0
  %1433 = vmatprep.subr.mxu0 0.0
  %1434 = vmatpush1.msra.mxu0 0.0
  %1435 = vmatprep.subr.mxu0 0.0
  %1436 = vmatpush1.msra.mxu0 0.0
  %1437 = vmatprep.subr.mxu0 0.0
  %1438 = vmatpush1.msra.mxu0 0.0
  %1439 = vmatprep.subr.mxu0 0.0
  %1440 = vmatpush1.msra.mxu0 0.0
  %1441 = vmatprep.subr.mxu0 0.0
  %1442 = vmatpush1.msra.mxu0 0.0
  %1443 = vmatprep.subr.mxu0 0.0
  %1444 = vmatpush1.msra.mxu0 0.0
  %1445 = vmatprep.subr.mxu0 0.0
  %1446 = vmatpush1.msra.mxu0 0.0
  %1447 = vmatprep.subr.mxu0 0.0
  %1448 = vmatpush1.msra.mxu0 0.0
  %1449 = vmatprep.subr.mxu0 0.0
  %1450 = vmatpush1.msra.mxu0 0.0
  %1451 = vmatprep.subr.mxu0 0.0
  %1452 = vmatpush1.msra.mxu0 0.0
  %1453 = vmatprep.subr.mxu0 0.0
  %1454 = vmatpush1.msra.mxu0 0.0
  %1455 = vmatprep.mubr.f32.mxu0 0.0
  %1456 = vmatmul.mubr.f32.gmra.mrb[0].mxu0 %v1389
  %v1457 = vpop.f32.mrb[0].mxu0
  %v1458 = vadd.f32 0.0, %v1457
  %v1459 = vpop.f32.mrb[0].mxu0
  %v1460 = vadd.f32 0.0, %v1459
  %1461 = vdwg.mxu0
  %1462 = vmatprep.subr.mxu0 %v1088
  %1463 = vmatpush1.msra.mxu0 %v1087
  %1464 = vmatprep.subr.mxu0 %v1095
  %1465 = vmatpush1.msra.mxu0 %v1094
  %1466 = vmatprep.subr.mxu0 0.0
  %1467 = vmatpush1.msra.mxu0 0.0
  %1468 = vmatprep.subr.mxu0 0.0
  %1469 = vmatpush1.msra.mxu0 0.0
  %1470 = vmatprep.subr.mxu0 0.0
  %1471 = vmatpush1.msra.mxu0 0.0
  %1472 = vmatprep.subr.mxu0 0.0
  %1473 = vmatpush1.msra.mxu0 0.0
  %1474 = vmatprep.subr.mxu0 0.0
  %1475 = vmatpush1.msra.mxu0 0.0
  %1476 = vmatprep.subr.mxu0 0.0
  %1477 = vmatpush1.msra.mxu0 0.0
  %1478 = vmatprep.subr.mxu0 0.0
  %1479 = vmatpush1.msra.mxu0 0.0
  %1480 = vmatprep.subr.mxu0 0.0
  %1481 = vmatpush1.msra.mxu0 0.0
  %1482 = vmatprep.subr.mxu0 0.0
  %1483 = vmatpush1.msra.mxu0 0.0
  %1484 = vmatprep.subr.mxu0 0.0
  %1485 = vmatpush1.msra.mxu0 0.0
  %1486 = vmatprep.subr.mxu0 0.0
  %1487 = vmatpush1.msra.mxu0 0.0
  %1488 = vmatprep.subr.mxu0 0.0
  %1489 = vmatpush1.msra.mxu0 0.0
  %1490 = vmatprep.subr.mxu0 0.0
  %1491 = vmatpush1.msra.mxu0 0.0
  %1492 = vmatprep.subr.mxu0 0.0
  %1493 = vmatpush1.msra.mxu0 0.0
  %1494 = vmatprep.subr.mxu0 0.0
  %1495 = vmatpush1.msra.mxu0 0.0
  %1496 = vmatprep.subr.mxu0 0.0
  %1497 = vmatpush1.msra.mxu0 0.0
  %1498 = vmatprep.subr.mxu0 0.0
  %1499 = vmatpush1.msra.mxu0 0.0
  %1500 = vmatprep.subr.mxu0 0.0
  %1501 = vmatpush1.msra.mxu0 0.0
  %1502 = vmatprep.subr.mxu0 0.0
  %1503 = vmatpush1.msra.mxu0 0.0
  %1504 = vmatprep.subr.mxu0 0.0
  %1505 = vmatpush1.msra.mxu0 0.0
  %1506 = vmatprep.subr.mxu0 0.0
  %1507 = vmatpush1.msra.mxu0 0.0
  %1508 = vmatprep.subr.mxu0 0.0
  %1509 = vmatpush1.msra.mxu0 0.0
  %1510 = vmatprep.subr.mxu0 0.0
  %1511 = vmatpush1.msra.mxu0 0.0
  %1512 = vmatprep.subr.mxu0 0.0
  %1513 = vmatpush1.msra.mxu0 0.0
  %1514 = vmatprep.subr.mxu0 0.0
  %1515 = vmatpush1.msra.mxu0 0.0
  %1516 = vmatprep.subr.mxu0 0.0
  %1517 = vmatpush1.msra.mxu0 0.0
  %1518 = vmatprep.subr.mxu0 0.0
  %1519 = vmatpush1.msra.mxu0 0.0
  %1520 = vmatprep.subr.mxu0 0.0
  %1521 = vmatpush1.msra.mxu0 0.0
  %1522 = vmatprep.subr.mxu0 0.0
  %1523 = vmatpush1.msra.mxu0 0.0
  %1524 = vmatprep.subr.mxu0 0.0
  %1525 = vmatpush1.msra.mxu0 0.0
  %1526 = vmatprep.mubr.f32.mxu0 0.0
  %1527 = vmatmul.mubr.f32.gmra.mrb[0].mxu0 %v1389
  %v1528 = vpop.f32.mrb[0].mxu0
  %v1529 = vadd.f32 0.0, %v1528
  %v1530 = vpop.f32.mrb[0].mxu0
  %v1531 = vadd.f32 0.0, %v1530
  %1532 = vdwg.mxu0
  %1533 = vmatprep.subr.mxu0 %v1090
  %1534 = vmatpush1.msra.mxu0 %v1089
  %1535 = vmatprep.subr.mxu0 %v1097
  %1536 = vmatpush1.msra.mxu0 %v1096
  %1537 = vmatprep.subr.mxu0 0.0
  %1538 = vmatpush1.msra.mxu0 0.0
  %1539 = vmatprep.subr.mxu0 0.0
  %1540 = vmatpush1.msra.mxu0 0.0
  %1541 = vmatprep.subr.mxu0 0.0
  %1542 = vmatpush1.msra.mxu0 0.0
  %1543 = vmatprep.subr.mxu0 0.0
  %1544 = vmatpush1.msra.mxu0 0.0
  %1545 = vmatprep.subr.mxu0 0.0
  %1546 = vmatpush1.msra.mxu0 0.0
  %1547 = vmatprep.subr.mxu0 0.0
  %1548 = vmatpush1.msra.mxu0 0.0
  %1549 = vmatprep.subr.mxu0 0.0
  %1550 = vmatpush1.msra.mxu0 0.0
  %1551 = vmatprep.subr.mxu0 0.0
  %1552 = vmatpush1.msra.mxu0 0.0
  %1553 = vmatprep.subr.mxu0 0.0
  %1554 = vmatpush1.msra.mxu0 0.0
  %1555 = vmatprep.subr.mxu0 0.0
  %1556 = vmatpush1.msra.mxu0 0.0
  %1557 = vmatprep.subr.mxu0 0.0
  %1558 = vmatpush1.msra.mxu0 0.0
  %1559 = vmatprep.subr.mxu0 0.0
  %1560 = vmatpush1.msra.mxu0 0.0
  %1561 = vmatprep.subr.mxu0 0.0
  %1562 = vmatpush1.msra.mxu0 0.0
  %1563 = vmatprep.subr.mxu0 0.0
  %1564 = vmatpush1.msra.mxu0 0.0
  %1565 = vmatprep.subr.mxu0 0.0
  %1566 = vmatpush1.msra.mxu0 0.0
  %1567 = vmatprep.subr.mxu0 0.0
  %1568 = vmatpush1.msra.mxu0 0.0
  %1569 = vmatprep.subr.mxu0 0.0
  %1570 = vmatpush1.msra.mxu0 0.0
  %1571 = vmatprep.subr.mxu0 0.0
  %1572 = vmatpush1.msra.mxu0 0.0
  %1573 = vmatprep.subr.mxu0 0.0
  %1574 = vmatpush1.msra.mxu0 0.0
  %1575 = vmatprep.subr.mxu0 0.0
  %1576 = vmatpush1.msra.mxu0 0.0
  %1577 = vmatprep.subr.mxu0 0.0
  %1578 = vmatpush1.msra.mxu0 0.0
  %1579 = vmatprep.subr.mxu0 0.0
  %1580 = vmatpush1.msra.mxu0 0.0
  %1581 = vmatprep.subr.mxu0 0.0
  %1582 = vmatpush1.msra.mxu0 0.0
  %1583 = vmatprep.subr.mxu0 0.0
  %1584 = vmatpush1.msra.mxu0 0.0
  %1585 = vmatprep.subr.mxu0 0.0
  %1586 = vmatpush1.msra.mxu0 0.0
  %1587 = vmatprep.subr.mxu0 0.0
  %1588 = vmatpush1.msra.mxu0 0.0
  %1589 = vmatprep.subr.mxu0 0.0
  %1590 = vmatpush1.msra.mxu0 0.0
  %1591 = vmatprep.subr.mxu0 0.0
  %1592 = vmatpush1.msra.mxu0 0.0
  %1593 = vmatprep.subr.mxu0 0.0
  %1594 = vmatpush1.msra.mxu0 0.0
  %1595 = vmatprep.subr.mxu0 0.0
  %1596 = vmatpush1.msra.mxu0 0.0
  %1597 = vmatprep.mubr.f32.mxu0 0.0
  %1598 = vmatmul.mubr.f32.gmra.mrb[0].mxu0 %v1389
  %v1599 = vpop.f32.mrb[0].mxu0
  %v1600 = vadd.f32 0.0, %v1599
  %v1601 = vpop.f32.mrb[0].mxu0
  %v1602 = vadd.f32 0.0, %v1601
  %1603 = vdwg.mxu0
  %1604 = vmatprep.subr.mxu0 0.0
  %1605 = vmatpush1.msra.mxu0 %v1091
  %1606 = vmatprep.subr.mxu0 0.0
  %1607 = vmatpush1.msra.mxu0 %v1098
  %1608 = vmatprep.subr.mxu0 0.0
  %1609 = vmatpush1.msra.mxu0 0.0
  %1610 = vmatprep.subr.mxu0 0.0
  %1611 = vmatpush1.msra.mxu0 0.0
  %1612 = vmatprep.subr.mxu0 0.0
  %1613 = vmatpush1.msra.mxu0 0.0
  %1614 = vmatprep.subr.mxu0 0.0
  %1615 = vmatpush1.msra.mxu0 0.0
  %1616 = vmatprep.subr.mxu0 0.0
  %1617 = vmatpush1.msra.mxu0 0.0
  %1618 = vmatprep.subr.mxu0 0.0
  %1619 = vmatpush1.msra.mxu0 0.0
  %1620 = vmatprep.subr.mxu0 0.0
  %1621 = vmatpush1.msra.mxu0 0.0
  %1622 = vmatprep.subr.mxu0 0.0
  %1623 = vmatpush1.msra.mxu0 0.0
  %1624 = vmatprep.subr.mxu0 0.0
  %1625 = vmatpush1.msra.mxu0 0.0
  %1626 = vmatprep.subr.mxu0 0.0
  %1627 = vmatpush1.msra.mxu0 0.0
  %1628 = vmatprep.subr.mxu0 0.0
  %1629 = vmatpush1.msra.mxu0 0.0
  %1630 = vmatprep.subr.mxu0 0.0
  %1631 = vmatpush1.msra.mxu0 0.0
  %1632 = vmatprep.subr.mxu0 0.0
  %1633 = vmatpush1.msra.mxu0 0.0
  %1634 = vmatprep.subr.mxu0 0.0
  %1635 = vmatpush1.msra.mxu0 0.0
  %1636 = vmatprep.subr.mxu0 0.0
  %1637 = vmatpush1.msra.mxu0 0.0
  %1638 = vmatprep.subr.mxu0 0.0
  %1639 = vmatpush1.msra.mxu0 0.0
  %1640 = vmatprep.subr.mxu0 0.0
  %1641 = vmatpush1.msra.mxu0 0.0
  %1642 = vmatprep.subr.mxu0 0.0
  %1643 = vmatpush1.msra.mxu0 0.0
  %1644 = vmatprep.subr.mxu0 0.0
  %1645 = vmatpush1.msra.mxu0 0.0
  %1646 = vmatprep.subr.mxu0 0.0
  %1647 = vmatpush1.msra.mxu0 0.0
  %1648 = vmatprep.subr.mxu0 0.0
  %1649 = vmatpush1.msra.mxu0 0.0
  %1650 = vmatprep.subr.mxu0 0.0
  %1651 = vmatpush1.msra.mxu0 0.0
  %1652 = vmatprep.subr.mxu0 0.0
  %1653 = vmatpush1.msra.mxu0 0.0
  %1654 = vmatprep.subr.mxu0 0.0
  %1655 = vmatpush1.msra.mxu0 0.0
  %1656 = vmatprep.subr.mxu0 0.0
  %1657 = vmatpush1.msra.mxu0 0.0
  %1658 = vmatprep.subr.mxu0 0.0
  %1659 = vmatpush1.msra.mxu0 0.0
  %1660 = vmatprep.subr.mxu0 0.0
  %1661 = vmatpush1.msra.mxu0 0.0
  %1662 = vmatprep.subr.mxu0 0.0
  %1663 = vmatpush1.msra.mxu0 0.0
  %1664 = vmatprep.subr.mxu0 0.0
  %1665 = vmatpush1.msra.mxu0 0.0
  %1666 = vmatprep.subr.mxu0 0.0
  %1667 = vmatpush1.msra.mxu0 0.0
  %1668 = vmatprep.mubr.f32.mxu0 0.0
  %1669 = vmatmul.mubr.f32.gmra.mrb[0].mxu0 %v1389
  %v1670 = vpop.f32.mrb[0].mxu0
  %v1671 = vadd.f32 0.0, %v1670
  %v1672 = vpop.f32.mrb[0].mxu0
  %1673 = vdwg.mxu0
  %v1674 = vmul.f32 %v365, %v1168
  %v1675 = vmul.f32 %v366, %v1170
  %v1676 = vmul.f32 %v367, %v1239
  %v1677 = vmul.f32 %v368, %v1241
  %v1678 = vmul.f32 %v369, %v1310
  %v1679 = vmul.f32 %v370, %v1312
  %v1680 = vmul.f32 %v371, %v1381
  %v1681 = vadd.f32 %v1674, %v1458
  %v1682 = vadd.f32 %v1675, %v1460
  %v1683 = vadd.f32 %v1676, %v1529
  %v1684 = vadd.f32 %v1677, %v1531
  %v1685 = vadd.f32 %v1678, %v1600
  %v1686 = vadd.f32 %v1679, %v1602
  %v1687 = vadd.f32 %v1680, %v1671
  %1688 = vst [vmem:[%s7] sm:$0xff] %v1681
  %1689 = vst [vmem:[%s7 + $0x8] sm:$0xff] %v1682
  %1690 = vst [vmem:[%s7 + $0x10] sm:$0xff] %v1683
  %1691 = vst [vmem:[%s7 + $0x18] sm:$0xff] %v1684
  %1692 = vst [vmem:[%s7 + $0x20] sm:$0xff] %v1685
  %1693 = vst [vmem:[%s7 + $0x28] sm:$0xff] %v1686
  %1694 = vst.msk [vmem:[%s7 + $0x30] sm:$0xff] %vm78, %v1687
  // Predicated region
  $region30: #{forward.5} parent=0 // pred_check
    _
  $region31: #{forward.5} parent=0 // pred_check_branch
    %1696 = sbr.rel (0) target = $region33
  $region32: #{forward.5} parent=0 // pred_region
    _
  $region33: #{forward.5} parent=0 // pred_fallthru
    _
  // Predicated region
  $region34: #{forward.5} parent=0 // pred_check
    _
  $region35: #{forward.5} parent=0 // pred_check_branch
    %1698 = sbr.rel (0) target = $region37
  $region36: #{forward.5} parent=0 // pred_region
    _
  $region37: #{forward.5} parent=0 // pred_fallthru
    _

// kernel: forward.7
$region0: #{forward.7}
  #allocation0 [shape = 'u32[]', space=smem, size = 0x4, offset = 0x4, fixed_abs, tag = 'smem constant byte address 0x4 - core index']
  #allocation1 [shape = 'u32[144,128]{1,0:T(1,128)}', space=vmem, size = 0x12000, scoped, tag = 'internal scratch']
  %s0 = inlined_call_operand.vmem [shape: f32[384,576], index: 0, kind: input, shape index: {}]
  %s1 = inlined_call_operand.vmem [shape: f32[576,32], index: 1, kind: input, shape index: {}]
  %s2 = inlined_call_operand.vmem [shape: f32[1,32], index: 2, kind: input, shape index: {}]
  %s3 = inlined_call_operand.vmem [shape: f32[384,32], index: 3, kind: output, shape index: {}]
  %s4 = sld [smem:[#allocation0]]
  $region45: #{forward.7} parent=0
    _
  %s6 = ssub.s32 1, %s4
  %s7 = scalar_select 0, %s6, %s4
  loop: start=0, step=1, limit=5
  $region2: #{forward.7} parent=0 // loop_pre_header
    _
  $region3: #{forward.7} parent=0 // loop_header
    %s9 = sphi 0, %s13
    %p10 = scmp.ge.s32.totalorder %s9, 5
    %s19 = sphi 0, %s21
    %s22 = sphi 0, %s19
    %s23 = sphi 0, %s22
    %s39 = sphi 0, %s23
    %s43 = sphi 0, %s43
    %s45 = sphi 0, %s43
    %s46 = sphi 0, %s45
    %s60 = sphi 0, %s46
    %s64 = sphi 0, %s64
    %s66 = sphi 0, %s64
    %s67 = sphi 0, %s66
    %s81 = sphi 0, %s67
    %s87 = sphi 0, %s89
    %s90 = sphi 0, %s87
    %s91 = sphi 0, %s90
    %s107 = sphi 0, %s91
  $region4: #{forward.7} parent=0 // loop_header_branch
    %12 = sbr.rel (%p10) target = $region8
  $region5: #{forward.7} parent=0 // loop_body
    %s14 = ssub.s32 %s9, 1
    %s15 = ssub.s32 %s9, 2
    %s16 = sadd.s32 %s9, 1
    %s17 = ssub.s32 %s9, %s16
    %p18 = scmp.eq.s32.totalorder %s17, 0
    %s20 = sadd.s32 %s19, 1
    %s21 = scalar_select %p18, %s19, %s20
    %p24 = pneg %p18
    %p25 = scmp.eq.s32.totalorder %s9, 2
    %p26 = por %p24, %p25
    %p27 = scmp.ne.s32.totalorder %s19, %s22
    %p28 = scmp.eq.s32.totalorder %s9, 0
    %p29 = por %p27, %p28
    %p30 = scmp.ne.s32.totalorder %s19, %s22
    %p31 = scmp.eq.s32.totalorder %s14, 2
    %p32 = por %p30, %p31
    %p33 = scmp.ne.s32.totalorder %s22, %s23
    %p34 = scmp.eq.s32.totalorder %s14, 0
    %p35 = por %p33, %p34
    %p36 = scmp.ne.s32.totalorder %s22, %s23
    %p37 = scmp.eq.s32.totalorder %s15, 2
    %p38 = por %p36, %p37
    %p40 = scmp.ne.s32.totalorder %s23, %s39
    %p41 = scmp.eq.s32.totalorder %s15, 0
    %p42 = por %p40, %p41
    %s44 = sadd.s32 %s43, 1
    %p47 = scmp.eq.s32.totalorder %s9, 2
    %p48 = scmp.ne.s32.totalorder %s43, %s45
    %p49 = scmp.eq.s32.totalorder %s9, 0
    %p50 = por %p48, %p49
    %p51 = scmp.ne.s32.totalorder %s43, %s45
    %p52 = scmp.eq.s32.totalorder %s14, 2
    %p53 = por %p51, %p52
    %p54 = scmp.ne.s32.totalorder %s45, %s46
    %p55 = scmp.eq.s32.totalorder %s14, 0
    %p56 = por %p54, %p55
    %p57 = scmp.ne.s32.totalorder %s45, %s46
    %p58 = scmp.eq.s32.totalorder %s15, 2
    %p59 = por %p57, %p58
    %p61 = scmp.ne.s32.totalorder %s46, %s60
    %p62 = scmp.eq.s32.totalorder %s15, 0
    %p63 = por %p61, %p62
    %s65 = sadd.s32 %s64, 1
    %p68 = scmp.eq.s32.totalorder %s9, 2
    %p69 = scmp.ne.s32.totalorder %s64, %s66
    %p70 = scmp.eq.s32.totalorder %s9, 0
    %p71 = por %p69, %p70
    %p72 = scmp.ne.s32.totalorder %s64, %s66
    %p73 = scmp.eq.s32.totalorder %s14, 2
    %p74 = por %p72, %p73
    %p75 = scmp.ne.s32.totalorder %s66, %s67
    %p76 = scmp.eq.s32.totalorder %s14, 0
    %p77 = por %p75, %p76
    %p78 = scmp.ne.s32.totalorder %s66, %s67
    %p79 = scmp.eq.s32.totalorder %s15, 2
    %p80 = por %p78, %p79
    %p82 = scmp.ne.s32.totalorder %s67, %s81
    %p83 = scmp.eq.s32.totalorder %s15, 0
    %p84 = por %p82, %p83
    %s85 = ssub.s32 %s9, %s16
    %p86 = scmp.eq.s32.totalorder %s85, 0
    %s88 = sadd.s32 %s87, 1
    %s89 = scalar_select %p86, %s87, %s88
    %p92 = pneg %p86
    %p93 = scmp.eq.s32.totalorder %s9, 2
    %p94 = por %p92, %p93
    %p95 = scmp.ne.s32.totalorder %s87, %s90
    %p96 = scmp.eq.s32.totalorder %s9, 0
    %p97 = por %p95, %p96
    %p98 = scmp.ne.s32.totalorder %s87, %s90
    %p99 = scmp.eq.s32.totalorder %s14, 2
    %p100 = por %p98, %p99
    %p101 = scmp.ne.s32.totalorder %s90, %s91
    %p102 = scmp.eq.s32.totalorder %s14, 0
    %p103 = por %p101, %p102
    %p104 = scmp.ne.s32.totalorder %s90, %s91
    %p105 = scmp.eq.s32.totalorder %s15, 2
    %p106 = por %p104, %p105
    %p108 = scmp.ne.s32.totalorder %s91, %s107
    %p109 = scmp.eq.s32.totalorder %s15, 0
    %p110 = por %p108, %p109
    %p111 = scmp.le.s32.totalorder 1, %s9
    %p112 = scmp.lt.s32.totalorder %s9, 4
    %p113 = pnand %p111, %p112
    %p114 = pneg %p113
    // Predicated region
    $region9: #{forward.7} parent=5 // pred_check
      _
    $region10: #{forward.7} parent=5 // pred_check_branch
      %116 = sbr.rel (%p113) target = $region12
    $region11: #{forward.7} parent=5 // pred_region
      %s117 = ssub.s32 %s9, 1
      // Predicated region
      $region13: #{forward.7} parent=11 // pred_check
        %p118 = pneg %p56
      $region14: #{forward.7} parent=11 // pred_check_branch
        %120 = sbr.rel (%p118) target = $region16
      $region15: #{forward.7} parent=11 // pred_region
        _
      $region16: #{forward.7} parent=11 // pred_fallthru
        _
      // Predicated region
      $region17: #{forward.7} parent=11 // pred_check
        %p121 = pneg %p77
      $region18: #{forward.7} parent=11 // pred_check_branch
        %123 = sbr.rel (%p121) target = $region20
      $region19: #{forward.7} parent=11 // pred_region
        _
      $region20: #{forward.7} parent=11 // pred_fallthru
        _
    $region12: #{forward.7} parent=5 // pred_fallthru
      _
    %p124 = scmp.lt.s32.totalorder %s9, 3
    // Predicated region
    $region21: #{forward.7} parent=5 // pred_check
      %p125 = pneg %p124
    $region22: #{forward.7} parent=5 // pred_check_branch
      %127 = sbr.rel (%p125) target = $region24
    $region23: #{forward.7} parent=5 // pred_region
      // Predicated region
      $region25: #{forward.7} parent=23 // pred_check
        %p128 = pneg %p29
      $region26: #{forward.7} parent=23 // pred_check_branch
        %130 = sbr.rel (%p128) target = $region28
      $region27: #{forward.7} parent=23 // pred_region
        %s131 = smul.u32 16, %s9
        %p132 = scmp.lt.s32.totalorder %s131, 47
        %s133 = scalar_select %p132, %s131, 47
        %s134 = smul.addr %s133, 5
        %s135 = smul.addr %s134, 8
        %s136 = scalar_lea.vmem %s0, %s135
        %s137 = smul.u32 16, %s9
      $region28: #{forward.7} parent=23 // pred_fallthru
        _
    $region24: #{forward.7} parent=5 // pred_fallthru
      _
    %p138 = scmp.le.s32.totalorder 1, %s9
    %p139 = scmp.lt.s32.totalorder %s9, 4
    %p140 = pnand %p138, %p139
    %p141 = pneg %p140
    // Predicated region
    $region29: #{forward.7} parent=5 // pred_check
      _
    $region30: #{forward.7} parent=5 // pred_check_branch
      %143 = sbr.rel (%p140) target = $region32
    $region31: #{forward.7} parent=5 // pred_region
      %s144 = ssub.s32 %s9, 1
      %s145 = smul.u32 16, %s14
      %p146 = scmp.lt.s32.totalorder %s145, 47
      %s147 = scalar_select %p146, %s145, 47
      %s148 = smul.addr %s147, 5
      %s149 = smul.addr %s148, 8
      %s150 = scalar_lea.vmem %s0, %s149
      %p151 = pneg %p35
      %p152 = pneg %p32
      %p153 = pneg %p56
      %p154 = pneg %p53
      %p155 = pneg %p77
      %p156 = pneg %p74
      %p157 = pneg %p103
      %p158 = pneg %p100
      %s159 = smul.u32 16, %s14
      %p160 = scmp.lt.s32.totalorder %s159, 47
      %s161 = scalar_select %p160, %s159, 47
      %s162 = smul.addr %s161, 8
      %s163 = scalar_lea.vmem %s3, %s162
      %s164 = smul.u32 16, %s14
      %p165 = scmp.lt.s32.totalorder %s164, 47
      %s166 = scalar_select %p165, %s164, 47
      %s167 = smul.addr %s166, 5
      %s168 = smul.addr %s167, 8
      %s169 = scalar_lea.vmem %s0, %s168
      %s170 = smul.u32 16, %s14
      %s171 = smul.u32 16, %s14
      %p172 = scmp.lt.s32.totalorder %s171, 47
      %s173 = scalar_select %p172, %s171, 47
      %s174 = smul.addr %s173, 8
      %s175 = scalar_lea.vmem %s3, %s174
      %s176 = smul.u32 16, %s14
      %v177 = vld [vmem:[%s169] sm:$0xff]
      %v178 = vld [vmem:[%s169 + $0x8] sm:$0xff]
      %v179 = vld [vmem:[%s169 + $0x10] sm:$0xff]
      %v180 = vld [vmem:[%s169 + $0x18] sm:$0xff]
      %v181 = vld [vmem:[%s169 + $0x20] sm:$0xff]
      %v182 = vld [vmem:[%s169 + $0x28] sm:$0xff]
      %v183 = vld [vmem:[%s169 + $0x30] sm:$0xff]
      %v184 = vld [vmem:[%s169 + $0x38] sm:$0xff]
      %v185 = vld [vmem:[%s169 + $0x40] sm:$0xff]
      %v186 = vld [vmem:[%s169 + $0x48] sm:$0xff]
      %v187 = vld [vmem:[%s169 + $0x50] sm:$0xff]
      %v188 = vld [vmem:[%s169 + $0x58] sm:$0xff]
      %v189 = vld [vmem:[%s169 + $0x60] sm:$0xff]
      %v190 = vld [vmem:[%s169 + $0x68] sm:$0xff]
      %v191 = vld [vmem:[%s169 + $0x70] sm:$0xff]
      %v192 = vld [vmem:[%s169 + $0x78] sm:$0xff]
      %v193 = vld [vmem:[%s169 + $0x80] sm:$0xff]
      %v194 = vld [vmem:[%s169 + $0x88] sm:$0xff]
      %v195 = vld [vmem:[%s169 + $0x90] sm:$0xff]
      %v196 = vld [vmem:[%s169 + $0x98] sm:$0xff]
      %v197 = vld [vmem:[%s169 + $0xa0] sm:$0xff]
      %v198 = vld [vmem:[%s169 + $0xa8] sm:$0xff]
      %v199 = vld [vmem:[%s169 + $0xb0] sm:$0xff]
      %v200 = vld [vmem:[%s169 + $0xb8] sm:$0xff]
      %v201 = vld [vmem:[%s169 + $0xc0] sm:$0xff]
      %v202 = vld [vmem:[%s169 + $0xc8] sm:$0xff]
      %v203 = vld [vmem:[%s169 + $0xd0] sm:$0xff]
      %v204 = vld [vmem:[%s169 + $0xd8] sm:$0xff]
      %v205 = vld [vmem:[%s169 + $0xe0] sm:$0xff]
      %v206 = vld [vmem:[%s169 + $0xe8] sm:$0xff]
      %v207 = vld [vmem:[%s169 + $0xf0] sm:$0xff]
      %v208 = vld [vmem:[%s169 + $0xf8] sm:$0xff]
      %v209 = vld [vmem:[%s169 + $0x100] sm:$0xff]
      %v210 = vld [vmem:[%s169 + $0x108] sm:$0xff]
      %v211 = vld [vmem:[%s169 + $0x110] sm:$0xff]
      %v212 = vld [vmem:[%s169 + $0x118] sm:$0xff]
      %v213 = vld [vmem:[%s169 + $0x120] sm:$0xff]
      %v214 = vld [vmem:[%s169 + $0x128] sm:$0xff]
      %v215 = vld [vmem:[%s169 + $0x130] sm:$0xff]
      %v216 = vld [vmem:[%s169 + $0x138] sm:$0xff]
      %v217 = vld [vmem:[%s169 + $0x140] sm:$0xff]
      %v218 = vld [vmem:[%s169 + $0x148] sm:$0xff]
      %v219 = vld [vmem:[%s169 + $0x150] sm:$0xff]
      %v220 = vld [vmem:[%s169 + $0x158] sm:$0xff]
      %v221 = vld [vmem:[%s169 + $0x160] sm:$0xff]
      %v222 = vld [vmem:[%s169 + $0x168] sm:$0xff]
      %v223 = vld [vmem:[%s169 + $0x170] sm:$0xff]
      %v224 = vld [vmem:[%s169 + $0x178] sm:$0xff]
      %v225 = vld [vmem:[%s169 + $0x180] sm:$0xff]
      %v226 = vld [vmem:[%s169 + $0x188] sm:$0xff]
      %v227 = vld [vmem:[%s169 + $0x190] sm:$0xff]
      %v228 = vld [vmem:[%s169 + $0x198] sm:$0xff]
      %v229 = vld [vmem:[%s169 + $0x1a0] sm:$0xff]
      %v230 = vld [vmem:[%s169 + $0x1a8] sm:$0xff]
      %v231 = vld [vmem:[%s169 + $0x1b0] sm:$0xff]
      %v232 = vld [vmem:[%s169 + $0x1b8] sm:$0xff]
      %v233 = vld [vmem:[%s169 + $0x1c0] sm:$0xff]
      %v234 = vld [vmem:[%s169 + $0x1c8] sm:$0xff]
      %v235 = vld [vmem:[%s169 + $0x1d0] sm:$0xff]
      %v236 = vld [vmem:[%s169 + $0x1d8] sm:$0xff]
      %v237 = vld [vmem:[%s169 + $0x1e0] sm:$0xff]
      %v238 = vld [vmem:[%s169 + $0x1e8] sm:$0xff]
      %v239 = vld [vmem:[%s169 + $0x1f0] sm:$0xff]
      %v240 = vld [vmem:[%s169 + $0x1f8] sm:$0xff]
      %v241 = vld [vmem:[%s169 + $0x200] sm:$0xff]
      %v242 = vld [vmem:[%s169 + $0x208] sm:$0xff]
      %v243 = vld [vmem:[%s169 + $0x210] sm:$0xff]
      %v244 = vld [vmem:[%s169 + $0x218] sm:$0xff]
      %v245 = vld [vmem:[%s169 + $0x220] sm:$0xff]
      %v246 = vld [vmem:[%s169 + $0x228] sm:$0xff]
      %v247 = vld [vmem:[%s169 + $0x230] sm:$0xff]
      %v248 = vld [vmem:[%s169 + $0x238] sm:$0xff]
      %v249 = vld [vmem:[%s169 + $0x240] sm:$0xff]
      %v250 = vld [vmem:[%s169 + $0x248] sm:$0xff]
      %v251 = vld [vmem:[%s169 + $0x250] sm:$0xff]
      %v252 = vld [vmem:[%s169 + $0x258] sm:$0xff]
      %v253 = vld [vmem:[%s169 + $0x260] sm:$0xff]
      %v254 = vld [vmem:[%s169 + $0x268] sm:$0xff]
      %v255 = vld [vmem:[%s169 + $0x270] sm:$0xff]
      %v256 = vld [vmem:[%s169 + $0x278] sm:$0xff]
      %v257 = vld [vmem:[%s1] sm:$0xff]
      %v258 = vld [vmem:[%s1 + $0x8] sm:$0xff]
      %v259 = vld [vmem:[%s1 + $0x10] sm:$0xff]
      %v260 = vld [vmem:[%s1 + $0x18] sm:$0xff]
      %v261 = vld [vmem:[%s1 + $0x20] sm:$0xff]
      %v262 = vld [vmem:[%s1 + $0x28] sm:$0xff]
      %v263 = vld [vmem:[%s1 + $0x30] sm:$0xff]
      %v264 = vld [vmem:[%s1 + $0x38] sm:$0xff]
      %v265 = vld [vmem:[%s1 + $0x40] sm:$0xff]
      %v266 = vld [vmem:[%s1 + $0x48] sm:$0xff]
      %v267 = vld [vmem:[%s1 + $0x50] sm:$0xff]
      %v268 = vld [vmem:[%s1 + $0x58] sm:$0xff]
      %v269 = vld [vmem:[%s1 + $0x60] sm:$0xff]
      %v270 = vld [vmem:[%s1 + $0x68] sm:$0xff]
      %v271 = vld [vmem:[%s1 + $0x70] sm:$0xff]
      %v272 = vld [vmem:[%s1 + $0x78] sm:$0xff]
      %v273 = vld [vmem:[%s1 + $0x80] sm:$0xff]
      %v274 = vld [vmem:[%s1 + $0x88] sm:$0xff]
      %v275 = vld [vmem:[%s1 + $0x90] sm:$0xff]
      %v276 = vld [vmem:[%s1 + $0x98] sm:$0xff]
      %v277 = vld [vmem:[%s1 + $0xa0] sm:$0xff]
      %v278 = vld [vmem:[%s1 + $0xa8] sm:$0xff]
      %v279 = vld [vmem:[%s1 + $0xb0] sm:$0xff]
      %v280 = vld [vmem:[%s1 + $0xb8] sm:$0xff]
      %v281 = vld [vmem:[%s1 + $0xc0] sm:$0xff]
      %v282 = vld [vmem:[%s1 + $0xc8] sm:$0xff]
      %v283 = vld [vmem:[%s1 + $0xd0] sm:$0xff]
      %v284 = vld [vmem:[%s1 + $0xd8] sm:$0xff]
      %v285 = vld [vmem:[%s1 + $0xe0] sm:$0xff]
      %v286 = vld [vmem:[%s1 + $0xe8] sm:$0xff]
      %v287 = vld [vmem:[%s1 + $0xf0] sm:$0xff]
      %v288 = vld [vmem:[%s1 + $0xf8] sm:$0xff]
      %v289 = vld [vmem:[%s1 + $0x100] sm:$0xff]
      %v290 = vld [vmem:[%s1 + $0x108] sm:$0xff]
      %v291 = vld [vmem:[%s1 + $0x110] sm:$0xff]
      %v292 = vld [vmem:[%s1 + $0x118] sm:$0xff]
      %v293 = vld [vmem:[%s1 + $0x120] sm:$0xff]
      %v294 = vld [vmem:[%s1 + $0x128] sm:$0xff]
      %v295 = vld [vmem:[%s1 + $0x130] sm:$0xff]
      %v296 = vld [vmem:[%s1 + $0x138] sm:$0xff]
      %v297 = vld [vmem:[%s1 + $0x140] sm:$0xff]
      %v298 = vld [vmem:[%s1 + $0x148] sm:$0xff]
      %v299 = vld [vmem:[%s1 + $0x150] sm:$0xff]
      %v300 = vld [vmem:[%s1 + $0x158] sm:$0xff]
      %v301 = vld [vmem:[%s1 + $0x160] sm:$0xff]
      %v302 = vld [vmem:[%s1 + $0x168] sm:$0xff]
      %v303 = vld [vmem:[%s1 + $0x170] sm:$0xff]
      %v304 = vld [vmem:[%s1 + $0x178] sm:$0xff]
      %v305 = vld [vmem:[%s1 + $0x180] sm:$0xff]
      %v306 = vld [vmem:[%s1 + $0x188] sm:$0xff]
      %v307 = vld [vmem:[%s1 + $0x190] sm:$0xff]
      %v308 = vld [vmem:[%s1 + $0x198] sm:$0xff]
      %v309 = vld [vmem:[%s1 + $0x1a0] sm:$0xff]
      %v310 = vld [vmem:[%s1 + $0x1a8] sm:$0xff]
      %v311 = vld [vmem:[%s1 + $0x1b0] sm:$0xff]
      %v312 = vld [vmem:[%s1 + $0x1b8] sm:$0xff]
      %v313 = vld [vmem:[%s1 + $0x1c0] sm:$0xff]
      %v314 = vld [vmem:[%s1 + $0x1c8] sm:$0xff]
      %v315 = vld [vmem:[%s1 + $0x1d0] sm:$0xff]
      %v316 = vld [vmem:[%s1 + $0x1d8] sm:$0xff]
      %v317 = vld [vmem:[%s1 + $0x1e0] sm:$0xff]
      %v318 = vld [vmem:[%s1 + $0x1e8] sm:$0xff]
      %v319 = vld [vmem:[%s1 + $0x1f0] sm:$0xff]
      %v320 = vld [vmem:[%s1 + $0x1f8] sm:$0xff]
      %v321 = vld [vmem:[%s1 + $0x200] sm:$0xff]
      %v322 = vld [vmem:[%s1 + $0x208] sm:$0xff]
      %v323 = vld [vmem:[%s1 + $0x210] sm:$0xff]
      %v324 = vld [vmem:[%s1 + $0x218] sm:$0xff]
      %v325 = vld [vmem:[%s1 + $0x220] sm:$0xff]
      %v326 = vld [vmem:[%s1 + $0x228] sm:$0xff]
      %v327 = vld [vmem:[%s1 + $0x230] sm:$0xff]
      %v328 = vld [vmem:[%s1 + $0x238] sm:$0xff]
      %v329 = vld [vmem:[%s2] sm:$0x1]
      %v331 = vlaneseq
      %v332 = vshrl.u32 %v331, 7
      %v333 = vsub.s32 0, %v332
      %v334 = vrot.slane %v329, %v333
      %vm336 = vcmask 523264
      %v338 = vsel %vm336, %v181, 0
      %v341 = vsel %vm336, %v186, 0
      %v344 = vsel %vm336, %v191, 0
      %v347 = vsel %vm336, %v196, 0
      %v350 = vsel %vm336, %v201, 0
      %v353 = vsel %vm336, %v206, 0
      %v356 = vsel %vm336, %v211, 0
      %v359 = vsel %vm336, %v216, 0
      %v362 = vsel %vm336, %v221, 0
      %v365 = vsel %vm336, %v226, 0
      %v368 = vsel %vm336, %v231, 0
      %v371 = vsel %vm336, %v236, 0
      %v374 = vsel %vm336, %v241, 0
      %v377 = vsel %vm336, %v246, 0
      %v380 = vsel %vm336, %v251, 0
      %v383 = vsel %vm336, %v256, 0
      %385 = vmatprep.subr.mxu0 0.0
      %386 = vmatpush1.msra.mxu0 %v257
      %387 = vmatprep.subr.mxu0 0.0
      %388 = vmatpush1.msra.mxu0 %v258
      %389 = vmatprep.subr.mxu0 0.0
      %390 = vmatpush1.msra.mxu0 %v259
      %391 = vmatprep.subr.mxu0 0.0
      %392 = vmatpush1.msra.mxu0 %v260
      %393 = vmatprep.subr.mxu0 0.0
      %394 = vmatpush1.msra.mxu0 %v261
      %395 = vmatprep.subr.mxu0 0.0
      %396 = vmatpush1.msra.mxu0 %v262
      %397 = vmatprep.subr.mxu0 0.0
      %398 = vmatpush1.msra.mxu0 %v263
      %399 = vmatprep.subr.mxu0 0.0
      %400 = vmatpush1.msra.mxu0 %v264
      %401 = vmatprep.subr.mxu0 0.0
      %402 = vmatpush1.msra.mxu0 %v265
      %403 = vmatprep.subr.mxu0 0.0
      %404 = vmatpush1.msra.mxu0 %v266
      %405 = vmatprep.subr.mxu0 0.0
      %406 = vmatpush1.msra.mxu0 %v267
      %407 = vmatprep.subr.mxu0 0.0
      %408 = vmatpush1.msra.mxu0 %v268
      %409 = vmatprep.subr.mxu0 0.0
      %410 = vmatpush1.msra.mxu0 %v269
      %411 = vmatprep.subr.mxu0 0.0
      %412 = vmatpush1.msra.mxu0 %v270
      %413 = vmatprep.subr.mxu0 0.0
      %414 = vmatpush1.msra.mxu0 %v271
      %415 = vmatprep.subr.mxu0 0.0
      %416 = vmatpush1.msra.mxu0 %v272
      %417 = vmatprep.subr.mxu0 0.0
      %418 = vmatpush1.msra.mxu0 %v273
      %419 = vmatprep.subr.mxu0 0.0
      %420 = vmatpush1.msra.mxu0 %v274
      %421 = vmatprep.subr.mxu0 0.0
      %422 = vmatpush1.msra.mxu0 %v275
      %423 = vmatprep.subr.mxu0 0.0
      %424 = vmatpush1.msra.mxu0 %v276
      %425 = vmatprep.subr.mxu0 0.0
      %426 = vmatpush1.msra.mxu0 %v277
      %427 = vmatprep.subr.mxu0 0.0
      %428 = vmatpush1.msra.mxu0 %v278
      %429 = vmatprep.subr.mxu0 0.0
      %430 = vmatpush1.msra.mxu0 %v279
      %431 = vmatprep.subr.mxu0 0.0
      %432 = vmatpush1.msra.mxu0 %v280
      %433 = vmatprep.subr.mxu0 0.0
      %434 = vmatpush1.msra.mxu0 %v281
      %435 = vmatprep.subr.mxu0 0.0
      %436 = vmatpush1.msra.mxu0 %v282
      %437 = vmatprep.subr.mxu0 0.0
      %438 = vmatpush1.msra.mxu0 %v283
      %439 = vmatprep.subr.mxu0 0.0
      %440 = vmatpush1.msra.mxu0 %v284
      %441 = vmatprep.subr.mxu0 0.0
      %442 = vmatpush1.msra.mxu0 %v285
      %443 = vmatprep.subr.mxu0 0.0
      %444 = vmatpush1.msra.mxu0 %v286
      %445 = vmatprep.subr.mxu0 0.0
      %446 = vmatpush1.msra.mxu0 %v287
      %447 = vmatprep.subr.mxu0 0.0
      %448 = vmatpush1.msra.mxu0 %v288
      %449 = vmatprep.mubr.f32.mxu0 %v178
      %450 = vmatmul.mubr.f32.gmra.mrb[0].mxu0 %v177
      %v451 = vpop.f32.mrb[0].mxu0
      %v452 = vadd.f32 %v334, %v451
      %v453 = vpop.f32.mrb[0].mxu0
      %454 = vmatprep.mubr.f32.mxu0 %v183
      %455 = vmatmul.mubr.f32.gmra.mrb[0].mxu0 %v182
      %v456 = vpop.f32.mrb[0].mxu0
      %v457 = vadd.f32 %v334, %v456
      %v458 = vpop.f32.mrb[0].mxu0
      %459 = vmatprep.mubr.f32.mxu0 %v188
      %460 = vmatmul.mubr.f32.gmra.mrb[0].mxu0 %v187
      %v461 = vpop.f32.mrb[0].mxu0
      %v462 = vadd.f32 %v334, %v461
      %v463 = vpop.f32.mrb[0].mxu0
      %464 = vmatprep.mubr.f32.mxu0 %v193
      %465 = vmatmul.mubr.f32.gmra.mrb[0].mxu0 %v192
      %v466 = vpop.f32.mrb[0].mxu0
      %v467 = vadd.f32 %v334, %v466
      %v468 = vpop.f32.mrb[0].mxu0
      %469 = vmatprep.mubr.f32.mxu0 %v198
      %470 = vmatmul.mubr.f32.gmra.mrb[0].mxu0 %v197
      %v471 = vpop.f32.mrb[0].mxu0
      %v472 = vadd.f32 %v334, %v471
      %v473 = vpop.f32.mrb[0].mxu0
      %474 = vmatprep.mubr.f32.mxu0 %v203
      %475 = vmatmul.mubr.f32.gmra.mrb[0].mxu0 %v202
      %v476 = vpop.f32.mrb[0].mxu0
      %v477 = vadd.f32 %v334, %v476
      %v478 = vpop.f32.mrb[0].mxu0
      %479 = vmatprep.mubr.f32.mxu0 %v208
      %480 = vmatmul.mubr.f32.gmra.mrb[0].mxu0 %v207
      %v481 = vpop.f32.mrb[0].mxu0
      %v482 = vadd.f32 %v334, %v481
      %v483 = vpop.f32.mrb[0].mxu0
      %484 = vmatprep.mubr.f32.mxu0 %v213
      %485 = vmatmul.mubr.f32.gmra.mrb[0].mxu0 %v212
      %v486 = vpop.f32.mrb[0].mxu0
      %v487 = vadd.f32 %v334, %v486
      %v488 = vpop.f32.mrb[0].mxu0
      %489 = vmatprep.mubr.f32.mxu0 %v218
      %490 = vmatmul.mubr.f32.gmra.mrb[0].mxu0 %v217
      %v491 = vpop.f32.mrb[0].mxu0
      %v492 = vadd.f32 %v334, %v491
      %v493 = vpop.f32.mrb[0].mxu0
      %494 = vmatprep.mubr.f32.mxu0 %v223
      %495 = vmatmul.mubr.f32.gmra.mrb[0].mxu0 %v222
      %v496 = vpop.f32.mrb[0].mxu0
      %v497 = vadd.f32 %v334, %v496
      %v498 = vpop.f32.mrb[0].mxu0
      %499 = vmatprep.mubr.f32.mxu0 %v228
      %500 = vmatmul.mubr.f32.gmra.mrb[0].mxu0 %v227
      %v501 = vpop.f32.mrb[0].mxu0
      %v502 = vadd.f32 %v334, %v501
      %v503 = vpop.f32.mrb[0].mxu0
      %504 = vmatprep.mubr.f32.mxu0 %v233
      %505 = vmatmul.mubr.f32.gmra.mrb[0].mxu0 %v232
      %v506 = vpop.f32.mrb[0].mxu0
      %v507 = vadd.f32 %v334, %v506
      %v508 = vpop.f32.mrb[0].mxu0
      %509 = vmatprep.mubr.f32.mxu0 %v238
      %510 = vmatmul.mubr.f32.gmra.mrb[0].mxu0 %v237
      %v511 = vpop.f32.mrb[0].mxu0
      %v512 = vadd.f32 %v334, %v511
      %v513 = vpop.f32.mrb[0].mxu0
      %514 = vmatprep.mubr.f32.mxu0 %v243
      %515 = vmatmul.mubr.f32.gmra.mrb[0].mxu0 %v242
      %v516 = vpop.f32.mrb[0].mxu0
      %v517 = vadd.f32 %v334, %v516
      %v518 = vpop.f32.mrb[0].mxu0
      %519 = vmatprep.mubr.f32.mxu0 %v248
      %520 = vmatmul.mubr.f32.gmra.mrb[0].mxu0 %v247
      %v521 = vpop.f32.mrb[0].mxu0
      %v522 = vadd.f32 %v334, %v521
      %v523 = vpop.f32.mrb[0].mxu0
      %524 = vmatprep.mubr.f32.mxu0 %v253
      %525 = vmatmul.mubr.f32.gmra.mrb[0].mxu0 %v252
      %v526 = vpop.f32.mrb[0].mxu0
      %v527 = vadd.f32 %v334, %v526
      %v528 = vpop.f32.mrb[0].mxu0
      %529 = vdwg.mxu0
      %530 = vmatprep.subr.mxu0 0.0
      %531 = vmatpush1.msra.mxu0 %v289
      %532 = vmatprep.subr.mxu0 0.0
      %533 = vmatpush1.msra.mxu0 %v290
      %534 = vmatprep.subr.mxu0 0.0
      %535 = vmatpush1.msra.mxu0 %v291
      %536 = vmatprep.subr.mxu0 0.0
      %537 = vmatpush1.msra.mxu0 %v292
      %538 = vmatprep.subr.mxu0 0.0
      %539 = vmatpush1.msra.mxu0 %v293
      %540 = vmatprep.subr.mxu0 0.0
      %541 = vmatpush1.msra.mxu0 %v294
      %542 = vmatprep.subr.mxu0 0.0
      %543 = vmatpush1.msra.mxu0 %v295
      %544 = vmatprep.subr.mxu0 0.0
      %545 = vmatpush1.msra.mxu0 %v296
      %546 = vmatprep.subr.mxu0 0.0
      %547 = vmatpush1.msra.mxu0 %v297
      %548 = vmatprep.subr.mxu0 0.0
      %549 = vmatpush1.msra.mxu0 %v298
      %550 = vmatprep.subr.mxu0 0.0
      %551 = vmatpush1.msra.mxu0 %v299
      %552 = vmatprep.subr.mxu0 0.0
      %553 = vmatpush1.msra.mxu0 %v300
      %554 = vmatprep.subr.mxu0 0.0
      %555 = vmatpush1.msra.mxu0 %v301
      %556 = vmatprep.subr.mxu0 0.0
      %557 = vmatpush1.msra.mxu0 %v302
      %558 = vmatprep.subr.mxu0 0.0
      %559 = vmatpush1.msra.mxu0 %v303
      %560 = vmatprep.subr.mxu0 0.0
      %561 = vmatpush1.msra.mxu0 %v304
      %562 = vmatprep.subr.mxu0 0.0
      %563 = vmatpush1.msra.mxu0 %v305
      %564 = vmatprep.subr.mxu0 0.0
      %565 = vmatpush1.msra.mxu0 %v306
      %566 = vmatprep.subr.mxu0 0.0
      %567 = vmatpush1.msra.mxu0 %v307
      %568 = vmatprep.subr.mxu0 0.0
      %569 = vmatpush1.msra.mxu0 %v308
      %570 = vmatprep.subr.mxu0 0.0
      %571 = vmatpush1.msra.mxu0 %v309
      %572 = vmatprep.subr.mxu0 0.0
      %573 = vmatpush1.msra.mxu0 %v310
      %574 = vmatprep.subr.mxu0 0.0
      %575 = vmatpush1.msra.mxu0 %v311
      %576 = vmatprep.subr.mxu0 0.0
      %577 = vmatpush1.msra.mxu0 %v312
      %578 = vmatprep.subr.mxu0 0.0
      %579 = vmatpush1.msra.mxu0 %v313
      %580 = vmatprep.subr.mxu0 0.0
      %581 = vmatpush1.msra.mxu0 %v314
      %582 = vmatprep.subr.mxu0 0.0
      %583 = vmatpush1.msra.mxu0 %v315
      %584 = vmatprep.subr.mxu0 0.0
      %585 = vmatpush1.msra.mxu0 %v316
      %586 = vmatprep.subr.mxu0 0.0
      %587 = vmatpush1.msra.mxu0 %v317
      %588 = vmatprep.subr.mxu0 0.0
      %589 = vmatpush1.msra.mxu0 %v318
      %590 = vmatprep.subr.mxu0 0.0
      %591 = vmatpush1.msra.mxu0 %v319
      %592 = vmatprep.subr.mxu0 0.0
      %593 = vmatpush1.msra.mxu0 %v320
      %594 = vmatprep.mubr.f32.mxu0 %v180
      %595 = vmatmul.mubr.f32.gmra.mrb[0].mxu0 %v179
      %v596 = vpop.f32.mrb[0].mxu0
      %v597 = vadd.f32 %v452, %v596
      %v598 = vpop.f32.mrb[0].mxu0
      %599 = vmatprep.mubr.f32.mxu0 %v185
      %600 = vmatmul.mubr.f32.gmra.mrb[0].mxu0 %v184
      %v601 = vpop.f32.mrb[0].mxu0
      %v602 = vadd.f32 %v457, %v601
      %v603 = vpop.f32.mrb[0].mxu0
      %604 = vmatprep.mubr.f32.mxu0 %v190
      %605 = vmatmul.mubr.f32.gmra.mrb[0].mxu0 %v189
      %v606 = vpop.f32.mrb[0].mxu0
      %v607 = vadd.f32 %v462, %v606
      %v608 = vpop.f32.mrb[0].mxu0
      %609 = vmatprep.mubr.f32.mxu0 %v195
      %610 = vmatmul.mubr.f32.gmra.mrb[0].mxu0 %v194
      %v611 = vpop.f32.mrb[0].mxu0
      %v612 = vadd.f32 %v467, %v611
      %v613 = vpop.f32.mrb[0].mxu0
      %614 = vmatprep.mubr.f32.mxu0 %v200
      %615 = vmatmul.mubr.f32.gmra.mrb[0].mxu0 %v199
      %v616 = vpop.f32.mrb[0].mxu0
      %v617 = vadd.f32 %v472, %v616
      %v618 = vpop.f32.mrb[0].mxu0
      %619 = vmatprep.mubr.f32.mxu0 %v205
      %620 = vmatmul.mubr.f32.gmra.mrb[0].mxu0 %v204
      %v621 = vpop.f32.mrb[0].mxu0
      %v622 = vadd.f32 %v477, %v621
      %v623 = vpop.f32.mrb[0].mxu0
      %624 = vmatprep.mubr.f32.mxu0 %v210
      %625 = vmatmul.mubr.f32.gmra.mrb[0].mxu0 %v209
      %v626 = vpop.f32.mrb[0].mxu0
      %v627 = vadd.f32 %v482, %v626
      %v628 = vpop.f32.mrb[0].mxu0
      %629 = vmatprep.mubr.f32.mxu0 %v215
      %630 = vmatmul.mubr.f32.gmra.mrb[0].mxu0 %v214
      %v631 = vpop.f32.mrb[0].mxu0
      %v632 = vadd.f32 %v487, %v631
      %v633 = vpop.f32.mrb[0].mxu0
      %634 = vmatprep.mubr.f32.mxu0 %v220
      %635 = vmatmul.mubr.f32.gmra.mrb[0].mxu0 %v219
      %v636 = vpop.f32.mrb[0].mxu0
      %v637 = vadd.f32 %v492, %v636
      %v638 = vpop.f32.mrb[0].mxu0
      %639 = vmatprep.mubr.f32.mxu0 %v225
      %640 = vmatmul.mubr.f32.gmra.mrb[0].mxu0 %v224
      %v641 = vpop.f32.mrb[0].mxu0
      %v642 = vadd.f32 %v497, %v641
      %v643 = vpop.f32.mrb[0].mxu0
      %644 = vmatprep.mubr.f32.mxu0 %v230
      %645 = vmatmul.mubr.f32.gmra.mrb[0].mxu0 %v229
      %v646 = vpop.f32.mrb[0].mxu0
      %v647 = vadd.f32 %v502, %v646
      %v648 = vpop.f32.mrb[0].mxu0
      %649 = vmatprep.mubr.f32.mxu0 %v235
      %650 = vmatmul.mubr.f32.gmra.mrb[0].mxu0 %v234
      %v651 = vpop.f32.mrb[0].mxu0
      %v652 = vadd.f32 %v507, %v651
      %v653 = vpop.f32.mrb[0].mxu0
      %654 = vmatprep.mubr.f32.mxu0 %v240
      %655 = vmatmul.mubr.f32.gmra.mrb[0].mxu0 %v239
      %v656 = vpop.f32.mrb[0].mxu0
      %v657 = vadd.f32 %v512, %v656
      %v658 = vpop.f32.mrb[0].mxu0
      %659 = vmatprep.mubr.f32.mxu0 %v245
      %660 = vmatmul.mubr.f32.gmra.mrb[0].mxu0 %v244
      %v661 = vpop.f32.mrb[0].mxu0
      %v662 = vadd.f32 %v517, %v661
      %v663 = vpop.f32.mrb[0].mxu0
      %664 = vmatprep.mubr.f32.mxu0 %v250
      %665 = vmatmul.mubr.f32.gmra.mrb[0].mxu0 %v249
      %v666 = vpop.f32.mrb[0].mxu0
      %v667 = vadd.f32 %v522, %v666
      %v668 = vpop.f32.mrb[0].mxu0
      %669 = vmatprep.mubr.f32.mxu0 %v255
      %670 = vmatmul.mubr.f32.gmra.mrb[0].mxu0 %v254
      %v671 = vpop.f32.mrb[0].mxu0
      %v672 = vadd.f32 %v527, %v671
      %v673 = vpop.f32.mrb[0].mxu0
      %674 = vdwg.mxu0
      %675 = vmatprep.subr.mxu0 0.0
      %676 = vmatpush1.msra.mxu0 %v321
      %677 = vmatprep.subr.mxu0 0.0
      %678 = vmatpush1.msra.mxu0 %v322
      %679 = vmatprep.subr.mxu0 0.0
      %680 = vmatpush1.msra.mxu0 %v323
      %681 = vmatprep.subr.mxu0 0.0
      %682 = vmatpush1.msra.mxu0 %v324
      %683 = vmatprep.subr.mxu0 0.0
      %684 = vmatpush1.msra.mxu0 %v325
      %685 = vmatprep.subr.mxu0 0.0
      %686 = vmatpush1.msra.mxu0 %v326
      %687 = vmatprep.subr.mxu0 0.0
      %688 = vmatpush1.msra.mxu0 %v327
      %689 = vmatprep.subr.mxu0 0.0
      %690 = vmatpush1.msra.mxu0 %v328
      %691 = vmatprep.subr.mxu0 0.0
      %692 = vmatpush1.msra.mxu0 0.0
      %693 = vmatprep.subr.mxu0 0.0
      %694 = vmatpush1.msra.mxu0 0.0
      %695 = vmatprep.subr.mxu0 0.0
      %696 = vmatpush1.msra.mxu0 0.0
      %697 = vmatprep.subr.mxu0 0.0
      %698 = vmatpush1.msra.mxu0 0.0
      %699 = vmatprep.subr.mxu0 0.0
      %700 = vmatpush1.msra.mxu0 0.0
      %701 = vmatprep.subr.mxu0 0.0
      %702 = vmatpush1.msra.mxu0 0.0
      %703 = vmatprep.subr.mxu0 0.0
      %704 = vmatpush1.msra.mxu0 0.0
      %705 = vmatprep.subr.mxu0 0.0
      %706 = vmatpush1.msra.mxu0 0.0
      %707 = vmatprep.subr.mxu0 0.0
      %708 = vmatpush1.msra.mxu0 0.0
      %709 = vmatprep.subr.mxu0 0.0
      %710 = vmatpush1.msra.mxu0 0.0
      %711 = vmatprep.subr.mxu0 0.0
      %712 = vmatpush1.msra.mxu0 0.0
      %713 = vmatprep.subr.mxu0 0.0
      %714 = vmatpush1.msra.mxu0 0.0
      %715 = vmatprep.subr.mxu0 0.0
      %716 = vmatpush1.msra.mxu0 0.0
      %717 = vmatprep.subr.mxu0 0.0
      %718 = vmatpush1.msra.mxu0 0.0
      %719 = vmatprep.subr.mxu0 0.0
      %720 = vmatpush1.msra.mxu0 0.0
      %721 = vmatprep.subr.mxu0 0.0
      %722 = vmatpush1.msra.mxu0 0.0
      %723 = vmatprep.subr.mxu0 0.0
      %724 = vmatpush1.msra.mxu0 0.0
      %725 = vmatprep.subr.mxu0 0.0
      %726 = vmatpush1.msra.mxu0 0.0
      %727 = vmatprep.subr.mxu0 0.0
      %728 = vmatpush1.msra.mxu0 0.0
      %729 = vmatprep.subr.mxu0 0.0
      %730 = vmatpush1.msra.mxu0 0.0
      %731 = vmatprep.subr.mxu0 0.0
      %732 = vmatpush1.msra.mxu0 0.0
      %733 = vmatprep.subr.mxu0 0.0
      %734 = vmatpush1.msra.mxu0 0.0
      %735 = vmatprep.subr.mxu0 0.0
      %736 = vmatpush1.msra.mxu0 0.0
      %737 = vmatprep.subr.mxu0 0.0
      %738 = vmatpush1.msra.mxu0 0.0
      %739 = vmatprep.mubr.f32.mxu0 0.0
      %740 = vmatmul.mubr.f32.gmra.mrb[0].mxu0 %v338
      %v741 = vpop.f32.mrb[0].mxu0
      %v742 = vadd.f32 %v597, %v741
      %v743 = vpop.f32.mrb[0].mxu0
      %744 = vmatprep.mubr.f32.mxu0 0.0
      %745 = vmatmul.mubr.f32.gmra.mrb[0].mxu0 %v341
      %v746 = vpop.f32.mrb[0].mxu0
      %v747 = vadd.f32 %v602, %v746
      %v748 = vpop.f32.mrb[0].mxu0
      %749 = vmatprep.mubr.f32.mxu0 0.0
      %750 = vmatmul.mubr.f32.gmra.mrb[0].mxu0 %v344
      %v751 = vpop.f32.mrb[0].mxu0
      %v752 = vadd.f32 %v607, %v751
      %v753 = vpop.f32.mrb[0].mxu0
      %754 = vmatprep.mubr.f32.mxu0 0.0
      %755 = vmatmul.mubr.f32.gmra.mrb[0].mxu0 %v347
      %v756 = vpop.f32.mrb[0].mxu0
      %v757 = vadd.f32 %v612, %v756
      %v758 = vpop.f32.mrb[0].mxu0
      %759 = vmatprep.mubr.f32.mxu0 0.0
      %760 = vmatmul.mubr.f32.gmra.mrb[0].mxu0 %v350
      %v761 = vpop.f32.mrb[0].mxu0
      %v762 = vadd.f32 %v617, %v761
      %v763 = vpop.f32.mrb[0].mxu0
      %764 = vmatprep.mubr.f32.mxu0 0.0
      %765 = vmatmul.mubr.f32.gmra.mrb[0].mxu0 %v353
      %v766 = vpop.f32.mrb[0].mxu0
      %v767 = vadd.f32 %v622, %v766
      %v768 = vpop.f32.mrb[0].mxu0
      %769 = vmatprep.mubr.f32.mxu0 0.0
      %770 = vmatmul.mubr.f32.gmra.mrb[0].mxu0 %v356
      %v771 = vpop.f32.mrb[0].mxu0
      %v772 = vadd.f32 %v627, %v771
      %v773 = vpop.f32.mrb[0].mxu0
      %774 = vmatprep.mubr.f32.mxu0 0.0
      %775 = vmatmul.mubr.f32.gmra.mrb[0].mxu0 %v359
      %v776 = vpop.f32.mrb[0].mxu0
      %v777 = vadd.f32 %v632, %v776
      %v778 = vpop.f32.mrb[0].mxu0
      %779 = vmatprep.mubr.f32.mxu0 0.0
      %780 = vmatmul.mubr.f32.gmra.mrb[0].mxu0 %v362
      %v781 = vpop.f32.mrb[0].mxu0
      %v782 = vadd.f32 %v637, %v781
      %v783 = vpop.f32.mrb[0].mxu0
      %784 = vmatprep.mubr.f32.mxu0 0.0
      %785 = vmatmul.mubr.f32.gmra.mrb[0].mxu0 %v365
      %v786 = vpop.f32.mrb[0].mxu0
      %v787 = vadd.f32 %v642, %v786
      %v788 = vpop.f32.mrb[0].mxu0
      %789 = vmatprep.mubr.f32.mxu0 0.0
      %790 = vmatmul.mubr.f32.gmra.mrb[0].mxu0 %v368
      %v791 = vpop.f32.mrb[0].mxu0
      %v792 = vadd.f32 %v647, %v791
      %v793 = vpop.f32.mrb[0].mxu0
      %794 = vmatprep.mubr.f32.mxu0 0.0
      %795 = vmatmul.mubr.f32.gmra.mrb[0].mxu0 %v371
      %v796 = vpop.f32.mrb[0].mxu0
      %v797 = vadd.f32 %v652, %v796
      %v798 = vpop.f32.mrb[0].mxu0
      %799 = vmatprep.mubr.f32.mxu0 0.0
      %800 = vmatmul.mubr.f32.gmra.mrb[0].mxu0 %v374
      %v801 = vpop.f32.mrb[0].mxu0
      %v802 = vadd.f32 %v657, %v801
      %v803 = vpop.f32.mrb[0].mxu0
      %804 = vmatprep.mubr.f32.mxu0 0.0
      %805 = vmatmul.mubr.f32.gmra.mrb[0].mxu0 %v377
      %v806 = vpop.f32.mrb[0].mxu0
      %v807 = vadd.f32 %v662, %v806
      %v808 = vpop.f32.mrb[0].mxu0
      %809 = vmatprep.mubr.f32.mxu0 0.0
      %810 = vmatmul.mubr.f32.gmra.mrb[0].mxu0 %v380
      %v811 = vpop.f32.mrb[0].mxu0
      %v812 = vadd.f32 %v667, %v811
      %v813 = vpop.f32.mrb[0].mxu0
      %814 = vmatprep.mubr.f32.mxu0 0.0
      %815 = vmatmul.mubr.f32.gmra.mrb[0].mxu0 %v383
      %v816 = vpop.f32.mrb[0].mxu0
      %v817 = vadd.f32 %v672, %v816
      %v818 = vpop.f32.mrb[0].mxu0
      %819 = vdwg.mxu0
      %vm820 = vcmask 261120
      %821 = vst.msk [vmem:[%s175] sm:$0xff] %vm820, %v742
      %822 = vst.msk [vmem:[%s175 + $0x8] sm:$0xff] %vm820, %v747
      %823 = vst.msk [vmem:[%s175 + $0x10] sm:$0xff] %vm820, %v752
      %824 = vst.msk [vmem:[%s175 + $0x18] sm:$0xff] %vm820, %v757
      %825 = vst.msk [vmem:[%s175 + $0x20] sm:$0xff] %vm820, %v762
      %826 = vst.msk [vmem:[%s175 + $0x28] sm:$0xff] %vm820, %v767
      %827 = vst.msk [vmem:[%s175 + $0x30] sm:$0xff] %vm820, %v772
      %828 = vst.msk [vmem:[%s175 + $0x38] sm:$0xff] %vm820, %v777
      %829 = vst.msk [vmem:[%s175 + $0x40] sm:$0xff] %vm820, %v782
      %830 = vst.msk [vmem:[%s175 + $0x48] sm:$0xff] %vm820, %v787
      %831 = vst.msk [vmem:[%s175 + $0x50] sm:$0xff] %vm820, %v792
      %832 = vst.msk [vmem:[%s175 + $0x58] sm:$0xff] %vm820, %v797
      %833 = vst.msk [vmem:[%s175 + $0x60] sm:$0xff] %vm820, %v802
      %834 = vst.msk [vmem:[%s175 + $0x68] sm:$0xff] %vm820, %v807
      %835 = vst.msk [vmem:[%s175 + $0x70] sm:$0xff] %vm820, %v812
      %836 = vst.msk [vmem:[%s175 + $0x78] sm:$0xff] %vm820, %v817
      %s837 = smul.u32 16, %s14
      %p838 = scmp.lt.s32.totalorder %s837, 47
      %s839 = scalar_select %p838, %s837, 47
      %s840 = smul.addr %s839, 8
      %s841 = scalar_lea.vmem %s3, %s840
      // Predicated region
      $region33: #{forward.7} parent=31 // pred_check
        %p842 = pneg %p100
      $region34: #{forward.7} parent=31 // pred_check_branch
        %844 = sbr.rel (%p842) target = $region36
      $region35: #{forward.7} parent=31 // pred_region
        %s845 = smul.u32 16, %s14
      $region36: #{forward.7} parent=31 // pred_fallthru
        _
    $region32: #{forward.7} parent=5 // pred_fallthru
      _
    %p846 = scmp.le.s32.totalorder 2, %s9
    // Predicated region
    $region37: #{forward.7} parent=5 // pred_check
      %p847 = pneg %p846
    $region38: #{forward.7} parent=5 // pred_check_branch
      %849 = sbr.rel (%p847) target = $region40
    $region39: #{forward.7} parent=5 // pred_region
      %s850 = ssub.s32 %s9, 2
      // Predicated region
      $region41: #{forward.7} parent=39 // pred_check
        %p851 = pneg %p106
      $region42: #{forward.7} parent=39 // pred_check_branch
        %853 = sbr.rel (%p851) target = $region44
      $region43: #{forward.7} parent=39 // pred_region
        %s854 = smul.u32 16, %s15
        %p855 = scmp.lt.s32.totalorder %s854, 47
        %s856 = scalar_select %p855, %s854, 47
        %s857 = smul.addr %s856, 8
        %s858 = scalar_lea.vmem %s3, %s857
      $region44: #{forward.7} parent=39 // pred_fallthru
        _
    $region40: #{forward.7} parent=5 // pred_fallthru
      _
  $region6: #{forward.7} parent=0 // loop_footer
    %s13 = sadd.s32 1, %s9
  $region7: #{forward.7} parent=0 // loop_footer_branch
    %8 = sbr.rel target = $region3
  $region8: #{forward.7} parent=0 // loop_exit
    _

// kernel: forward.8
$region0: #{forward.8}
  #allocation0 [shape = 'u32[]', space=smem, size = 0x4, offset = 0x4, fixed_abs, tag = 'smem constant byte address 0x4 - core index']
  #allocation1 [shape = 'u32[144,128]{1,0:T(1,128)}', space=vmem, size = 0x12000, scoped, tag = 'internal scratch']
  %s0 = inlined_call_operand.vmem [shape: f32[1536,288], index: 0, kind: input, shape index: {}]
  %s1 = inlined_call_operand.vmem [shape: f32[288,16], index: 1, kind: input, shape index: {}]
  %s2 = inlined_call_operand.vmem [shape: f32[1,16], index: 2, kind: input, shape index: {}]
  %s3 = inlined_call_operand.vmem [shape: f32[1536,16], index: 3, kind: output, shape index: {}]
  %s4 = sld [smem:[#allocation0]]
  $region45: #{forward.8} parent=0
    _
  %s6 = ssub.s32 1, %s4
  %s7 = scalar_select 0, %s6, %s4
  loop: start=0, step=1, limit=14
  $region2: #{forward.8} parent=0 // loop_pre_header
    _
  $region3: #{forward.8} parent=0 // loop_header
    %s9 = sphi 0, %s13
    %p10 = scmp.ge.s32.totalorder %s9, 14
    %s19 = sphi 0, %s21
    %s22 = sphi 0, %s19
    %s23 = sphi 0, %s22
    %s39 = sphi 0, %s23
    %s43 = sphi 0, %s43
    %s45 = sphi 0, %s43
    %s46 = sphi 0, %s45
    %s60 = sphi 0, %s46
    %s64 = sphi 0, %s64
    %s66 = sphi 0, %s64
    %s67 = sphi 0, %s66
    %s81 = sphi 0, %s67
    %s87 = sphi 0, %s89
    %s90 = sphi 0, %s87
    %s91 = sphi 0, %s90
    %s107 = sphi 0, %s91
  $region4: #{forward.8} parent=0 // loop_header_branch
    %12 = sbr.rel (%p10) target = $region8
  $region5: #{forward.8} parent=0 // loop_body
    %s14 = ssub.s32 %s9, 1
    %s15 = ssub.s32 %s9, 2
    %s16 = sadd.s32 %s9, 1
    %s17 = ssub.s32 %s9, %s16
    %p18 = scmp.eq.s32.totalorder %s17, 0
    %s20 = sadd.s32 %s19, 1
    %s21 = scalar_select %p18, %s19, %s20
    %p24 = pneg %p18
    %p25 = scmp.eq.s32.totalorder %s9, 11
    %p26 = por %p24, %p25
    %p27 = scmp.ne.s32.totalorder %s19, %s22
    %p28 = scmp.eq.s32.totalorder %s9, 0
    %p29 = por %p27, %p28
    %p30 = scmp.ne.s32.totalorder %s19, %s22
    %p31 = scmp.eq.s32.totalorder %s14, 11
    %p32 = por %p30, %p31
    %p33 = scmp.ne.s32.totalorder %s22, %s23
    %p34 = scmp.eq.s32.totalorder %s14, 0
    %p35 = por %p33, %p34
    %p36 = scmp.ne.s32.totalorder %s22, %s23
    %p37 = scmp.eq.s32.totalorder %s15, 11
    %p38 = por %p36, %p37
    %p40 = scmp.ne.s32.totalorder %s23, %s39
    %p41 = scmp.eq.s32.totalorder %s15, 0
    %p42 = por %p40, %p41
    %s44 = sadd.s32 %s43, 1
    %p47 = scmp.eq.s32.totalorder %s9, 11
    %p48 = scmp.ne.s32.totalorder %s43, %s45
    %p49 = scmp.eq.s32.totalorder %s9, 0
    %p50 = por %p48, %p49
    %p51 = scmp.ne.s32.totalorder %s43, %s45
    %p52 = scmp.eq.s32.totalorder %s14, 11
    %p53 = por %p51, %p52
    %p54 = scmp.ne.s32.totalorder %s45, %s46
    %p55 = scmp.eq.s32.totalorder %s14, 0
    %p56 = por %p54, %p55
    %p57 = scmp.ne.s32.totalorder %s45, %s46
    %p58 = scmp.eq.s32.totalorder %s15, 11
    %p59 = por %p57, %p58
    %p61 = scmp.ne.s32.totalorder %s46, %s60
    %p62 = scmp.eq.s32.totalorder %s15, 0
    %p63 = por %p61, %p62
    %s65 = sadd.s32 %s64, 1
    %p68 = scmp.eq.s32.totalorder %s9, 11
    %p69 = scmp.ne.s32.totalorder %s64, %s66
    %p70 = scmp.eq.s32.totalorder %s9, 0
    %p71 = por %p69, %p70
    %p72 = scmp.ne.s32.totalorder %s64, %s66
    %p73 = scmp.eq.s32.totalorder %s14, 11
    %p74 = por %p72, %p73
    %p75 = scmp.ne.s32.totalorder %s66, %s67
    %p76 = scmp.eq.s32.totalorder %s14, 0
    %p77 = por %p75, %p76
    %p78 = scmp.ne.s32.totalorder %s66, %s67
    %p79 = scmp.eq.s32.totalorder %s15, 11
    %p80 = por %p78, %p79
    %p82 = scmp.ne.s32.totalorder %s67, %s81
    %p83 = scmp.eq.s32.totalorder %s15, 0
    %p84 = por %p82, %p83
    %s85 = ssub.s32 %s9, %s16
    %p86 = scmp.eq.s32.totalorder %s85, 0
    %s88 = sadd.s32 %s87, 1
    %s89 = scalar_select %p86, %s87, %s88
    %p92 = pneg %p86
    %p93 = scmp.eq.s32.totalorder %s9, 11
    %p94 = por %p92, %p93
    %p95 = scmp.ne.s32.totalorder %s87, %s90
    %p96 = scmp.eq.s32.totalorder %s9, 0
    %p97 = por %p95, %p96
    %p98 = scmp.ne.s32.totalorder %s87, %s90
    %p99 = scmp.eq.s32.totalorder %s14, 11
    %p100 = por %p98, %p99
    %p101 = scmp.ne.s32.totalorder %s90, %s91
    %p102 = scmp.eq.s32.totalorder %s14, 0
    %p103 = por %p101, %p102
    %p104 = scmp.ne.s32.totalorder %s90, %s91
    %p105 = scmp.eq.s32.totalorder %s15, 11
    %p106 = por %p104, %p105
    %p108 = scmp.ne.s32.totalorder %s91, %s107
    %p109 = scmp.eq.s32.totalorder %s15, 0
    %p110 = por %p108, %p109
    %p111 = scmp.le.s32.totalorder 1, %s9
    %p112 = scmp.lt.s32.totalorder %s9, 13
    %p113 = pnand %p111, %p112
    %p114 = pneg %p113
    // Predicated region
    $region9: #{forward.8} parent=5 // pred_check
      _
    $region10: #{forward.8} parent=5 // pred_check_branch
      %116 = sbr.rel (%p113) target = $region12
    $region11: #{forward.8} parent=5 // pred_region
      %s117 = ssub.s32 %s9, 1
      // Predicated region
      $region13: #{forward.8} parent=11 // pred_check
        %p118 = pneg %p56
      $region14: #{forward.8} parent=11 // pred_check_branch
        %120 = sbr.rel (%p118) target = $region16
      $region15: #{forward.8} parent=11 // pred_region
        _
      $region16: #{forward.8} parent=11 // pred_fallthru
        _
      // Predicated region
      $region17: #{forward.8} parent=11 // pred_check
        %p121 = pneg %p77
      $region18: #{forward.8} parent=11 // pred_check_branch
        %123 = sbr.rel (%p121) target = $region20
      $region19: #{forward.8} parent=11 // pred_region
        _
      $region20: #{forward.8} parent=11 // pred_fallthru
        _
    $region12: #{forward.8} parent=5 // pred_fallthru
      _
    %p124 = scmp.lt.s32.totalorder %s9, 12
    // Predicated region
    $region21: #{forward.8} parent=5 // pred_check
      %p125 = pneg %p124
    $region22: #{forward.8} parent=5 // pred_check_branch
      %127 = sbr.rel (%p125) target = $region24
    $region23: #{forward.8} parent=5 // pred_region
      // Predicated region
      $region25: #{forward.8} parent=23 // pred_check
        %p128 = pneg %p29
      $region26: #{forward.8} parent=23 // pred_check_branch
        %130 = sbr.rel (%p128) target = $region28
      $region27: #{forward.8} parent=23 // pred_region
        %s131 = smul.u32 16, %s9
        %p132 = scmp.lt.s32.totalorder %s131, 191
        %s133 = scalar_select %p132, %s131, 191
        %s134 = smul.addr %s133, 3
        %s135 = smul.addr %s134, 8
        %s136 = scalar_lea.vmem %s0, %s135
        %s137 = smul.u32 16, %s9
      $region28: #{forward.8} parent=23 // pred_fallthru
        _
    $region24: #{forward.8} parent=5 // pred_fallthru
      _
    %p138 = scmp.le.s32.totalorder 1, %s9
    %p139 = scmp.lt.s32.totalorder %s9, 13
    %p140 = pnand %p138, %p139
    %p141 = pneg %p140
    // Predicated region
    $region29: #{forward.8} parent=5 // pred_check
      _
    $region30: #{forward.8} parent=5 // pred_check_branch
      %143 = sbr.rel (%p140) target = $region32
    $region31: #{forward.8} parent=5 // pred_region
      %s144 = ssub.s32 %s9, 1
      %s145 = smul.u32 16, %s14
      %p146 = scmp.lt.s32.totalorder %s145, 191
      %s147 = scalar_select %p146, %s145, 191
      %s148 = smul.addr %s147, 3
      %s149 = smul.addr %s148, 8
      %s150 = scalar_lea.vmem %s0, %s149
      %p151 = pneg %p35
      %p152 = pneg %p32
      %p153 = pneg %p56
      %p154 = pneg %p53
      %p155 = pneg %p77
      %p156 = pneg %p74
      %p157 = pneg %p103
      %p158 = pneg %p100
      %s159 = smul.u32 16, %s14
      %p160 = scmp.lt.s32.totalorder %s159, 191
      %s161 = scalar_select %p160, %s159, 191
      %s162 = smul.addr %s161, 8
      %s163 = scalar_lea.vmem %s3, %s162
      %s164 = smul.u32 16, %s14
      %p165 = scmp.lt.s32.totalorder %s164, 191
      %s166 = scalar_select %p165, %s164, 191
      %s167 = smul.addr %s166, 3
      %s168 = smul.addr %s167, 8
      %s169 = scalar_lea.vmem %s0, %s168
      %s170 = smul.u32 16, %s14
      %s171 = smul.u32 16, %s14
      %p172 = scmp.lt.s32.totalorder %s171, 191
      %s173 = scalar_select %p172, %s171, 191
      %s174 = smul.addr %s173, 8
      %s175 = scalar_lea.vmem %s3, %s174
      %s176 = smul.u32 16, %s14
      %v177 = vld [vmem:[%s169] sm:$0xff]
      %v178 = vld [vmem:[%s169 + $0x8] sm:$0xff]
      %v179 = vld [vmem:[%s169 + $0x10] sm:$0xff]
      %v180 = vld [vmem:[%s169 + $0x18] sm:$0xff]
      %v181 = vld [vmem:[%s169 + $0x20] sm:$0xff]
      %v182 = vld [vmem:[%s169 + $0x28] sm:$0xff]
      %v183 = vld [vmem:[%s169 + $0x30] sm:$0xff]
      %v184 = vld [vmem:[%s169 + $0x38] sm:$0xff]
      %v185 = vld [vmem:[%s169 + $0x40] sm:$0xff]
      %v186 = vld [vmem:[%s169 + $0x48] sm:$0xff]
      %v187 = vld [vmem:[%s169 + $0x50] sm:$0xff]
      %v188 = vld [vmem:[%s169 + $0x58] sm:$0xff]
      %v189 = vld [vmem:[%s169 + $0x60] sm:$0xff]
      %v190 = vld [vmem:[%s169 + $0x68] sm:$0xff]
      %v191 = vld [vmem:[%s169 + $0x70] sm:$0xff]
      %v192 = vld [vmem:[%s169 + $0x78] sm:$0xff]
      %v193 = vld [vmem:[%s169 + $0x80] sm:$0xff]
      %v194 = vld [vmem:[%s169 + $0x88] sm:$0xff]
      %v195 = vld [vmem:[%s169 + $0x90] sm:$0xff]
      %v196 = vld [vmem:[%s169 + $0x98] sm:$0xff]
      %v197 = vld [vmem:[%s169 + $0xa0] sm:$0xff]
      %v198 = vld [vmem:[%s169 + $0xa8] sm:$0xff]
      %v199 = vld [vmem:[%s169 + $0xb0] sm:$0xff]
      %v200 = vld [vmem:[%s169 + $0xb8] sm:$0xff]
      %v201 = vld [vmem:[%s169 + $0xc0] sm:$0xff]
      %v202 = vld [vmem:[%s169 + $0xc8] sm:$0xff]
      %v203 = vld [vmem:[%s169 + $0xd0] sm:$0xff]
      %v204 = vld [vmem:[%s169 + $0xd8] sm:$0xff]
      %v205 = vld [vmem:[%s169 + $0xe0] sm:$0xff]
      %v206 = vld [vmem:[%s169 + $0xe8] sm:$0xff]
      %v207 = vld [vmem:[%s169 + $0xf0] sm:$0xff]
      %v208 = vld [vmem:[%s169 + $0xf8] sm:$0xff]
      %v209 = vld [vmem:[%s169 + $0x100] sm:$0xff]
      %v210 = vld [vmem:[%s169 + $0x108] sm:$0xff]
      %v211 = vld [vmem:[%s169 + $0x110] sm:$0xff]
      %v212 = vld [vmem:[%s169 + $0x118] sm:$0xff]
      %v213 = vld [vmem:[%s169 + $0x120] sm:$0xff]
      %v214 = vld [vmem:[%s169 + $0x128] sm:$0xff]
      %v215 = vld [vmem:[%s169 + $0x130] sm:$0xff]
      %v216 = vld [vmem:[%s169 + $0x138] sm:$0xff]
      %v217 = vld [vmem:[%s169 + $0x140] sm:$0xff]
      %v218 = vld [vmem:[%s169 + $0x148] sm:$0xff]
      %v219 = vld [vmem:[%s169 + $0x150] sm:$0xff]
      %v220 = vld [vmem:[%s169 + $0x158] sm:$0xff]
      %v221 = vld [vmem:[%s169 + $0x160] sm:$0xff]
      %v222 = vld [vmem:[%s169 + $0x168] sm:$0xff]
      %v223 = vld [vmem:[%s169 + $0x170] sm:$0xff]
      %v224 = vld [vmem:[%s169 + $0x178] sm:$0xff]
      %v225 = vld [vmem:[%s1] sm:$0xff]
      %v226 = vld [vmem:[%s1 + $0x8] sm:$0xff]
      %v227 = vld [vmem:[%s1 + $0x10] sm:$0xff]
      %v228 = vld [vmem:[%s1 + $0x18] sm:$0xff]
      %v229 = vld [vmem:[%s1 + $0x20] sm:$0xff]
      %v230 = vld [vmem:[%s1 + $0x28] sm:$0xff]
      %v231 = vld [vmem:[%s1 + $0x30] sm:$0xff]
      %v232 = vld [vmem:[%s1 + $0x38] sm:$0xff]
      %v233 = vld [vmem:[%s1 + $0x40] sm:$0xff]
      %v234 = vld [vmem:[%s1 + $0x48] sm:$0xff]
      %v235 = vld [vmem:[%s1 + $0x50] sm:$0xff]
      %v236 = vld [vmem:[%s1 + $0x58] sm:$0xff]
      %v237 = vld [vmem:[%s1 + $0x60] sm:$0xff]
      %v238 = vld [vmem:[%s1 + $0x68] sm:$0xff]
      %v239 = vld [vmem:[%s1 + $0x70] sm:$0xff]
      %v240 = vld [vmem:[%s1 + $0x78] sm:$0xff]
      %v241 = vld [vmem:[%s1 + $0x80] sm:$0xff]
      %v242 = vld [vmem:[%s1 + $0x88] sm:$0xff]
      %v243 = vld [vmem:[%s1 + $0x90] sm:$0xff]
      %v244 = vld [vmem:[%s1 + $0x98] sm:$0xff]
      %v245 = vld [vmem:[%s1 + $0xa0] sm:$0xff]
      %v246 = vld [vmem:[%s1 + $0xa8] sm:$0xff]
      %v247 = vld [vmem:[%s1 + $0xb0] sm:$0xff]
      %v248 = vld [vmem:[%s1 + $0xb8] sm:$0xff]
      %v249 = vld [vmem:[%s1 + $0xc0] sm:$0xff]
      %v250 = vld [vmem:[%s1 + $0xc8] sm:$0xff]
      %v251 = vld [vmem:[%s1 + $0xd0] sm:$0xff]
      %v252 = vld [vmem:[%s1 + $0xd8] sm:$0xff]
      %v253 = vld [vmem:[%s1 + $0xe0] sm:$0xff]
      %v254 = vld [vmem:[%s1 + $0xe8] sm:$0xff]
      %v255 = vld [vmem:[%s1 + $0xf0] sm:$0xff]
      %v256 = vld [vmem:[%s1 + $0xf8] sm:$0xff]
      %v257 = vld [vmem:[%s1 + $0x100] sm:$0xff]
      %v258 = vld [vmem:[%s1 + $0x108] sm:$0xff]
      %v259 = vld [vmem:[%s1 + $0x110] sm:$0xff]
      %v260 = vld [vmem:[%s1 + $0x118] sm:$0xff]
      %v261 = vld [vmem:[%s2] sm:$0x1]
      %v263 = vlaneseq
      %v264 = vshrl.u32 %v263, 7
      %v265 = vsub.s32 0, %v264
      %v266 = vrot.slane %v261, %v265
      %vm268 = vcmask 261120
      %v270 = vsel %vm268, %v179, 0
      %v273 = vsel %vm268, %v182, 0
      %v276 = vsel %vm268, %v185, 0
      %v279 = vsel %vm268, %v188, 0
      %v282 = vsel %vm268, %v191, 0
      %v285 = vsel %vm268, %v194, 0
      %v288 = vsel %vm268, %v197, 0
      %v291 = vsel %vm268, %v200, 0
      %v294 = vsel %vm268, %v203, 0
      %v297 = vsel %vm268, %v206, 0
      %v300 = vsel %vm268, %v209, 0
      %v303 = vsel %vm268, %v212, 0
      %v306 = vsel %vm268, %v215, 0
      %v309 = vsel %vm268, %v218, 0
      %v312 = vsel %vm268, %v221, 0
      %v315 = vsel %vm268, %v224, 0
      %317 = vmatprep.subr.mxu0 0.0
      %318 = vmatpush1.msra.mxu0 %v225
      %319 = vmatprep.subr.mxu0 0.0
      %320 = vmatpush1.msra.mxu0 %v226
      %321 = vmatprep.subr.mxu0 0.0
      %322 = vmatpush1.msra.mxu0 %v227
      %323 = vmatprep.subr.mxu0 0.0
      %324 = vmatpush1.msra.mxu0 %v228
      %325 = vmatprep.subr.mxu0 0.0
      %326 = vmatpush1.msra.mxu0 %v229
      %327 = vmatprep.subr.mxu0 0.0
      %328 = vmatpush1.msra.mxu0 %v230
      %329 = vmatprep.subr.mxu0 0.0
      %330 = vmatpush1.msra.mxu0 %v231
      %331 = vmatprep.subr.mxu0 0.0
      %332 = vmatpush1.msra.mxu0 %v232
      %333 = vmatprep.subr.mxu0 0.0
      %334 = vmatpush1.msra.mxu0 %v233
      %335 = vmatprep.subr.mxu0 0.0
      %336 = vmatpush1.msra.mxu0 %v234
      %337 = vmatprep.subr.mxu0 0.0
      %338 = vmatpush1.msra.mxu0 %v235
      %339 = vmatprep.subr.mxu0 0.0
      %340 = vmatpush1.msra.mxu0 %v236
      %341 = vmatprep.subr.mxu0 0.0
      %342 = vmatpush1.msra.mxu0 %v237
      %343 = vmatprep.subr.mxu0 0.0
      %344 = vmatpush1.msra.mxu0 %v238
      %345 = vmatprep.subr.mxu0 0.0
      %346 = vmatpush1.msra.mxu0 %v239
      %347 = vmatprep.subr.mxu0 0.0
      %348 = vmatpush1.msra.mxu0 %v240
      %349 = vmatprep.subr.mxu0 0.0
      %350 = vmatpush1.msra.mxu0 %v241
      %351 = vmatprep.subr.mxu0 0.0
      %352 = vmatpush1.msra.mxu0 %v242
      %353 = vmatprep.subr.mxu0 0.0
      %354 = vmatpush1.msra.mxu0 %v243
      %355 = vmatprep.subr.mxu0 0.0
      %356 = vmatpush1.msra.mxu0 %v244
      %357 = vmatprep.subr.mxu0 0.0
      %358 = vmatpush1.msra.mxu0 %v245
      %359 = vmatprep.subr.mxu0 0.0
      %360 = vmatpush1.msra.mxu0 %v246
      %361 = vmatprep.subr.mxu0 0.0
      %362 = vmatpush1.msra.mxu0 %v247
      %363 = vmatprep.subr.mxu0 0.0
      %364 = vmatpush1.msra.mxu0 %v248
      %365 = vmatprep.subr.mxu0 0.0
      %366 = vmatpush1.msra.mxu0 %v249
      %367 = vmatprep.subr.mxu0 0.0
      %368 = vmatpush1.msra.mxu0 %v250
      %369 = vmatprep.subr.mxu0 0.0
      %370 = vmatpush1.msra.mxu0 %v251
      %371 = vmatprep.subr.mxu0 0.0
      %372 = vmatpush1.msra.mxu0 %v252
      %373 = vmatprep.subr.mxu0 0.0
      %374 = vmatpush1.msra.mxu0 %v253
      %375 = vmatprep.subr.mxu0 0.0
      %376 = vmatpush1.msra.mxu0 %v254
      %377 = vmatprep.subr.mxu0 0.0
      %378 = vmatpush1.msra.mxu0 %v255
      %379 = vmatprep.subr.mxu0 0.0
      %380 = vmatpush1.msra.mxu0 %v256
      %381 = vmatprep.mubr.f32.mxu0 %v178
      %382 = vmatmul.mubr.f32.gmra.mrb[0].mxu0 %v177
      %v383 = vpop.f32.mrb[0].mxu0
      %v384 = vadd.f32 %v266, %v383
      %v385 = vpop.f32.mrb[0].mxu0
      %386 = vmatprep.mubr.f32.mxu0 %v181
      %387 = vmatmul.mubr.f32.gmra.mrb[0].mxu0 %v180
      %v388 = vpop.f32.mrb[0].mxu0
      %v389 = vadd.f32 %v266, %v388
      %v390 = vpop.f32.mrb[0].mxu0
      %391 = vmatprep.mubr.f32.mxu0 %v184
      %392 = vmatmul.mubr.f32.gmra.mrb[0].mxu0 %v183
      %v393 = vpop.f32.mrb[0].mxu0
      %v394 = vadd.f32 %v266, %v393
      %v395 = vpop.f32.mrb[0].mxu0
      %396 = vmatprep.mubr.f32.mxu0 %v187
      %397 = vmatmul.mubr.f32.gmra.mrb[0].mxu0 %v186
      %v398 = vpop.f32.mrb[0].mxu0
      %v399 = vadd.f32 %v266, %v398
      %v400 = vpop.f32.mrb[0].mxu0
      %401 = vmatprep.mubr.f32.mxu0 %v190
      %402 = vmatmul.mubr.f32.gmra.mrb[0].mxu0 %v189
      %v403 = vpop.f32.mrb[0].mxu0
      %v404 = vadd.f32 %v266, %v403
      %v405 = vpop.f32.mrb[0].mxu0
      %406 = vmatprep.mubr.f32.mxu0 %v193
      %407 = vmatmul.mubr.f32.gmra.mrb[0].mxu0 %v192
      %v408 = vpop.f32.mrb[0].mxu0
      %v409 = vadd.f32 %v266, %v408
      %v410 = vpop.f32.mrb[0].mxu0
      %411 = vmatprep.mubr.f32.mxu0 %v196
      %412 = vmatmul.mubr.f32.gmra.mrb[0].mxu0 %v195
      %v413 = vpop.f32.mrb[0].mxu0
      %v414 = vadd.f32 %v266, %v413
      %v415 = vpop.f32.mrb[0].mxu0
      %416 = vmatprep.mubr.f32.mxu0 %v199
      %417 = vmatmul.mubr.f32.gmra.mrb[0].mxu0 %v198
      %v418 = vpop.f32.mrb[0].mxu0
      %v419 = vadd.f32 %v266, %v418
      %v420 = vpop.f32.mrb[0].mxu0
      %421 = vmatprep.mubr.f32.mxu0 %v202
      %422 = vmatmul.mubr.f32.gmra.mrb[0].mxu0 %v201
      %v423 = vpop.f32.mrb[0].mxu0
      %v424 = vadd.f32 %v266, %v423
      %v425 = vpop.f32.mrb[0].mxu0
      %426 = vmatprep.mubr.f32.mxu0 %v205
      %427 = vmatmul.mubr.f32.gmra.mrb[0].mxu0 %v204
      %v428 = vpop.f32.mrb[0].mxu0
      %v429 = vadd.f32 %v266, %v428
      %v430 = vpop.f32.mrb[0].mxu0
      %431 = vmatprep.mubr.f32.mxu0 %v208
      %432 = vmatmul.mubr.f32.gmra.mrb[0].mxu0 %v207
      %v433 = vpop.f32.mrb[0].mxu0
      %v434 = vadd.f32 %v266, %v433
      %v435 = vpop.f32.mrb[0].mxu0
      %436 = vmatprep.mubr.f32.mxu0 %v211
      %437 = vmatmul.mubr.f32.gmra.mrb[0].mxu0 %v210
      %v438 = vpop.f32.mrb[0].mxu0
      %v439 = vadd.f32 %v266, %v438
      %v440 = vpop.f32.mrb[0].mxu0
      %441 = vmatprep.mubr.f32.mxu0 %v214
      %442 = vmatmul.mubr.f32.gmra.mrb[0].mxu0 %v213
      %v443 = vpop.f32.mrb[0].mxu0
      %v444 = vadd.f32 %v266, %v443
      %v445 = vpop.f32.mrb[0].mxu0
      %446 = vmatprep.mubr.f32.mxu0 %v217
      %447 = vmatmul.mubr.f32.gmra.mrb[0].mxu0 %v216
      %v448 = vpop.f32.mrb[0].mxu0
      %v449 = vadd.f32 %v266, %v448
      %v450 = vpop.f32.mrb[0].mxu0
      %451 = vmatprep.mubr.f32.mxu0 %v220
      %452 = vmatmul.mubr.f32.gmra.mrb[0].mxu0 %v219
      %v453 = vpop.f32.mrb[0].mxu0
      %v454 = vadd.f32 %v266, %v453
      %v455 = vpop.f32.mrb[0].mxu0
      %456 = vmatprep.mubr.f32.mxu0 %v223
      %457 = vmatmul.mubr.f32.gmra.mrb[0].mxu0 %v222
      %v458 = vpop.f32.mrb[0].mxu0
      %v459 = vadd.f32 %v266, %v458
      %v460 = vpop.f32.mrb[0].mxu0
      %461 = vdwg.mxu0
      %462 = vmatprep.subr.mxu0 0.0
      %463 = vmatpush1.msra.mxu0 %v257
      %464 = vmatprep.subr.mxu0 0.0
      %465 = vmatpush1.msra.mxu0 %v258
      %466 = vmatprep.subr.mxu0 0.0
      %467 = vmatpush1.msra.mxu0 %v259
      %468 = vmatprep.subr.mxu0 0.0
      %469 = vmatpush1.msra.mxu0 %v260
      %470 = vmatprep.subr.mxu0 0.0
      %471 = vmatpush1.msra.mxu0 0.0
      %472 = vmatprep.subr.mxu0 0.0
      %473 = vmatpush1.msra.mxu0 0.0
      %474 = vmatprep.subr.mxu0 0.0
      %475 = vmatpush1.msra.mxu0 0.0
      %476 = vmatprep.subr.mxu0 0.0
      %477 = vmatpush1.msra.mxu0 0.0
      %478 = vmatprep.subr.mxu0 0.0
      %479 = vmatpush1.msra.mxu0 0.0
      %480 = vmatprep.subr.mxu0 0.0
      %481 = vmatpush1.msra.mxu0 0.0
      %482 = vmatprep.subr.mxu0 0.0
      %483 = vmatpush1.msra.mxu0 0.0
      %484 = vmatprep.subr.mxu0 0.0
      %485 = vmatpush1.msra.mxu0 0.0
      %486 = vmatprep.subr.mxu0 0.0
      %487 = vmatpush1.msra.mxu0 0.0
      %488 = vmatprep.subr.mxu0 0.0
      %489 = vmatpush1.msra.mxu0 0.0
      %490 = vmatprep.subr.mxu0 0.0
      %491 = vmatpush1.msra.mxu0 0.0
      %492 = vmatprep.subr.mxu0 0.0
      %493 = vmatpush1.msra.mxu0 0.0
      %494 = vmatprep.subr.mxu0 0.0
      %495 = vmatpush1.msra.mxu0 0.0
      %496 = vmatprep.subr.mxu0 0.0
      %497 = vmatpush1.msra.mxu0 0.0
      %498 = vmatprep.subr.mxu0 0.0
      %499 = vmatpush1.msra.mxu0 0.0
      %500 = vmatprep.subr.mxu0 0.0
      %501 = vmatpush1.msra.mxu0 0.0
      %502 = vmatprep.subr.mxu0 0.0
      %503 = vmatpush1.msra.mxu0 0.0
      %504 = vmatprep.subr.mxu0 0.0
      %505 = vmatpush1.msra.mxu0 0.0
      %506 = vmatprep.subr.mxu0 0.0
      %507 = vmatpush1.msra.mxu0 0.0
      %508 = vmatprep.subr.mxu0 0.0
      %509 = vmatpush1.msra.mxu0 0.0
      %510 = vmatprep.subr.mxu0 0.0
      %511 = vmatpush1.msra.mxu0 0.0
      %512 = vmatprep.subr.mxu0 0.0
      %513 = vmatpush1.msra.mxu0 0.0
      %514 = vmatprep.subr.mxu0 0.0
      %515 = vmatpush1.msra.mxu0 0.0
      %516 = vmatprep.subr.mxu0 0.0
      %517 = vmatpush1.msra.mxu0 0.0
      %518 = vmatprep.subr.mxu0 0.0
      %519 = vmatpush1.msra.mxu0 0.0
      %520 = vmatprep.subr.mxu0 0.0
      %521 = vmatpush1.msra.mxu0 0.0
      %522 = vmatprep.subr.mxu0 0.0
      %523 = vmatpush1.msra.mxu0 0.0
      %524 = vmatprep.subr.mxu0 0.0
      %525 = vmatpush1.msra.mxu0 0.0
      %526 = vmatprep.mubr.f32.mxu0 0.0
      %527 = vmatmul.mubr.f32.gmra.mrb[0].mxu0 %v270
      %v528 = vpop.f32.mrb[0].mxu0
      %v529 = vadd.f32 %v384, %v528
      %v530 = vpop.f32.mrb[0].mxu0
      %531 = vmatprep.mubr.f32.mxu0 0.0
      %532 = vmatmul.mubr.f32.gmra.mrb[0].mxu0 %v273
      %v533 = vpop.f32.mrb[0].mxu0
      %v534 = vadd.f32 %v389, %v533
      %v535 = vpop.f32.mrb[0].mxu0
      %536 = vmatprep.mubr.f32.mxu0 0.0
      %537 = vmatmul.mubr.f32.gmra.mrb[0].mxu0 %v276
      %v538 = vpop.f32.mrb[0].mxu0
      %v539 = vadd.f32 %v394, %v538
      %v540 = vpop.f32.mrb[0].mxu0
      %541 = vmatprep.mubr.f32.mxu0 0.0
      %542 = vmatmul.mubr.f32.gmra.mrb[0].mxu0 %v279
      %v543 = vpop.f32.mrb[0].mxu0
      %v544 = vadd.f32 %v399, %v543
      %v545 = vpop.f32.mrb[0].mxu0
      %546 = vmatprep.mubr.f32.mxu0 0.0
      %547 = vmatmul.mubr.f32.gmra.mrb[0].mxu0 %v282
      %v548 = vpop.f32.mrb[0].mxu0
      %v549 = vadd.f32 %v404, %v548
      %v550 = vpop.f32.mrb[0].mxu0
      %551 = vmatprep.mubr.f32.mxu0 0.0
      %552 = vmatmul.mubr.f32.gmra.mrb[0].mxu0 %v285
      %v553 = vpop.f32.mrb[0].mxu0
      %v554 = vadd.f32 %v409, %v553
      %v555 = vpop.f32.mrb[0].mxu0
      %556 = vmatprep.mubr.f32.mxu0 0.0
      %557 = vmatmul.mubr.f32.gmra.mrb[0].mxu0 %v288
      %v558 = vpop.f32.mrb[0].mxu0
      %v559 = vadd.f32 %v414, %v558
      %v560 = vpop.f32.mrb[0].mxu0
      %561 = vmatprep.mubr.f32.mxu0 0.0
      %562 = vmatmul.mubr.f32.gmra.mrb[0].mxu0 %v291
      %v563 = vpop.f32.mrb[0].mxu0
      %v564 = vadd.f32 %v419, %v563
      %v565 = vpop.f32.mrb[0].mxu0
      %566 = vmatprep.mubr.f32.mxu0 0.0
      %567 = vmatmul.mubr.f32.gmra.mrb[0].mxu0 %v294
      %v568 = vpop.f32.mrb[0].mxu0
      %v569 = vadd.f32 %v424, %v568
      %v570 = vpop.f32.mrb[0].mxu0
      %571 = vmatprep.mubr.f32.mxu0 0.0
      %572 = vmatmul.mubr.f32.gmra.mrb[0].mxu0 %v297
      %v573 = vpop.f32.mrb[0].mxu0
      %v574 = vadd.f32 %v429, %v573
      %v575 = vpop.f32.mrb[0].mxu0
      %576 = vmatprep.mubr.f32.mxu0 0.0
      %577 = vmatmul.mubr.f32.gmra.mrb[0].mxu0 %v300
      %v578 = vpop.f32.mrb[0].mxu0
      %v579 = vadd.f32 %v434, %v578
      %v580 = vpop.f32.mrb[0].mxu0
      %581 = vmatprep.mubr.f32.mxu0 0.0
      %582 = vmatmul.mubr.f32.gmra.mrb[0].mxu0 %v303
      %v583 = vpop.f32.mrb[0].mxu0
      %v584 = vadd.f32 %v439, %v583
      %v585 = vpop.f32.mrb[0].mxu0
      %586 = vmatprep.mubr.f32.mxu0 0.0
      %587 = vmatmul.mubr.f32.gmra.mrb[0].mxu0 %v306
      %v588 = vpop.f32.mrb[0].mxu0
      %v589 = vadd.f32 %v444, %v588
      %v590 = vpop.f32.mrb[0].mxu0
      %591 = vmatprep.mubr.f32.mxu0 0.0
      %592 = vmatmul.mubr.f32.gmra.mrb[0].mxu0 %v309
      %v593 = vpop.f32.mrb[0].mxu0
      %v594 = vadd.f32 %v449, %v593
      %v595 = vpop.f32.mrb[0].mxu0
      %596 = vmatprep.mubr.f32.mxu0 0.0
      %597 = vmatmul.mubr.f32.gmra.mrb[0].mxu0 %v312
      %v598 = vpop.f32.mrb[0].mxu0
      %v599 = vadd.f32 %v454, %v598
      %v600 = vpop.f32.mrb[0].mxu0
      %601 = vmatprep.mubr.f32.mxu0 0.0
      %602 = vmatmul.mubr.f32.gmra.mrb[0].mxu0 %v315
      %v603 = vpop.f32.mrb[0].mxu0
      %v604 = vadd.f32 %v459, %v603
      %v605 = vpop.f32.mrb[0].mxu0
      %606 = vdwg.mxu0
      %vm607 = vcmask 130048
      %608 = vst.msk [vmem:[%s175] sm:$0xff] %vm607, %v529
      %609 = vst.msk [vmem:[%s175 + $0x8] sm:$0xff] %vm607, %v534
      %610 = vst.msk [vmem:[%s175 + $0x10] sm:$0xff] %vm607, %v539
      %611 = vst.msk [vmem:[%s175 + $0x18] sm:$0xff] %vm607, %v544
      %612 = vst.msk [vmem:[%s175 + $0x20] sm:$0xff] %vm607, %v549
      %613 = vst.msk [vmem:[%s175 + $0x28] sm:$0xff] %vm607, %v554
      %614 = vst.msk [vmem:[%s175 + $0x30] sm:$0xff] %vm607, %v559
      %615 = vst.msk [vmem:[%s175 + $0x38] sm:$0xff] %vm607, %v564
      %616 = vst.msk [vmem:[%s175 + $0x40] sm:$0xff] %vm607, %v569
      %617 = vst.msk [vmem:[%s175 + $0x48] sm:$0xff] %vm607, %v574
      %618 = vst.msk [vmem:[%s175 + $0x50] sm:$0xff] %vm607, %v579
      %619 = vst.msk [vmem:[%s175 + $0x58] sm:$0xff] %vm607, %v584
      %620 = vst.msk [vmem:[%s175 + $0x60] sm:$0xff] %vm607, %v589
      %621 = vst.msk [vmem:[%s175 + $0x68] sm:$0xff] %vm607, %v594
      %622 = vst.msk [vmem:[%s175 + $0x70] sm:$0xff] %vm607, %v599
      %623 = vst.msk [vmem:[%s175 + $0x78] sm:$0xff] %vm607, %v604
      %s624 = smul.u32 16, %s14
      %p625 = scmp.lt.s32.totalorder %s624, 191
      %s626 = scalar_select %p625, %s624, 191
      %s627 = smul.addr %s626, 8
      %s628 = scalar_lea.vmem %s3, %s627
      // Predicated region
      $region33: #{forward.8} parent=31 // pred_check
        %p629 = pneg %p100
      $region34: #{forward.8} parent=31 // pred_check_branch
        %631 = sbr.rel (%p629) target = $region36
      $region35: #{forward.8} parent=31 // pred_region
        %s632 = smul.u32 16, %s14
      $region36: #{forward.8} parent=31 // pred_fallthru
        _
    $region32: #{forward.8} parent=5 // pred_fallthru
      _
    %p633 = scmp.le.s32.totalorder 2, %s9
    // Predicated region
    $region37: #{forward.8} parent=5 // pred_check
      %p634 = pneg %p633
    $region38: #{forward.8} parent=5 // pred_check_branch
      %636 = sbr.rel (%p634) target = $region40
    $region39: #{forward.8} parent=5 // pred_region
      %s637 = ssub.s32 %s9, 2
      // Predicated region
      $region41: #{forward.8} parent=39 // pred_check
        %p638 = pneg %p106
      $region42: #{forward.8} parent=39 // pred_check_branch
        %640 = sbr.rel (%p638) target = $region44
      $region43: #{forward.8} parent=39 // pred_region
        %s641 = smul.u32 16, %s15
        %p642 = scmp.lt.s32.totalorder %s641, 191
        %s643 = scalar_select %p642, %s641, 191
        %s644 = smul.addr %s643, 8
        %s645 = scalar_lea.vmem %s3, %s644
      $region44: #{forward.8} parent=39 // pred_fallthru
        _
    $region40: #{forward.8} parent=5 // pred_fallthru
      _
  $region6: #{forward.8} parent=0 // loop_footer
    %s13 = sadd.s32 1, %s9
  $region7: #{forward.8} parent=0 // loop_footer_branch
    %8 = sbr.rel target = $region3
  $region8: #{forward.8} parent=0 // loop_exit
    _

// kernel: forward.9
$region0: #{forward.9}
  #allocation0 [shape = 'u32[]', space=smem, size = 0x4, offset = 0x4, fixed_abs, tag = 'smem constant byte address 0x4 - core index']
  #allocation1 [shape = 'u32[144,128]{1,0:T(1,128)}', space=vmem, size = 0x12000, scoped, tag = 'internal scratch']
  %s0 = inlined_call_operand.vmem [shape: f32[1664,144], index: 0, kind: input, shape index: {}]
  %s1 = inlined_call_operand.vmem [shape: f32[144,128], index: 1, kind: input, shape index: {}]
  %s2 = inlined_call_operand.vmem [shape: f32[1,128], index: 2, kind: input, shape index: {}]
  %s3 = inlined_call_operand.vmem [shape: f32[1664,128], index: 3, kind: output, shape index: {}]
  %s4 = sld [smem:[#allocation0]]
  $region45: #{forward.9} parent=0
    _
  %s6 = ssub.s32 1, %s4
  %s7 = scalar_select 0, %s6, %s4
  loop: start=0, step=1, limit=15
  $region2: #{forward.9} parent=0 // loop_pre_header
    _
  $region3: #{forward.9} parent=0 // loop_header
    %s9 = sphi 0, %s13
    %p10 = scmp.ge.s32.totalorder %s9, 15
    %s19 = sphi 0, %s21
    %s22 = sphi 0, %s19
    %s23 = sphi 0, %s22
    %s39 = sphi 0, %s23
    %s43 = sphi 0, %s43
    %s45 = sphi 0, %s43
    %s46 = sphi 0, %s45
    %s60 = sphi 0, %s46
    %s64 = sphi 0, %s64
    %s66 = sphi 0, %s64
    %s67 = sphi 0, %s66
    %s81 = sphi 0, %s67
    %s87 = sphi 0, %s89
    %s90 = sphi 0, %s87
    %s91 = sphi 0, %s90
    %s107 = sphi 0, %s91
  $region4: #{forward.9} parent=0 // loop_header_branch
    %12 = sbr.rel (%p10) target = $region8
  $region5: #{forward.9} parent=0 // loop_body
    %s14 = ssub.s32 %s9, 1
    %s15 = ssub.s32 %s9, 2
    %s16 = sadd.s32 %s9, 1
    %s17 = ssub.s32 %s9, %s16
    %p18 = scmp.eq.s32.totalorder %s17, 0
    %s20 = sadd.s32 %s19, 1
    %s21 = scalar_select %p18, %s19, %s20
    %p24 = pneg %p18
    %p25 = scmp.eq.s32.totalorder %s9, 12
    %p26 = por %p24, %p25
    %p27 = scmp.ne.s32.totalorder %s19, %s22
    %p28 = scmp.eq.s32.totalorder %s9, 0
    %p29 = por %p27, %p28
    %p30 = scmp.ne.s32.totalorder %s19, %s22
    %p31 = scmp.eq.s32.totalorder %s14, 12
    %p32 = por %p30, %p31
    %p33 = scmp.ne.s32.totalorder %s22, %s23
    %p34 = scmp.eq.s32.totalorder %s14, 0
    %p35 = por %p33, %p34
    %p36 = scmp.ne.s32.totalorder %s22, %s23
    %p37 = scmp.eq.s32.totalorder %s15, 12
    %p38 = por %p36, %p37
    %p40 = scmp.ne.s32.totalorder %s23, %s39
    %p41 = scmp.eq.s32.totalorder %s15, 0
    %p42 = por %p40, %p41
    %s44 = sadd.s32 %s43, 1
    %p47 = scmp.eq.s32.totalorder %s9, 12
    %p48 = scmp.ne.s32.totalorder %s43, %s45
    %p49 = scmp.eq.s32.totalorder %s9, 0
    %p50 = por %p48, %p49
    %p51 = scmp.ne.s32.totalorder %s43, %s45
    %p52 = scmp.eq.s32.totalorder %s14, 12
    %p53 = por %p51, %p52
    %p54 = scmp.ne.s32.totalorder %s45, %s46
    %p55 = scmp.eq.s32.totalorder %s14, 0
    %p56 = por %p54, %p55
    %p57 = scmp.ne.s32.totalorder %s45, %s46
    %p58 = scmp.eq.s32.totalorder %s15, 12
    %p59 = por %p57, %p58
    %p61 = scmp.ne.s32.totalorder %s46, %s60
    %p62 = scmp.eq.s32.totalorder %s15, 0
    %p63 = por %p61, %p62
    %s65 = sadd.s32 %s64, 1
    %p68 = scmp.eq.s32.totalorder %s9, 12
    %p69 = scmp.ne.s32.totalorder %s64, %s66
    %p70 = scmp.eq.s32.totalorder %s9, 0
    %p71 = por %p69, %p70
    %p72 = scmp.ne.s32.totalorder %s64, %s66
    %p73 = scmp.eq.s32.totalorder %s14, 12
    %p74 = por %p72, %p73
    %p75 = scmp.ne.s32.totalorder %s66, %s67
    %p76 = scmp.eq.s32.totalorder %s14, 0
    %p77 = por %p75, %p76
    %p78 = scmp.ne.s32.totalorder %s66, %s67
    %p79 = scmp.eq.s32.totalorder %s15, 12
    %p80 = por %p78, %p79
    %p82 = scmp.ne.s32.totalorder %s67, %s81
    %p83 = scmp.eq.s32.totalorder %s15, 0
    %p84 = por %p82, %p83
    %s85 = ssub.s32 %s9, %s16
    %p86 = scmp.eq.s32.totalorder %s85, 0
    %s88 = sadd.s32 %s87, 1
    %s89 = scalar_select %p86, %s87, %s88
    %p92 = pneg %p86
    %p93 = scmp.eq.s32.totalorder %s9, 12
    %p94 = por %p92, %p93
    %p95 = scmp.ne.s32.totalorder %s87, %s90
    %p96 = scmp.eq.s32.totalorder %s9, 0
    %p97 = por %p95, %p96
    %p98 = scmp.ne.s32.totalorder %s87, %s90
    %p99 = scmp.eq.s32.totalorder %s14, 12
    %p100 = por %p98, %p99
    %p101 = scmp.ne.s32.totalorder %s90, %s91
    %p102 = scmp.eq.s32.totalorder %s14, 0
    %p103 = por %p101, %p102
    %p104 = scmp.ne.s32.totalorder %s90, %s91
    %p105 = scmp.eq.s32.totalorder %s15, 12
    %p106 = por %p104, %p105
    %p108 = scmp.ne.s32.totalorder %s91, %s107
    %p109 = scmp.eq.s32.totalorder %s15, 0
    %p110 = por %p108, %p109
    %p111 = scmp.le.s32.totalorder 1, %s9
    %p112 = scmp.lt.s32.totalorder %s9, 14
    %p113 = pnand %p111, %p112
    %p114 = pneg %p113
    // Predicated region
    $region9: #{forward.9} parent=5 // pred_check
      _
    $region10: #{forward.9} parent=5 // pred_check_branch
      %116 = sbr.rel (%p113) target = $region12
    $region11: #{forward.9} parent=5 // pred_region
      %s117 = ssub.s32 %s9, 1
      // Predicated region
      $region13: #{forward.9} parent=11 // pred_check
        %p118 = pneg %p56
      $region14: #{forward.9} parent=11 // pred_check_branch
        %120 = sbr.rel (%p118) target = $region16
      $region15: #{forward.9} parent=11 // pred_region
        _
      $region16: #{forward.9} parent=11 // pred_fallthru
        _
      // Predicated region
      $region17: #{forward.9} parent=11 // pred_check
        %p121 = pneg %p77
      $region18: #{forward.9} parent=11 // pred_check_branch
        %123 = sbr.rel (%p121) target = $region20
      $region19: #{forward.9} parent=11 // pred_region
        _
      $region20: #{forward.9} parent=11 // pred_fallthru
        _
    $region12: #{forward.9} parent=5 // pred_fallthru
      _
    %p124 = scmp.lt.s32.totalorder %s9, 13
    // Predicated region
    $region21: #{forward.9} parent=5 // pred_check
      %p125 = pneg %p124
    $region22: #{forward.9} parent=5 // pred_check_branch
      %127 = sbr.rel (%p125) target = $region24
    $region23: #{forward.9} parent=5 // pred_region
      // Predicated region
      $region25: #{forward.9} parent=23 // pred_check
        %p128 = pneg %p29
      $region26: #{forward.9} parent=23 // pred_check_branch
        %130 = sbr.rel (%p128) target = $region28
      $region27: #{forward.9} parent=23 // pred_region
        %s131 = smul.u32 16, %s9
        %p132 = scmp.lt.s32.totalorder %s131, 207
        %s133 = scalar_select %p132, %s131, 207
        %s134 = smul.addr %s133, 2
        %s135 = smul.addr %s134, 8
        %s136 = scalar_lea.vmem %s0, %s135
        %s137 = smul.u32 16, %s9
      $region28: #{forward.9} parent=23 // pred_fallthru
        _
    $region24: #{forward.9} parent=5 // pred_fallthru
      _
    %p138 = scmp.le.s32.totalorder 1, %s9
    %p139 = scmp.lt.s32.totalorder %s9, 14
    %p140 = pnand %p138, %p139
    %p141 = pneg %p140
    // Predicated region
    $region29: #{forward.9} parent=5 // pred_check
      _
    $region30: #{forward.9} parent=5 // pred_check_branch
      %143 = sbr.rel (%p140) target = $region32
    $region31: #{forward.9} parent=5 // pred_region
      %s144 = ssub.s32 %s9, 1
      %s145 = smul.u32 16, %s14
      %p146 = scmp.lt.s32.totalorder %s145, 207
      %s147 = scalar_select %p146, %s145, 207
      %s148 = smul.addr %s147, 2
      %s149 = smul.addr %s148, 8
      %s150 = scalar_lea.vmem %s0, %s149
      %p151 = pneg %p35
      %p152 = pneg %p32
      %p153 = pneg %p56
      %p154 = pneg %p53
      %p155 = pneg %p77
      %p156 = pneg %p74
      %p157 = pneg %p103
      %p158 = pneg %p100
      %s159 = smul.u32 16, %s14
      %p160 = scmp.lt.s32.totalorder %s159, 207
      %s161 = scalar_select %p160, %s159, 207
      %s162 = smul.addr %s161, 8
      %s163 = scalar_lea.vmem %s3, %s162
      %s164 = smul.u32 16, %s14
      %p165 = scmp.lt.s32.totalorder %s164, 207
      %s166 = scalar_select %p165, %s164, 207
      %s167 = smul.addr %s166, 2
      %s168 = smul.addr %s167, 8
      %s169 = scalar_lea.vmem %s0, %s168
      %s170 = smul.u32 16, %s14
      %s171 = smul.u32 16, %s14
      %p172 = scmp.lt.s32.totalorder %s171, 207
      %s173 = scalar_select %p172, %s171, 207
      %s174 = smul.addr %s173, 8
      %s175 = scalar_lea.vmem %s3, %s174
      %s176 = smul.u32 16, %s14
      %v177 = vld [vmem:[%s169] sm:$0xff]
      %v178 = vld [vmem:[%s169 + $0x8] sm:$0xff]
      %v179 = vld [vmem:[%s169 + $0x10] sm:$0xff]
      %v180 = vld [vmem:[%s169 + $0x18] sm:$0xff]
      %v181 = vld [vmem:[%s169 + $0x20] sm:$0xff]
      %v182 = vld [vmem:[%s169 + $0x28] sm:$0xff]
      %v183 = vld [vmem:[%s169 + $0x30] sm:$0xff]
      %v184 = vld [vmem:[%s169 + $0x38] sm:$0xff]
      %v185 = vld [vmem:[%s169 + $0x40] sm:$0xff]
      %v186 = vld [vmem:[%s169 + $0x48] sm:$0xff]
      %v187 = vld [vmem:[%s169 + $0x50] sm:$0xff]
      %v188 = vld [vmem:[%s169 + $0x58] sm:$0xff]
      %v189 = vld [vmem:[%s169 + $0x60] sm:$0xff]
      %v190 = vld [vmem:[%s169 + $0x68] sm:$0xff]
      %v191 = vld [vmem:[%s169 + $0x70] sm:$0xff]
      %v192 = vld [vmem:[%s169 + $0x78] sm:$0xff]
      %v193 = vld [vmem:[%s169 + $0x80] sm:$0xff]
      %v194 = vld [vmem:[%s169 + $0x88] sm:$0xff]
      %v195 = vld [vmem:[%s169 + $0x90] sm:$0xff]
      %v196 = vld [vmem:[%s169 + $0x98] sm:$0xff]
      %v197 = vld [vmem:[%s169 + $0xa0] sm:$0xff]
      %v198 = vld [vmem:[%s169 + $0xa8] sm:$0xff]
      %v199 = vld [vmem:[%s169 + $0xb0] sm:$0xff]
      %v200 = vld [vmem:[%s169 + $0xb8] sm:$0xff]
      %v201 = vld [vmem:[%s169 + $0xc0] sm:$0xff]
      %v202 = vld [vmem:[%s169 + $0xc8] sm:$0xff]
      %v203 = vld [vmem:[%s169 + $0xd0] sm:$0xff]
      %v204 = vld [vmem:[%s169 + $0xd8] sm:$0xff]
      %v205 = vld [vmem:[%s169 + $0xe0] sm:$0xff]
      %v206 = vld [vmem:[%s169 + $0xe8] sm:$0xff]
      %v207 = vld [vmem:[%s169 + $0xf0] sm:$0xff]
      %v208 = vld [vmem:[%s169 + $0xf8] sm:$0xff]
      %v209 = vld [vmem:[%s1] sm:$0xff]
      %v210 = vld [vmem:[%s1 + $0x8] sm:$0xff]
      %v211 = vld [vmem:[%s1 + $0x10] sm:$0xff]
      %v212 = vld [vmem:[%s1 + $0x18] sm:$0xff]
      %v213 = vld [vmem:[%s1 + $0x20] sm:$0xff]
      %v214 = vld [vmem:[%s1 + $0x28] sm:$0xff]
      %v215 = vld [vmem:[%s1 + $0x30] sm:$0xff]
      %v216 = vld [vmem:[%s1 + $0x38] sm:$0xff]
      %v217 = vld [vmem:[%s1 + $0x40] sm:$0xff]
      %v218 = vld [vmem:[%s1 + $0x48] sm:$0xff]
      %v219 = vld [vmem:[%s1 + $0x50] sm:$0xff]
      %v220 = vld [vmem:[%s1 + $0x58] sm:$0xff]
      %v221 = vld [vmem:[%s1 + $0x60] sm:$0xff]
      %v222 = vld [vmem:[%s1 + $0x68] sm:$0xff]
      %v223 = vld [vmem:[%s1 + $0x70] sm:$0xff]
      %v224 = vld [vmem:[%s1 + $0x78] sm:$0xff]
      %v225 = vld [vmem:[%s1 + $0x80] sm:$0xff]
      %v226 = vld [vmem:[%s1 + $0x88] sm:$0xff]
      %v227 = vld [vmem:[%s2] sm:$0x1]
      %v229 = vlaneseq
      %v230 = vshrl.u32 %v229, 7
      %v231 = vsub.s32 0, %v230
      %v232 = vrot.slane %v227, %v231
      %vm234 = vcmask 130048
      %v236 = vsel %vm234, %v178, 0
      %v239 = vsel %vm234, %v180, 0
      %v242 = vsel %vm234, %v182, 0
      %v245 = vsel %vm234, %v184, 0
      %v248 = vsel %vm234, %v186, 0
      %v251 = vsel %vm234, %v188, 0
      %v254 = vsel %vm234, %v190, 0
      %v257 = vsel %vm234, %v192, 0
      %v260 = vsel %vm234, %v194, 0
      %v263 = vsel %vm234, %v196, 0
      %v266 = vsel %vm234, %v198, 0
      %v269 = vsel %vm234, %v200, 0
      %v272 = vsel %vm234, %v202, 0
      %v275 = vsel %vm234, %v204, 0
      %v278 = vsel %vm234, %v206, 0
      %v281 = vsel %vm234, %v208, 0
      %283 = vmatprep.subr.mxu0 0.0
      %284 = vmatpush1.msra.mxu0 %v209
      %285 = vmatprep.subr.mxu0 0.0
      %286 = vmatpush1.msra.mxu0 %v210
      %287 = vmatprep.subr.mxu0 0.0
      %288 = vmatpush1.msra.mxu0 %v211
      %289 = vmatprep.subr.mxu0 0.0
      %290 = vmatpush1.msra.mxu0 %v212
      %291 = vmatprep.subr.mxu0 0.0
      %292 = vmatpush1.msra.mxu0 %v213
      %293 = vmatprep.subr.mxu0 0.0
      %294 = vmatpush1.msra.mxu0 %v214
      %295 = vmatprep.subr.mxu0 0.0
      %296 = vmatpush1.msra.mxu0 %v215
      %297 = vmatprep.subr.mxu0 0.0
      %298 = vmatpush1.msra.mxu0 %v216
      %299 = vmatprep.subr.mxu0 0.0
      %300 = vmatpush1.msra.mxu0 %v217
      %301 = vmatprep.subr.mxu0 0.0
      %302 = vmatpush1.msra.mxu0 %v218
      %303 = vmatprep.subr.mxu0 0.0
      %304 = vmatpush1.msra.mxu0 %v219
      %305 = vmatprep.subr.mxu0 0.0
      %306 = vmatpush1.msra.mxu0 %v220
      %307 = vmatprep.subr.mxu0 0.0
      %308 = vmatpush1.msra.mxu0 %v221
      %309 = vmatprep.subr.mxu0 0.0
      %310 = vmatpush1.msra.mxu0 %v222
      %311 = vmatprep.subr.mxu0 0.0
      %312 = vmatpush1.msra.mxu0 %v223
      %313 = vmatprep.subr.mxu0 0.0
      %314 = vmatpush1.msra.mxu0 %v224
      %315 = vmatprep.subr.mxu0 0.0
      %316 = vmatpush1.msra.mxu0 %v225
      %317 = vmatprep.subr.mxu0 0.0
      %318 = vmatpush1.msra.mxu0 %v226
      %319 = vmatprep.subr.mxu0 0.0
      %320 = vmatpush1.msra.mxu0 0.0
      %321 = vmatprep.subr.mxu0 0.0
      %322 = vmatpush1.msra.mxu0 0.0
      %323 = vmatprep.subr.mxu0 0.0
      %324 = vmatpush1.msra.mxu0 0.0
      %325 = vmatprep.subr.mxu0 0.0
      %326 = vmatpush1.msra.mxu0 0.0
      %327 = vmatprep.subr.mxu0 0.0
      %328 = vmatpush1.msra.mxu0 0.0
      %329 = vmatprep.subr.mxu0 0.0
      %330 = vmatpush1.msra.mxu0 0.0
      %331 = vmatprep.subr.mxu0 0.0
      %332 = vmatpush1.msra.mxu0 0.0
      %333 = vmatprep.subr.mxu0 0.0
      %334 = vmatpush1.msra.mxu0 0.0
      %335 = vmatprep.subr.mxu0 0.0
      %336 = vmatpush1.msra.mxu0 0.0
      %337 = vmatprep.subr.mxu0 0.0
      %338 = vmatpush1.msra.mxu0 0.0
      %339 = vmatprep.subr.mxu0 0.0
      %340 = vmatpush1.msra.mxu0 0.0
      %341 = vmatprep.subr.mxu0 0.0
      %342 = vmatpush1.msra.mxu0 0.0
      %343 = vmatprep.subr.mxu0 0.0
      %344 = vmatpush1.msra.mxu0 0.0
      %345 = vmatprep.subr.mxu0 0.0
      %346 = vmatpush1.msra.mxu0 0.0
      %347 = vmatprep.mubr.f32.mxu0 %v236
      %348 = vmatmul.mubr.f32.gmra.mrb[0].mxu0 %v177
      %v349 = vpop.f32.mrb[0].mxu0
      %v350 = vadd.f32 %v232, %v349
      %v351 = vpop.f32.mrb[0].mxu0
      %352 = vmatprep.mubr.f32.mxu0 %v239
      %353 = vmatmul.mubr.f32.gmra.mrb[0].mxu0 %v179
      %v354 = vpop.f32.mrb[0].mxu0
      %v355 = vadd.f32 %v232, %v354
      %v356 = vpop.f32.mrb[0].mxu0
      %357 = vmatprep.mubr.f32.mxu0 %v242
      %358 = vmatmul.mubr.f32.gmra.mrb[0].mxu0 %v181
      %v359 = vpop.f32.mrb[0].mxu0
      %v360 = vadd.f32 %v232, %v359
      %v361 = vpop.f32.mrb[0].mxu0
      %362 = vmatprep.mubr.f32.mxu0 %v245
      %363 = vmatmul.mubr.f32.gmra.mrb[0].mxu0 %v183
      %v364 = vpop.f32.mrb[0].mxu0
      %v365 = vadd.f32 %v232, %v364
      %v366 = vpop.f32.mrb[0].mxu0
      %367 = vmatprep.mubr.f32.mxu0 %v248
      %368 = vmatmul.mubr.f32.gmra.mrb[0].mxu0 %v185
      %v369 = vpop.f32.mrb[0].mxu0
      %v370 = vadd.f32 %v232, %v369
      %v371 = vpop.f32.mrb[0].mxu0
      %372 = vmatprep.mubr.f32.mxu0 %v251
      %373 = vmatmul.mubr.f32.gmra.mrb[0].mxu0 %v187
      %v374 = vpop.f32.mrb[0].mxu0
      %v375 = vadd.f32 %v232, %v374
      %v376 = vpop.f32.mrb[0].mxu0
      %377 = vmatprep.mubr.f32.mxu0 %v254
      %378 = vmatmul.mubr.f32.gmra.mrb[0].mxu0 %v189
      %v379 = vpop.f32.mrb[0].mxu0
      %v380 = vadd.f32 %v232, %v379
      %v381 = vpop.f32.mrb[0].mxu0
      %382 = vmatprep.mubr.f32.mxu0 %v257
      %383 = vmatmul.mubr.f32.gmra.mrb[0].mxu0 %v191
      %v384 = vpop.f32.mrb[0].mxu0
      %v385 = vadd.f32 %v232, %v384
      %v386 = vpop.f32.mrb[0].mxu0
      %387 = vmatprep.mubr.f32.mxu0 %v260
      %388 = vmatmul.mubr.f32.gmra.mrb[0].mxu0 %v193
      %v389 = vpop.f32.mrb[0].mxu0
      %v390 = vadd.f32 %v232, %v389
      %v391 = vpop.f32.mrb[0].mxu0
      %392 = vmatprep.mubr.f32.mxu0 %v263
      %393 = vmatmul.mubr.f32.gmra.mrb[0].mxu0 %v195
      %v394 = vpop.f32.mrb[0].mxu0
      %v395 = vadd.f32 %v232, %v394
      %v396 = vpop.f32.mrb[0].mxu0
      %397 = vmatprep.mubr.f32.mxu0 %v266
      %398 = vmatmul.mubr.f32.gmra.mrb[0].mxu0 %v197
      %v399 = vpop.f32.mrb[0].mxu0
      %v400 = vadd.f32 %v232, %v399
      %v401 = vpop.f32.mrb[0].mxu0
      %402 = vmatprep.mubr.f32.mxu0 %v269
      %403 = vmatmul.mubr.f32.gmra.mrb[0].mxu0 %v199
      %v404 = vpop.f32.mrb[0].mxu0
      %v405 = vadd.f32 %v232, %v404
      %v406 = vpop.f32.mrb[0].mxu0
      %407 = vmatprep.mubr.f32.mxu0 %v272
      %408 = vmatmul.mubr.f32.gmra.mrb[0].mxu0 %v201
      %v409 = vpop.f32.mrb[0].mxu0
      %v410 = vadd.f32 %v232, %v409
      %v411 = vpop.f32.mrb[0].mxu0
      %412 = vmatprep.mubr.f32.mxu0 %v275
      %413 = vmatmul.mubr.f32.gmra.mrb[0].mxu0 %v203
      %v414 = vpop.f32.mrb[0].mxu0
      %v415 = vadd.f32 %v232, %v414
      %v416 = vpop.f32.mrb[0].mxu0
      %417 = vmatprep.mubr.f32.mxu0 %v278
      %418 = vmatmul.mubr.f32.gmra.mrb[0].mxu0 %v205
      %v419 = vpop.f32.mrb[0].mxu0
      %v420 = vadd.f32 %v232, %v419
      %v421 = vpop.f32.mrb[0].mxu0
      %422 = vmatprep.mubr.f32.mxu0 %v281
      %423 = vmatmul.mubr.f32.gmra.mrb[0].mxu0 %v207
      %v424 = vpop.f32.mrb[0].mxu0
      %v425 = vadd.f32 %v232, %v424
      %v426 = vpop.f32.mrb[0].mxu0
      %427 = vdwg.mxu0
      %v428 = vmax.f32 %v350, 0.0
      %v429 = vmax.f32 %v355, 0.0
      %v430 = vmax.f32 %v360, 0.0
      %v431 = vmax.f32 %v365, 0.0
      %v432 = vmax.f32 %v370, 0.0
      %v433 = vmax.f32 %v375, 0.0
      %v434 = vmax.f32 %v380, 0.0
      %v435 = vmax.f32 %v385, 0.0
      %v436 = vmax.f32 %v390, 0.0
      %v437 = vmax.f32 %v395, 0.0
      %v438 = vmax.f32 %v400, 0.0
      %v439 = vmax.f32 %v405, 0.0
      %v440 = vmax.f32 %v410, 0.0
      %v441 = vmax.f32 %v415, 0.0
      %v442 = vmax.f32 %v420, 0.0
      %v443 = vmax.f32 %v425, 0.0
      %444 = vst [vmem:[%s175] sm:$0xff] %v428
      %445 = vst [vmem:[%s175 + $0x8] sm:$0xff] %v429
      %446 = vst [vmem:[%s175 + $0x10] sm:$0xff] %v430
      %447 = vst [vmem:[%s175 + $0x18] sm:$0xff] %v431
      %448 = vst [vmem:[%s175 + $0x20] sm:$0xff] %v432
      %449 = vst [vmem:[%s175 + $0x28] sm:$0xff] %v433
      %450 = vst [vmem:[%s175 + $0x30] sm:$0xff] %v434
      %451 = vst [vmem:[%s175 + $0x38] sm:$0xff] %v435
      %452 = vst [vmem:[%s175 + $0x40] sm:$0xff] %v436
      %453 = vst [vmem:[%s175 + $0x48] sm:$0xff] %v437
      %454 = vst [vmem:[%s175 + $0x50] sm:$0xff] %v438
      %455 = vst [vmem:[%s175 + $0x58] sm:$0xff] %v439
      %456 = vst [vmem:[%s175 + $0x60] sm:$0xff] %v440
      %457 = vst [vmem:[%s175 + $0x68] sm:$0xff] %v441
      %458 = vst [vmem:[%s175 + $0x70] sm:$0xff] %v442
      %459 = vst [vmem:[%s175 + $0x78] sm:$0xff] %v443
      %s460 = smul.u32 16, %s14
      %p461 = scmp.lt.s32.totalorder %s460, 207
      %s462 = scalar_select %p461, %s460, 207
      %s463 = smul.addr %s462, 8
      %s464 = scalar_lea.vmem %s3, %s463
      // Predicated region
      $region33: #{forward.9} parent=31 // pred_check
        %p465 = pneg %p100
      $region34: #{forward.9} parent=31 // pred_check_branch
        %467 = sbr.rel (%p465) target = $region36
      $region35: #{forward.9} parent=31 // pred_region
        %s468 = smul.u32 16, %s14
      $region36: #{forward.9} parent=31 // pred_fallthru
        _
    $region32: #{forward.9} parent=5 // pred_fallthru
      _
    %p469 = scmp.le.s32.totalorder 2, %s9
    // Predicated region
    $region37: #{forward.9} parent=5 // pred_check
      %p470 = pneg %p469
    $region38: #{forward.9} parent=5 // pred_check_branch
      %472 = sbr.rel (%p470) target = $region40
    $region39: #{forward.9} parent=5 // pred_region
      %s473 = ssub.s32 %s9, 2
      // Predicated region
      $region41: #{forward.9} parent=39 // pred_check
        %p474 = pneg %p106
      $region42: #{forward.9} parent=39 // pred_check_branch
        %476 = sbr.rel (%p474) target = $region44
      $region43: #{forward.9} parent=39 // pred_region
        %s477 = smul.u32 16, %s15
        %p478 = scmp.lt.s32.totalorder %s477, 207
        %s479 = scalar_select %p478, %s477, 207
        %s480 = smul.addr %s479, 8
        %s481 = scalar_lea.vmem %s3, %s480
      $region44: #{forward.9} parent=39 // pred_fallthru
        _
    $region40: #{forward.9} parent=5 // pred_fallthru
      _
  $region6: #{forward.9} parent=0 // loop_footer
    %s13 = sadd.s32 1, %s9
  $region7: #{forward.9} parent=0 // loop_footer_branch
    %8 = sbr.rel target = $region3
  $region8: #{forward.9} parent=0 // loop_exit
    _

</llo_original>
